<compile_context>
chip_gen: v5e
topology: v5e:2x2
jax: 0.10.0
libtpu: 0.0.40
codegen_flags: <defaults>
</compile_context>

<pallas_src>
import functools

import jax
import jax.numpy as jnp
from jax import lax
from jax.experimental import pallas as pl
from jax.experimental.pallas import tpu as pltpu


def _bilstm_mean_kernel(x_ref, wih_ref, whh_ref, b_ref, ot_ref, gx_scr,
                        *, seq_len, hidden, block_batch):
    """One batch tile: fused fwd+bwd LSTM over the seq axis, mean-reduced.

    x_ref:   (S, TB, D) bf16 mailbox tile (seq-major)
    wih_ref: (D, 8H) bf16 combined input weights, gate cols [i,f,o,g] x [fwd,bwd]
    whh_ref: (2H, 8H) bf16 block-diagonal recurrent weights
    b_ref:   (1, 8H) f32 combined bias
    ot_ref:  (D, TB) f32 output tile, TRANSPOSED (lane-dense store)
    gx_scr:  (S*TB, 8H) f32 VMEM scratch for the hoisted projections
    """
    S, H, TB = seq_len, hidden, block_batch
    W = 2 * H              # combined per-gate width (fwd half | bwd half)

    wih = wih_ref[...]                                    # (D, G) bf16
    whh = whh_ref[...]                                    # (2H, G) bf16
    b = b_ref[...]                                        # (1, G) f32
    G = wih.shape[-1]

    # Lane mask used only in the (non-serial) projection/merge phase: inside
    # each 2H-wide gate block the first H lanes belong to the forward
    # direction, the last H lanes to the backward direction.  Built once.
    col = lax.broadcasted_iota(jnp.int32, (TB, G), 1)
    fwd_lane = (col % W) < H

    # ---- Hoisted input projection + fwd/bwd time merge (off the serial
    # recurrence chain).  Row block t of gx_scr ends up holding
    # [fwd gates @ t | bwd gates @ S-1-t] so the recurrence below does a
    # single load per step and no select.
    for t in range((S + 1) // 2):
        r = S - 1 - t
        g_t = jnp.dot(x_ref[t], wih, preferred_element_type=jnp.float32) + b
        if r == t:                                        # middle step, S odd
            gx_scr[pl.ds(t * TB, TB), :] = g_t
        else:
            g_r = jnp.dot(x_ref[r], wih, preferred_element_type=jnp.float32) + b
            gx_scr[pl.ds(t * TB, TB), :] = jnp.where(fwd_lane, g_t, g_r)
            gx_scr[pl.ds(r * TB, TB), :] = jnp.where(fwd_lane, g_r, g_t)

    h = jnp.zeros((TB, W), jnp.float32)       # [h_fwd | h_bwd]
    c = jnp.zeros((TB, W), jnp.float32)       # [c_fwd | c_bwd]
    acc = jnp.zeros((TB, W), jnp.float32)

    # Fused fwd+bwd recurrence, fully unrolled (S is small and static).
    # If S grows beyond ~8, switch to lax.fori_loop(..., unroll=k) with
    # pl.multiple_of(t*TB, TB) dynamic slices to bound register pressure.
    for t in range(S):
        gates = gx_scr[pl.ds(t * TB, TB), :]
        gates = gates + jnp.dot(h.astype(whh.dtype), whh,
                                preferred_element_type=jnp.float32)
        # Gate column order [i, f, o, g]: one wide sigmoid + one tanh.
        sig = jax.nn.sigmoid(gates[:, :3 * W])
        g_g = jnp.tanh(gates[:, 3 * W:])
        i_g = sig[:, 0 * W:1 * W]
        f_g = sig[:, 1 * W:2 * W]
        o_g = sig[:, 2 * W:3 * W]
        c = f_g * c + i_g * g_g
        h = o_g * jnp.tanh(c)
        acc = acc + h

    # acc is already [sum_t h_fwd | sum_t h_bwd] = (TB, D).  Store transposed
    # so the last (lane) dim is TB >= 128 -> unmasked full-lane vst.
    ot_ref[...] = jnp.transpose(acc * (1.0 / S)).astype(ot_ref.dtype)


def _pack_bilstm_params(params, dim):
    """Pack per-direction transposed LSTM weights into the fused layout.

    Combined gate-column order (each block H wide):
      [i_f, i_b, f_f, f_b, o_f, o_b, g_f, g_b]
    (sigmoid gates first, tanh gate last, fwd/bwd interleaved).  W_hh is
    block-diagonal over [h_fwd | h_bwd] so one dot serves both directions.
    Matmul operands are cast to bf16 (f32 accumulation in-kernel).
    """
    H = dim // 2
    # PyTorch gate order within each 4H block is (i, f, g, o) -> reorder to
    # (i, f, o, g) so the sigmoid gates are contiguous.
    perm = jnp.array([0, 1, 3, 2], dtype=jnp.int32)

    def interleave_cols(wf, wb):
        rows = wf.shape[0]
        wf4 = wf.reshape(rows, 4, H)[:, perm, :]
        wb4 = wb.reshape(rows, 4, H)[:, perm, :]
        return jnp.stack([wf4, wb4], axis=2).reshape(rows, 8 * H)

    wih_c = interleave_cols(params["wih_f"], params["wih_b"]).astype(jnp.bfloat16)

    zeros = jnp.zeros((H, 4, H), jnp.float32)
    whh_f4 = params["whh_f"].reshape(H, 4, H)[:, perm, :]
    whh_b4 = params["whh_b"].reshape(H, 4, H)[:, perm, :]
    top = jnp.stack([whh_f4, zeros], axis=2).reshape(H, 8 * H)   # fwd rows -> fwd cols
    bot = jnp.stack([zeros, whh_b4], axis=2).reshape(H, 8 * H)   # bwd rows -> bwd cols
    whh_c = jnp.concatenate([top, bot], axis=0).astype(jnp.bfloat16)   # (2H, 8H)

    b_c = interleave_cols(params["b_f"], params["b_b"])                # (1, 8H) f32
    return wih_c, whh_c, b_c


def lstm_aggr_forward(mailbox, params, *, block_batch=256):
    """mailbox: (N, S, D) float32 -> (N, D) float32."""
    N, S, D = mailbox.shape
    assert D % 2 == 0, "feature dim must be even (hidden = D // 2)"
    H = D // 2
    G = 8 * H

    # Tile-size policy:
    #  * default 256 rows fills the v6e/v7x 256-row MXU,
    #  * never tile wider than the (8-rounded) batch,
    #  * keep >= 2 grid blocks when there is enough work so a v7x chip's two
    #    TensorCores both get a share of the 'parallel' grid axis.
    TB = int(block_batch)
    TB = min(TB, max(8, -(-N // 8) * 8))
    if TB > 128 and pl.cdiv(N, TB) < 2:
        TB = 128
    assert TB % 8 == 0, "block_batch must be a multiple of 8"

    wih_c, whh_c, b_c = _pack_bilstm_params(params, D)

    # Pad the batch to a multiple of the tile and go seq-major so per-timestep
    # (TB, D) slabs are contiguous.  bf16 halves the streamed mailbox DMA;
    # compute accumulates in f32.
    n_blocks = pl.cdiv(N, TB)
    N_pad = n_blocks * TB
    m_t = jnp.transpose(mailbox, (1, 0, 2))                  # (S, N, D)
    if N_pad != N:
        m_t = jnp.pad(m_t, ((0, 0), (0, N_pad - N), (0, 0)))
    m_t = m_t.astype(jnp.bfloat16)

    kernel = functools.partial(_bilstm_mean_kernel,
                               seq_len=S, hidden=H, block_batch=TB)
    full = lambda i: (0, 0)

    # VMEM scaling guard (matters first on v7x, 64 MiB physical / ~32 MiB
    # scoped default): the gate scratch is S*TB*8H*4 bytes; raise the scoped
    # limit once it gets large.  At the demo config it is ~1 MiB.
    scratch_bytes = S * TB * G * 4
    cp_kwargs = dict(dimension_semantics=("parallel",))
    if scratch_bytes > 16 * 1024 * 1024:
        cp_kwargs["vmem_limit_bytes"] = min(4 * scratch_bytes, 60 * 1024 * 1024)

    out_t = pl.pallas_call(
        kernel,
        out_shape=jax.ShapeDtypeStruct((D, N_pad), jnp.float32),
        grid_spec=pltpu.PrefetchScalarGridSpec(
            num_scalar_prefetch=0,
            grid=(n_blocks,),
            in_specs=[
                pl.BlockSpec((S, TB, D), lambda i: (0, i, 0)),   # mailbox tile (seq-major)
                pl.BlockSpec((D, G), full),                      # combined W_ih (D, 8H)
                pl.BlockSpec((2 * H, G), full),                  # block-diag W_hh (2H, 8H)
                pl.BlockSpec((1, G), full),                      # combined bias (1, 8H)
            ],
            out_specs=pl.BlockSpec((D, TB), lambda i: (0, i)),   # lane-dense (transposed)
            scratch_shapes=[pltpu.VMEM((S * TB, G), jnp.float32)],
        ),
        compiler_params=pltpu.CompilerParams(**cp_kwargs),
    )(m_t, wih_c, whh_c, b_c)

    # Un-transpose in the wrapper (layout plumbing only) and drop padding.
    return jnp.transpose(out_t)[:N]


def init_lstm_params(key, dim):
    """Deterministic init matching nn.LSTM(dim, dim//2, 1, bidirectional=True).

    PyTorch shapes: weight_ih (4H, D), weight_hh (4H, H), bias_ih/bias_hh (4H,).
    Stored transposed ([D,4H] / [H,4H]) with the two biases pre-summed.
    Gate order is PyTorch's (i, f, g, o).
    """
    H = dim // 2
    bound = 1.0 / jnp.sqrt(jnp.float32(H))
    keys = jax.random.split(key, 8)

    def u(k, shape):
        return jax.random.uniform(k, shape, jnp.float32, -bound, bound)

    params = {}
    for d, off in (("f", 0), ("b", 4)):
        w_ih = u(keys[off + 0], (4 * H, dim))
        w_hh = u(keys[off + 1], (4 * H, H))
        b_ih = u(keys[off + 2], (4 * H,))
        b_hh = u(keys[off + 3], (4 * H,))
        params[f"wih_{d}"] = jnp.transpose(w_ih)                 # (D, 4H)
        params[f"whh_{d}"] = jnp.transpose(w_hh)                 # (H, 4H)
        params[f"b_{d}"] = (b_ih + b_hh).reshape(1, 4 * H)       # (1, 4H)
    return params


def _reference(mailbox, params):
    """Pure-JAX reference of the same math (mirrors the kernel's bf16 casts)."""
    N, S, D = mailbox.shape
    H = D // 2
    xb = mailbox.astype(jnp.bfloat16)

    def run_dir(wih, whh, b, reverse):
        wih = wih.astype(jnp.bfloat16)
        whh = whh.astype(jnp.bfloat16)
        h = jnp.zeros((N, H), jnp.float32)
        c = jnp.zeros((N, H), jnp.float32)
        hs = []
        order = range(S - 1, -1, -1) if reverse else range(S)
        for t in order:
            g = (jnp.dot(xb[:, t, :], wih, preferred_element_type=jnp.float32)
                 + jnp.dot(h.astype(jnp.bfloat16), whh,
                           preferred_element_type=jnp.float32)
                 + b)
            i_g = jax.nn.sigmoid(g[:, :H])
            f_g = jax.nn.sigmoid(g[:, H:2 * H])
            g_g = jnp.tanh(g[:, 2 * H:3 * H])
            o_g = jax.nn.sigmoid(g[:, 3 * H:])
            c = f_g * c + i_g * g_g
            h = o_g * jnp.tanh(c)
            hs.append(h)
        return jnp.mean(jnp.stack(hs, axis=1), axis=1)

    mf = run_dir(params["wih_f"], params["whh_f"], params["b_f"], False)
    mb = run_dir(params["wih_b"], params["whh_b"], params["b_b"], True)
    return jnp.concatenate([mf, mb], axis=-1)


if __name__ == "__main__":
    # N_dst=200 destination nodes (not a multiple of the tile, exercising both
    # the batch padding and the >=2-blocks clamp so a v7x chip's two
    # TensorCores each get a 128-row tile), S=4 sampled neighbors per node,
    # feature dim D=64 (hidden H=32 per direction).
    N, S, D = 200, 4, 64
    key = jax.random.PRNGKey(0)
    k_m, k_p = jax.random.split(key)

    mailbox = jax.random.normal(k_m, (N, S, D), jnp.float32)
    params = init_lstm_params(k_p, D)

    out = jax.block_until_ready(lstm_aggr_forward(mailbox, params))
    ref = jax.block_until_ready(_reference(mailbox, params))

    assert out.shape == (N, D)
    max_diff = float(jnp.max(jnp.abs(out - ref)))
    assert jnp.allclose(out, ref, atol=5e-3, rtol=5e-3), (
        f"mismatch vs reference, max abs diff = {max_diff}")

    print("KERNEL_OK")
</pallas_src>

<mosaic_0001>
module attributes {stable_mosaic.version = 11 : i64} {
  func.func @_bilstm_mean_kernel(%arg0: i32, %arg1: memref<4x128x64xbf16, #tpu.memory_space<vmem>>, %arg2: memref<64x256xbf16, #tpu.memory_space<vmem>>, %arg3: memref<64x256xbf16, #tpu.memory_space<vmem>>, %arg4: memref<1x256xf32, #tpu.memory_space<vmem>>, %arg5: memref<64x128xf32, #tpu.memory_space<vmem>>, %arg6: memref<512x256xf32, #tpu.memory_space<vmem>>) attributes {dimension_semantics = [#tpu.dimension_semantics<parallel>], iteration_bounds = array<i64: 2>, scalar_prefetch = 0 : i64, scratch_operands = 1 : i64, tpu.core_type = #tpu.core_type<tc>, window_params = [{transform_indices = @transform_0, window_bounds = array<i64: 4, 128, 64>}, {pipeline_mode = #tpu.pipeline_mode<synchronous>, transform_indices = @transform_1, window_bounds = array<i64: 64, 256>}, {pipeline_mode = #tpu.pipeline_mode<synchronous>, transform_indices = @transform_2, window_bounds = array<i64: 64, 256>}, {pipeline_mode = #tpu.pipeline_mode<synchronous>, transform_indices = @transform_3, window_bounds = array<i64: 1, 256>}, {transform_indices = @transform_4, window_bounds = array<i64: 64, 128>}]} {
    %c0 = arith.constant 0 : index
    %c0_0 = arith.constant 0 : index
    %0 = vector.load %arg2[%c0, %c0_0] : memref<64x256xbf16, #tpu.memory_space<vmem>>, vector<64x256xbf16>
    %c0_1 = arith.constant 0 : index
    %c0_2 = arith.constant 0 : index
    %1 = vector.load %arg3[%c0_1, %c0_2] : memref<64x256xbf16, #tpu.memory_space<vmem>>, vector<64x256xbf16>
    %c0_3 = arith.constant 0 : index
    %c0_4 = arith.constant 0 : index
    %2 = vector.load %arg4[%c0_3, %c0_4] : memref<1x256xf32, #tpu.memory_space<vmem>>, vector<1x256xf32>
    %3 = tpu.iota {dimensions = array<i32: 1>} : vector<128x256xi32>
    %c64_i32 = arith.constant 64 : i32
    %c0_i32 = arith.constant 0 : i32
    %4 = arith.cmpi eq, %c64_i32, %c0_i32 : i32
    %c1_i32 = arith.constant 1 : i32
    %5 = arith.select %4, %c1_i32, %c64_i32 : i32
    %6 = vector.broadcast %5 : i32 to vector<128x256xi32>
    %7 = arith.remsi %3, %6 : vector<128x256xi32>
    %c0_i32_5 = arith.constant 0 : i32
    %8 = vector.broadcast %c0_i32_5 : i32 to vector<128x256xi32>
    %9 = arith.cmpi ne, %7, %8 : vector<128x256xi32>
    %c0_i32_6 = arith.constant 0 : i32
    %10 = vector.broadcast %c0_i32_6 : i32 to vector<128x256xi32>
    %11 = arith.cmpi slt, %7, %10 : vector<128x256xi32>
    %c0_i32_7 = arith.constant 0 : i32
    %12 = arith.cmpi slt, %5, %c0_i32_7 : i32
    %13 = vector.broadcast %12 : i1 to vector<128x256xi1>
    %14 = vector.broadcast %13 : vector<128x256xi1> to vector<128x256xi1>
    %15 = arith.xori %11, %14 : vector<128x256xi1>
    %16 = arith.andi %15, %9 : vector<128x256xi1>
    %17 = vector.broadcast %5 : i32 to vector<128x256xi32>
    %18 = arith.addi %7, %17 : vector<128x256xi32>
    %19 = arith.select %16, %18, %7 : vector<128x256xi1>, vector<128x256xi32>
    %c32_i32 = arith.constant 32 : i32
    %20 = vector.broadcast %c32_i32 : i32 to vector<128x256xi32>
    %21 = arith.cmpi slt, %19, %20 : vector<128x256xi32>
    %c0_8 = arith.constant 0 : index
    %c0_9 = arith.constant 0 : index
    %c0_10 = arith.constant 0 : index
    %22 = vector.load %arg1[%c0_8, %c0_9, %c0_10] : memref<4x128x64xbf16, #tpu.memory_space<vmem>>, vector<1x128x64xbf16>
    %23 = vector.shape_cast %22 : vector<1x128x64xbf16> to vector<128x64xbf16>
    %cst = arith.constant dense<0.000000e+00> : vector<128x256xf32>
    %24 = tpu.matmul %23, %0, %cst {dimension_numbers = #tpu.dot_dimension_numbers<[1], [0], [0], [1], [0, 0, 1, 1], [], []>} : vector<128x64xbf16>, vector<64x256xbf16>, vector<128x256xf32> -> vector<128x256xf32>
    %25 = vector.broadcast %2 : vector<1x256xf32> to vector<128x256xf32>
    %26 = arith.addf %24, %25 : vector<128x256xf32>
    %c3 = arith.constant 3 : index
    %c0_11 = arith.constant 0 : index
    %c0_12 = arith.constant 0 : index
    %27 = vector.load %arg1[%c3, %c0_11, %c0_12] : memref<4x128x64xbf16, #tpu.memory_space<vmem>>, vector<1x128x64xbf16>
    %28 = vector.shape_cast %27 : vector<1x128x64xbf16> to vector<128x64xbf16>
    %cst_13 = arith.constant dense<0.000000e+00> : vector<128x256xf32>
    %29 = tpu.matmul %28, %0, %cst_13 {dimension_numbers = #tpu.dot_dimension_numbers<[1], [0], [0], [1], [0, 0, 1, 1], [], []>} : vector<128x64xbf16>, vector<64x256xbf16>, vector<128x256xf32> -> vector<128x256xf32>
    %30 = vector.broadcast %2 : vector<1x256xf32> to vector<128x256xf32>
    %31 = arith.addf %29, %30 : vector<128x256xf32>
    %32 = arith.select %21, %26, %31 : vector<128x256xi1>, vector<128x256xf32>
    %c0_14 = arith.constant 0 : index
    %c0_15 = arith.constant 0 : index
    %33 = vector.load %arg6[%c0_14, %c0_15] : memref<512x256xf32, #tpu.memory_space<vmem>>, vector<128x256xf32>
    tpu.vector_store %arg6[%c0_14, %c0_15], %32 {strides = array<i32>} : memref<512x256xf32, #tpu.memory_space<vmem>>, vector<128x256xf32>,
    %34 = arith.select %21, %31, %26 : vector<128x256xi1>, vector<128x256xf32>
    %c384 = arith.constant 384 : index
    %c0_16 = arith.constant 0 : index
    %35 = vector.load %arg6[%c384, %c0_16] : memref<512x256xf32, #tpu.memory_space<vmem>>, vector<128x256xf32>
    tpu.vector_store %arg6[%c384, %c0_16], %34 {strides = array<i32>} : memref<512x256xf32, #tpu.memory_space<vmem>>, vector<128x256xf32>,
    %c1 = arith.constant 1 : index
    %c0_17 = arith.constant 0 : index
    %c0_18 = arith.constant 0 : index
    %36 = vector.load %arg1[%c1, %c0_17, %c0_18] : memref<4x128x64xbf16, #tpu.memory_space<vmem>>, vector<1x128x64xbf16>
    %37 = vector.shape_cast %36 : vector<1x128x64xbf16> to vector<128x64xbf16>
    %cst_19 = arith.constant dense<0.000000e+00> : vector<128x256xf32>
    %38 = tpu.matmul %37, %0, %cst_19 {dimension_numbers = #tpu.dot_dimension_numbers<[1], [0], [0], [1], [0, 0, 1, 1], [], []>} : vector<128x64xbf16>, vector<64x256xbf16>, vector<128x256xf32> -> vector<128x256xf32>
    %39 = vector.broadcast %2 : vector<1x256xf32> to vector<128x256xf32>
    %40 = arith.addf %38, %39 : vector<128x256xf32>
    %c2 = arith.constant 2 : index
    %c0_20 = arith.constant 0 : index
    %c0_21 = arith.constant 0 : index
    %41 = vector.load %arg1[%c2, %c0_20, %c0_21] : memref<4x128x64xbf16, #tpu.memory_space<vmem>>, vector<1x128x64xbf16>
    %42 = vector.shape_cast %41 : vector<1x128x64xbf16> to vector<128x64xbf16>
    %cst_22 = arith.constant dense<0.000000e+00> : vector<128x256xf32>
    %43 = tpu.matmul %42, %0, %cst_22 {dimension_numbers = #tpu.dot_dimension_numbers<[1], [0], [0], [1], [0, 0, 1, 1], [], []>} : vector<128x64xbf16>, vector<64x256xbf16>, vector<128x256xf32> -> vector<128x256xf32>
    %44 = vector.broadcast %2 : vector<1x256xf32> to vector<128x256xf32>
    %45 = arith.addf %43, %44 : vector<128x256xf32>
    %46 = arith.select %21, %40, %45 : vector<128x256xi1>, vector<128x256xf32>
    %c128 = arith.constant 128 : index
    %c0_23 = arith.constant 0 : index
    %47 = vector.load %arg6[%c128, %c0_23] : memref<512x256xf32, #tpu.memory_space<vmem>>, vector<128x256xf32>
    tpu.vector_store %arg6[%c128, %c0_23], %46 {strides = array<i32>} : memref<512x256xf32, #tpu.memory_space<vmem>>, vector<128x256xf32>,
    %48 = arith.select %21, %45, %40 : vector<128x256xi1>, vector<128x256xf32>
    %c256 = arith.constant 256 : index
    %c0_24 = arith.constant 0 : index
    %49 = vector.load %arg6[%c256, %c0_24] : memref<512x256xf32, #tpu.memory_space<vmem>>, vector<128x256xf32>
    tpu.vector_store %arg6[%c256, %c0_24], %48 {strides = array<i32>} : memref<512x256xf32, #tpu.memory_space<vmem>>, vector<128x256xf32>,
    %cst_25 = arith.constant 0.000000e+00 : f32
    %50 = vector.broadcast %cst_25 : f32 to vector<128x64xf32>
    %cst_26 = arith.constant 0.000000e+00 : f32
    %51 = vector.broadcast %cst_26 : f32 to vector<128x64xf32>
    %cst_27 = arith.constant 0.000000e+00 : f32
    %52 = vector.broadcast %cst_27 : f32 to vector<128x64xf32>
    %c0_28 = arith.constant 0 : index
    %c0_29 = arith.constant 0 : index
    %53 = vector.load %arg6[%c0_28, %c0_29] : memref<512x256xf32, #tpu.memory_space<vmem>>, vector<128x256xf32>
    %54 = arith.truncf %50 : vector<128x64xf32> to vector<128x64xbf16>
    %cst_30 = arith.constant dense<0.000000e+00> : vector<128x256xf32>
    %55 = tpu.matmul %54, %1, %cst_30 {dimension_numbers = #tpu.dot_dimension_numbers<[1], [0], [0], [1], [0, 0, 1, 1], [], []>} : vector<128x64xbf16>, vector<64x256xbf16>, vector<128x256xf32> -> vector<128x256xf32>
    %56 = arith.addf %53, %55 : vector<128x256xf32>
    %57 = vector.extract_strided_slice %56 {offsets = [0, 0], sizes = [128, 192], strides = [1, 1]} : vector<128x256xf32> to vector<128x192xf32>
    %58 = arith.negf %57 : vector<128x192xf32>
    %59 = math.exp %58 : vector<128x192xf32>
    %cst_31 = arith.constant 1.000000e+00 : f32
    %60 = vector.broadcast %cst_31 : f32 to vector<128x192xf32>
    %61 = arith.addf %60, %59 : vector<128x192xf32>
    %62 = arith.divf %60, %61 : vector<128x192xf32>
    %63 = vector.extract_strided_slice %56 {offsets = [0, 192], sizes = [128, 64], strides = [1, 1]} : vector<128x256xf32> to vector<128x64xf32>
    %64 = math.tanh %63 : vector<128x64xf32>
    %65 = vector.extract_strided_slice %62 {offsets = [0, 0], sizes = [128, 64], strides = [1, 1]} : vector<128x192xf32> to vector<128x64xf32>
    %66 = vector.extract_strided_slice %62 {offsets = [0, 64], sizes = [128, 64], strides = [1, 1]} : vector<128x192xf32> to vector<128x64xf32>
    %67 = vector.extract_strided_slice %62 {offsets = [0, 128], sizes = [128, 64], strides = [1, 1]} : vector<128x192xf32> to vector<128x64xf32>
    %68 = arith.mulf %66, %51 : vector<128x64xf32>
    %69 = arith.mulf %65, %64 : vector<128x64xf32>
    %70 = arith.addf %68, %69 : vector<128x64xf32>
    %71 = math.tanh %70 : vector<128x64xf32>
    %72 = arith.mulf %67, %71 : vector<128x64xf32>
    %73 = arith.addf %52, %72 : vector<128x64xf32>
    %c128_32 = arith.constant 128 : index
    %c0_33 = arith.constant 0 : index
    %74 = vector.load %arg6[%c128_32, %c0_33] : memref<512x256xf32, #tpu.memory_space<vmem>>, vector<128x256xf32>
    %75 = arith.truncf %72 : vector<128x64xf32> to vector<128x64xbf16>
    %cst_34 = arith.constant dense<0.000000e+00> : vector<128x256xf32>
    %76 = tpu.matmul %75, %1, %cst_34 {dimension_numbers = #tpu.dot_dimension_numbers<[1], [0], [0], [1], [0, 0, 1, 1], [], []>} : vector<128x64xbf16>, vector<64x256xbf16>, vector<128x256xf32> -> vector<128x256xf32>
    %77 = arith.addf %74, %76 : vector<128x256xf32>
    %78 = vector.extract_strided_slice %77 {offsets = [0, 0], sizes = [128, 192], strides = [1, 1]} : vector<128x256xf32> to vector<128x192xf32>
    %79 = arith.negf %78 : vector<128x192xf32>
    %80 = math.exp %79 : vector<128x192xf32>
    %cst_35 = arith.constant 1.000000e+00 : f32
    %81 = vector.broadcast %cst_35 : f32 to vector<128x192xf32>
    %82 = arith.addf %81, %80 : vector<128x192xf32>
    %83 = arith.divf %81, %82 : vector<128x192xf32>
    %84 = vector.extract_strided_slice %77 {offsets = [0, 192], sizes = [128, 64], strides = [1, 1]} : vector<128x256xf32> to vector<128x64xf32>
    %85 = math.tanh %84 : vector<128x64xf32>
    %86 = vector.extract_strided_slice %83 {offsets = [0, 0], sizes = [128, 64], strides = [1, 1]} : vector<128x192xf32> to vector<128x64xf32>
    %87 = vector.extract_strided_slice %83 {offsets = [0, 64], sizes = [128, 64], strides = [1, 1]} : vector<128x192xf32> to vector<128x64xf32>
    %88 = vector.extract_strided_slice %83 {offsets = [0, 128], sizes = [128, 64], strides = [1, 1]} : vector<128x192xf32> to vector<128x64xf32>
    %89 = arith.mulf %87, %70 : vector<128x64xf32>
    %90 = arith.mulf %86, %85 : vector<128x64xf32>
    %91 = arith.addf %89, %90 : vector<128x64xf32>
    %92 = math.tanh %91 : vector<128x64xf32>
    %93 = arith.mulf %88, %92 : vector<128x64xf32>
    %94 = arith.addf %73, %93 : vector<128x64xf32>
    %c256_36 = arith.constant 256 : index
    %c0_37 = arith.constant 0 : index
    %95 = vector.load %arg6[%c256_36, %c0_37] : memref<512x256xf32, #tpu.memory_space<vmem>>, vector<128x256xf32>
    %96 = arith.truncf %93 : vector<128x64xf32> to vector<128x64xbf16>
    %cst_38 = arith.constant dense<0.000000e+00> : vector<128x256xf32>
    %97 = tpu.matmul %96, %1, %cst_38 {dimension_numbers = #tpu.dot_dimension_numbers<[1], [0], [0], [1], [0, 0, 1, 1], [], []>} : vector<128x64xbf16>, vector<64x256xbf16>, vector<128x256xf32> -> vector<128x256xf32>
    %98 = arith.addf %95, %97 : vector<128x256xf32>
    %99 = vector.extract_strided_slice %98 {offsets = [0, 0], sizes = [128, 192], strides = [1, 1]} : vector<128x256xf32> to vector<128x192xf32>
    %100 = arith.negf %99 : vector<128x192xf32>
    %101 = math.exp %100 : vector<128x192xf32>
    %cst_39 = arith.constant 1.000000e+00 : f32
    %102 = vector.broadcast %cst_39 : f32 to vector<128x192xf32>
    %103 = arith.addf %102, %101 : vector<128x192xf32>
    %104 = arith.divf %102, %103 : vector<128x192xf32>
    %105 = vector.extract_strided_slice %98 {offsets = [0, 192], sizes = [128, 64], strides = [1, 1]} : vector<128x256xf32> to vector<128x64xf32>
    %106 = math.tanh %105 : vector<128x64xf32>
    %107 = vector.extract_strided_slice %104 {offsets = [0, 0], sizes = [128, 64], strides = [1, 1]} : vector<128x192xf32> to vector<128x64xf32>
    %108 = vector.extract_strided_slice %104 {offsets = [0, 64], sizes = [128, 64], strides = [1, 1]} : vector<128x192xf32> to vector<128x64xf32>
    %109 = vector.extract_strided_slice %104 {offsets = [0, 128], sizes = [128, 64], strides = [1, 1]} : vector<128x192xf32> to vector<128x64xf32>
    %110 = arith.mulf %108, %91 : vector<128x64xf32>
    %111 = arith.mulf %107, %106 : vector<128x64xf32>
    %112 = arith.addf %110, %111 : vector<128x64xf32>
    %113 = math.tanh %112 : vector<128x64xf32>
    %114 = arith.mulf %109, %113 : vector<128x64xf32>
    %115 = arith.addf %94, %114 : vector<128x64xf32>
    %c384_40 = arith.constant 384 : index
    %c0_41 = arith.constant 0 : index
    %116 = vector.load %arg6[%c384_40, %c0_41] : memref<512x256xf32, #tpu.memory_space<vmem>>, vector<128x256xf32>
    %117 = arith.truncf %114 : vector<128x64xf32> to vector<128x64xbf16>
    %cst_42 = arith.constant dense<0.000000e+00> : vector<128x256xf32>
    %118 = tpu.matmul %117, %1, %cst_42 {dimension_numbers = #tpu.dot_dimension_numbers<[1], [0], [0], [1], [0, 0, 1, 1], [], []>} : vector<128x64xbf16>, vector<64x256xbf16>, vector<128x256xf32> -> vector<128x256xf32>
    %119 = arith.addf %116, %118 : vector<128x256xf32>
    %120 = vector.extract_strided_slice %119 {offsets = [0, 0], sizes = [128, 192], strides = [1, 1]} : vector<128x256xf32> to vector<128x192xf32>
    %121 = arith.negf %120 : vector<128x192xf32>
    %122 = math.exp %121 : vector<128x192xf32>
    %cst_43 = arith.constant 1.000000e+00 : f32
    %123 = vector.broadcast %cst_43 : f32 to vector<128x192xf32>
    %124 = arith.addf %123, %122 : vector<128x192xf32>
    %125 = arith.divf %123, %124 : vector<128x192xf32>
    %126 = vector.extract_strided_slice %119 {offsets = [0, 192], sizes = [128, 64], strides = [1, 1]} : vector<128x256xf32> to vector<128x64xf32>
    %127 = math.tanh %126 : vector<128x64xf32>
    %128 = vector.extract_strided_slice %125 {offsets = [0, 0], sizes = [128, 64], strides = [1, 1]} : vector<128x192xf32> to vector<128x64xf32>
    %129 = vector.extract_strided_slice %125 {offsets = [0, 64], sizes = [128, 64], strides = [1, 1]} : vector<128x192xf32> to vector<128x64xf32>
    %130 = vector.extract_strided_slice %125 {offsets = [0, 128], sizes = [128, 64], strides = [1, 1]} : vector<128x192xf32> to vector<128x64xf32>
    %131 = arith.mulf %129, %112 : vector<128x64xf32>
    %132 = arith.mulf %128, %127 : vector<128x64xf32>
    %133 = arith.addf %131, %132 : vector<128x64xf32>
    %134 = math.tanh %133 : vector<128x64xf32>
    %135 = arith.mulf %130, %134 : vector<128x64xf32>
    %136 = arith.addf %115, %135 : vector<128x64xf32>
    %cst_44 = arith.constant 2.500000e-01 : f32
    %137 = vector.broadcast %cst_44 : f32 to vector<128x64xf32>
    %138 = arith.mulf %136, %137 : vector<128x64xf32>
    %139 = tpu.transpose %138, [1, 0] : vector<128x64xf32> -> vector<64x128xf32>
    %c0_45 = arith.constant 0 : index
    %c0_46 = arith.constant 0 : index
    %140 = vector.load %arg5[%c0_45, %c0_46] : memref<64x128xf32, #tpu.memory_space<vmem>>, vector<64x128xf32>
    tpu.vector_store %arg5[%c0_45, %c0_46], %139 {strides = array<i32>} : memref<64x128xf32, #tpu.memory_space<vmem>>, vector<64x128xf32>,
    return
  }
  func.func @transform_0(%arg0: i32) -> (i32, i32, i32) {
    %c0_i32 = arith.constant 0 : i32
    %c0_i32_0 = arith.constant 0 : i32
    %c0_i32_1 = arith.constant 0 : i32
    return %c0_i32, %arg0, %c0_i32_0 : i32, i32, i32
  }
  func.func @transform_1(%arg0: i32) -> (i32, i32) {
    %c0_i32 = arith.constant 0 : i32
    %c0_i32_0 = arith.constant 0 : i32
    %c0_i32_1 = arith.constant 0 : i32
    return %c0_i32, %c0_i32_0 : i32, i32
  }
  func.func @transform_2(%arg0: i32) -> (i32, i32) {
    %c0_i32 = arith.constant 0 : i32
    %c0_i32_0 = arith.constant 0 : i32
    %c0_i32_1 = arith.constant 0 : i32
    return %c0_i32, %c0_i32_0 : i32, i32
  }
  func.func @transform_3(%arg0: i32) -> (i32, i32) {
    %c0_i32 = arith.constant 0 : i32
    %c0_i32_0 = arith.constant 0 : i32
    %c0_i32_1 = arith.constant 0 : i32
    return %c0_i32, %c0_i32_0 : i32, i32
  }
  func.func @transform_4(%arg0: i32) -> (i32, i32) {
    %c0_i32 = arith.constant 0 : i32
    %c0_i32_0 = arith.constant 0 : i32
    return %c0_i32, %arg0 : i32, i32
  }
}

</mosaic_0001>

<llo_original>
// kernel: tpu_custom_call.1
$region0: #{tpu_custom_call.1}
  #allocation0 [shape = 'u32[]', space=smem, size = 0x4, offset = 0x4, fixed_abs, tag = 'smem constant byte address 0x4 - core index']
  #allocation1 [shape = 'u32[72,128]{1,0:T(1,128)}', space=vmem, size = 0x9000, scoped, tag = 'internal scratch']
  #allocation2 [shape = 'f32[512,256]{1,0:T(8,128)}', space=vmem, size = 0x80000, scoped, tag = 'scratch operand']
  %s0 = inlined_call_operand.vmem [shape: bf16[4,256,64], index: 0, kind: input, shape index: {}]
  %s1 = inlined_call_operand.vmem [shape: bf16[64,256], index: 1, kind: input, shape index: {}]
  %s2 = inlined_call_operand.vmem [shape: bf16[64,256], index: 2, kind: input, shape index: {}]
  %s3 = inlined_call_operand.vmem [shape: f32[1,256], index: 3, kind: input, shape index: {}]
  %s4 = inlined_call_operand.hbm [shape: f32[64,256], index: 4, kind: output, shape index: {}]
  %s5 = sld [smem:[#allocation0]]
  $region90: #{tpu_custom_call.1} parent=0
    _
  %s7 = ssub.s32 1, %s5
  %s8 = scalar_select 0, %s7, %s5
  $region1: #{tpu_custom_call.1} parent=0
    #allocation3 [shape = 'u8[262144]{0}', space=vmem, size = 0x40000, scoped, tag = 'input window, operand 0']
    #allocation4 [shape = 'u8[65536]{0}', space=vmem, size = 0x10000, scoped, tag = 'output window, operand 0']
    #allocation5 [shape = 's32[2]{0}', space=sflag, size = 0x8, scoped, tag = 'scoped memory for tpu_custom_call.1']
    %9 = vsyncpa [#allocation5], 0
    %s10 = scalar_lea.sflag [#allocation5], 1
    %11 = vsyncpa %s10, 0
    loop: start=0, step=1, limit=4
    $region2: #{tpu_custom_call.1} parent=1 // loop_pre_header
      _
    $region3: #{tpu_custom_call.1} parent=1 // loop_header
      %s13 = sphi 0, %s17
      %p14 = scmp.ge.s32.totalorder %s13, 4
      %s23 = sphi 0, %s25
      %s26 = sphi 0, %s23
      %s27 = sphi 0, %s26
      %s43 = sphi 0, %s27
      %s47 = sphi 0, %s47
      %s49 = sphi 0, %s47
      %s50 = sphi 0, %s49
      %s64 = sphi 0, %s50
      %s68 = sphi 0, %s68
      %s70 = sphi 0, %s68
      %s71 = sphi 0, %s70
      %s85 = sphi 0, %s71
      %s89 = sphi 0, %s89
      %s91 = sphi 0, %s89
      %s92 = sphi 0, %s91
      %s106 = sphi 0, %s92
      %s112 = sphi 0, %s114
      %s115 = sphi 0, %s112
      %s116 = sphi 0, %s115
      %s132 = sphi 0, %s116
    $region4: #{tpu_custom_call.1} parent=1 // loop_header_branch
      %16 = sbr.rel (%p14) target = $region8
    $region5: #{tpu_custom_call.1} parent=1 // loop_body
      %s18 = ssub.s32 %s13, 1
      %s19 = ssub.s32 %s13, 2
      %s20 = sadd.s32 %s13, 1
      %s21 = ssub.s32 %s13, %s20
      %p22 = scmp.eq.s32.totalorder %s21, 0
      %s24 = sadd.s32 %s23, 1
      %s25 = scalar_select %p22, %s23, %s24
      %p28 = pneg %p22
      %p29 = scmp.eq.s32.totalorder %s13, 1
      %p30 = por %p28, %p29
      %p31 = scmp.ne.s32.totalorder %s23, %s26
      %p32 = scmp.eq.s32.totalorder %s13, 0
      %p33 = por %p31, %p32
      %p34 = scmp.ne.s32.totalorder %s23, %s26
      %p35 = scmp.eq.s32.totalorder %s18, 1
      %p36 = por %p34, %p35
      %p37 = scmp.ne.s32.totalorder %s26, %s27
      %p38 = scmp.eq.s32.totalorder %s18, 0
      %p39 = por %p37, %p38
      %p40 = scmp.ne.s32.totalorder %s26, %s27
      %p41 = scmp.eq.s32.totalorder %s19, 1
      %p42 = por %p40, %p41
      %p44 = scmp.ne.s32.totalorder %s27, %s43
      %p45 = scmp.eq.s32.totalorder %s19, 0
      %p46 = por %p44, %p45
      %s48 = sadd.s32 %s47, 1
      %p51 = scmp.eq.s32.totalorder %s13, 1
      %p52 = scmp.ne.s32.totalorder %s47, %s49
      %p53 = scmp.eq.s32.totalorder %s13, 0
      %p54 = por %p52, %p53
      %p55 = scmp.ne.s32.totalorder %s47, %s49
      %p56 = scmp.eq.s32.totalorder %s18, 1
      %p57 = por %p55, %p56
      %p58 = scmp.ne.s32.totalorder %s49, %s50
      %p59 = scmp.eq.s32.totalorder %s18, 0
      %p60 = por %p58, %p59
      %p61 = scmp.ne.s32.totalorder %s49, %s50
      %p62 = scmp.eq.s32.totalorder %s19, 1
      %p63 = por %p61, %p62
      %p65 = scmp.ne.s32.totalorder %s50, %s64
      %p66 = scmp.eq.s32.totalorder %s19, 0
      %p67 = por %p65, %p66
      %s69 = sadd.s32 %s68, 1
      %p72 = scmp.eq.s32.totalorder %s13, 1
      %p73 = scmp.ne.s32.totalorder %s68, %s70
      %p74 = scmp.eq.s32.totalorder %s13, 0
      %p75 = por %p73, %p74
      %p76 = scmp.ne.s32.totalorder %s68, %s70
      %p77 = scmp.eq.s32.totalorder %s18, 1
      %p78 = por %p76, %p77
      %p79 = scmp.ne.s32.totalorder %s70, %s71
      %p80 = scmp.eq.s32.totalorder %s18, 0
      %p81 = por %p79, %p80
      %p82 = scmp.ne.s32.totalorder %s70, %s71
      %p83 = scmp.eq.s32.totalorder %s19, 1
      %p84 = por %p82, %p83
      %p86 = scmp.ne.s32.totalorder %s71, %s85
      %p87 = scmp.eq.s32.totalorder %s19, 0
      %p88 = por %p86, %p87
      %s90 = sadd.s32 %s89, 1
      %p93 = scmp.eq.s32.totalorder %s13, 1
      %p94 = scmp.ne.s32.totalorder %s89, %s91
      %p95 = scmp.eq.s32.totalorder %s13, 0
      %p96 = por %p94, %p95
      %p97 = scmp.ne.s32.totalorder %s89, %s91
      %p98 = scmp.eq.s32.totalorder %s18, 1
      %p99 = por %p97, %p98
      %p100 = scmp.ne.s32.totalorder %s91, %s92
      %p101 = scmp.eq.s32.totalorder %s18, 0
      %p102 = por %p100, %p101
      %p103 = scmp.ne.s32.totalorder %s91, %s92
      %p104 = scmp.eq.s32.totalorder %s19, 1
      %p105 = por %p103, %p104
      %p107 = scmp.ne.s32.totalorder %s92, %s106
      %p108 = scmp.eq.s32.totalorder %s19, 0
      %p109 = por %p107, %p108
      %s110 = ssub.s32 %s13, %s20
      %p111 = scmp.eq.s32.totalorder %s110, 0
      %s113 = sadd.s32 %s112, 1
      %s114 = scalar_select %p111, %s112, %s113
      %p117 = pneg %p111
      %p118 = scmp.eq.s32.totalorder %s13, 1
      %p119 = por %p117, %p118
      %p120 = scmp.ne.s32.totalorder %s112, %s115
      %p121 = scmp.eq.s32.totalorder %s13, 0
      %p122 = por %p120, %p121
      %p123 = scmp.ne.s32.totalorder %s112, %s115
      %p124 = scmp.eq.s32.totalorder %s18, 1
      %p125 = por %p123, %p124
      %p126 = scmp.ne.s32.totalorder %s115, %s116
      %p127 = scmp.eq.s32.totalorder %s18, 0
      %p128 = por %p126, %p127
      %p129 = scmp.ne.s32.totalorder %s115, %s116
      %p130 = scmp.eq.s32.totalorder %s19, 1
      %p131 = por %p129, %p130
      %p133 = scmp.ne.s32.totalorder %s116, %s132
      %p134 = scmp.eq.s32.totalorder %s19, 0
      %p135 = por %p133, %p134
      %p136 = scmp.le.s32.totalorder 1, %s13
      %p137 = scmp.lt.s32.totalorder %s13, 3
      %p138 = pnand %p136, %p137
      %p139 = pneg %p138
      // Predicated region
      $region9: #{tpu_custom_call.1} parent=5 // pred_check
        _
      $region10: #{tpu_custom_call.1} parent=5 // pred_check_branch
        %141 = sbr.rel (%p138) target = $region12
      $region11: #{tpu_custom_call.1} parent=5 // pred_region
        %s142 = ssub.s32 %s13, 1
        // Predicated region
        $region13: #{tpu_custom_call.1} parent=11 // pred_check
          %p143 = pneg %p60
        $region14: #{tpu_custom_call.1} parent=11 // pred_check_branch
          %145 = sbr.rel (%p143) target = $region16
        $region15: #{tpu_custom_call.1} parent=11 // pred_region
          _
        $region16: #{tpu_custom_call.1} parent=11 // pred_fallthru
          _
        // Predicated region
        $region17: #{tpu_custom_call.1} parent=11 // pred_check
          %p146 = pneg %p81
        $region18: #{tpu_custom_call.1} parent=11 // pred_check_branch
          %148 = sbr.rel (%p146) target = $region20
        $region19: #{tpu_custom_call.1} parent=11 // pred_region
          _
        $region20: #{tpu_custom_call.1} parent=11 // pred_fallthru
          _
        // Predicated region
        $region21: #{tpu_custom_call.1} parent=11 // pred_check
          %p149 = pneg %p102
        $region22: #{tpu_custom_call.1} parent=11 // pred_check_branch
          %151 = sbr.rel (%p149) target = $region24
        $region23: #{tpu_custom_call.1} parent=11 // pred_region
          _
        $region24: #{tpu_custom_call.1} parent=11 // pred_fallthru
          _
      $region12: #{tpu_custom_call.1} parent=5 // pred_fallthru
        _
      %p152 = scmp.lt.s32.totalorder %s13, 2
      // Predicated region
      $region25: #{tpu_custom_call.1} parent=5 // pred_check
        %p153 = pneg %p152
      $region26: #{tpu_custom_call.1} parent=5 // pred_check_branch
        %155 = sbr.rel (%p153) target = $region28
      $region27: #{tpu_custom_call.1} parent=5 // pred_region
        // Predicated region
        $region29: #{tpu_custom_call.1} parent=27 // pred_check
          %p156 = pneg %p33
        $region30: #{tpu_custom_call.1} parent=27 // pred_check_branch
          %158 = sbr.rel (%p156) target = $region32
        $region31: #{tpu_custom_call.1} parent=27 // pred_region
          %s159 = sand.u32 %s23, 1
          %s160 = sand.u32 %s23, 1
          %s161 = smul.addr %s160, 256
          %s162 = scalar_lea.vmem [#allocation3], %s161
          %s163 = smul.u32 16, %s13
          %s164 = smul.addr %s163, 4
          %s165 = scalar_lea.vmem %s0, %s164
          // Predicated region
          $region33: #{tpu_custom_call.1} parent=31 // pred_check
            _
          $region34: #{tpu_custom_call.1} parent=31 // pred_check_branch
            %167 = sbr.rel (0) target = $region36
          $region35: #{tpu_custom_call.1} parent=31 // pred_region
            // Predicated region
            $region37: #{tpu_custom_call.1} parent=35 // pred_check
              _
            $region38: #{tpu_custom_call.1} parent=35 // pred_check_branch
              %169 = sbr.rel target = $region40
            $region39: #{tpu_custom_call.1} parent=35 // pred_region
              // Predicated region
              $region52: #{tpu_custom_call.1} parent=39 // pred_check
                _
              $region53: #{tpu_custom_call.1} parent=39 // pred_check_branch
                %311 = sbr.rel (0) target = $region55
              $region54: #{tpu_custom_call.1} parent=39 // pred_region
                loop: start=0, step=1, limit=1
                $region56: #{tpu_custom_call.1} parent=54 // loop_pre_header
                  _
                $region57: #{tpu_custom_call.1} parent=54 // loop_header
                  %s313 = sphi 0, %s317
                  %p314 = scmp.ge.s32.totalorder %s313, 1
                  %s318 = sphi %s165, %s165
                  %s319 = sphi %s162, %s162
                $region58: #{tpu_custom_call.1} parent=54 // loop_header_branch
                  %316 = sbr.rel (%p314) target = $region62
                $region59: #{tpu_custom_call.1} parent=54 // loop_body
                  _
                $region60: #{tpu_custom_call.1} parent=54 // loop_footer
                  %s317 = sadd.s32 1, %s313
                $region61: #{tpu_custom_call.1} parent=54 // loop_footer_branch
                  %312 = sbr.rel target = $region57
                $region62: #{tpu_custom_call.1} parent=54 // loop_exit
                  _
                %s321 = ssub.s32 16, 1
                loop: start=0, step=1, limit=1
                $region63: #{tpu_custom_call.1} parent=54 // loop_pre_header
                  _
                $region64: #{tpu_custom_call.1} parent=54 // loop_header
                  %s323 = sphi 0, %s327
                  %p324 = scmp.ge.s32.totalorder %s323, 1
                  %s328 = sphi %s165, %s165
                  %s329 = sphi %s162, %s162
                $region65: #{tpu_custom_call.1} parent=54 // loop_header_branch
                  %326 = sbr.rel (%p324) target = $region69
                $region66: #{tpu_custom_call.1} parent=54 // loop_body
                  %v330 = vld [vmem:[%s328] sm:%s321]
                  %331 = vst [vmem:[%s329] sm:%s321] %v330
                  %v332 = vld [vmem:[%s328 + $0x4] sm:%s321]
                  %333 = vst [vmem:[%s329 + $0x4] sm:%s321] %v332
                  %v334 = vld [vmem:[%s328 + $0x8] sm:%s321]
                  %335 = vst [vmem:[%s329 + $0x8] sm:%s321] %v334
                  %v336 = vld [vmem:[%s328 + $0xc] sm:%s321]
                  %337 = vst [vmem:[%s329 + $0xc] sm:%s321] %v336
                  %v338 = vld [vmem:[%s328 + $0x10] sm:%s321]
                  %339 = vst [vmem:[%s329 + $0x10] sm:%s321] %v338
                  %v340 = vld [vmem:[%s328 + $0x14] sm:%s321]
                  %341 = vst [vmem:[%s329 + $0x14] sm:%s321] %v340
                  %v342 = vld [vmem:[%s328 + $0x18] sm:%s321]
                  %343 = vst [vmem:[%s329 + $0x18] sm:%s321] %v342
                  %v344 = vld [vmem:[%s328 + $0x1c] sm:%s321]
                  %345 = vst [vmem:[%s329 + $0x1c] sm:%s321] %v344
                  %v346 = vld [vmem:[%s328 + $0x20] sm:%s321]
                  %347 = vst [vmem:[%s329 + $0x20] sm:%s321] %v346
                  %v348 = vld [vmem:[%s328 + $0x24] sm:%s321]
                  %349 = vst [vmem:[%s329 + $0x24] sm:%s321] %v348
                  %v350 = vld [vmem:[%s328 + $0x28] sm:%s321]
                  %351 = vst [vmem:[%s329 + $0x28] sm:%s321] %v350
                  %v352 = vld [vmem:[%s328 + $0x2c] sm:%s321]
                  %353 = vst [vmem:[%s329 + $0x2c] sm:%s321] %v352
                  %v354 = vld [vmem:[%s328 + $0x30] sm:%s321]
                  %355 = vst [vmem:[%s329 + $0x30] sm:%s321] %v354
                  %v356 = vld [vmem:[%s328 + $0x34] sm:%s321]
                  %357 = vst [vmem:[%s329 + $0x34] sm:%s321] %v356
                  %v358 = vld [vmem:[%s328 + $0x38] sm:%s321]
                  %359 = vst [vmem:[%s329 + $0x38] sm:%s321] %v358
                  %v360 = vld [vmem:[%s328 + $0x3c] sm:%s321]
                  %361 = vst [vmem:[%s329 + $0x3c] sm:%s321] %v360
                  %v362 = vld [vmem:[%s328 + $0x80] sm:%s321]
                  %363 = vst [vmem:[%s329 + $0x40] sm:%s321] %v362
                  %v364 = vld [vmem:[%s328 + $0x84] sm:%s321]
                  %365 = vst [vmem:[%s329 + $0x44] sm:%s321] %v364
                  %v366 = vld [vmem:[%s328 + $0x88] sm:%s321]
                  %367 = vst [vmem:[%s329 + $0x48] sm:%s321] %v366
                  %v368 = vld [vmem:[%s328 + $0x8c] sm:%s321]
                  %369 = vst [vmem:[%s329 + $0x4c] sm:%s321] %v368
                  %v370 = vld [vmem:[%s328 + $0x90] sm:%s321]
                  %371 = vst [vmem:[%s329 + $0x50] sm:%s321] %v370
                  %v372 = vld [vmem:[%s328 + $0x94] sm:%s321]
                  %373 = vst [vmem:[%s329 + $0x54] sm:%s321] %v372
                  %v374 = vld [vmem:[%s328 + $0x98] sm:%s321]
                  %375 = vst [vmem:[%s329 + $0x58] sm:%s321] %v374
                  %v376 = vld [vmem:[%s328 + $0x9c] sm:%s321]
                  %377 = vst [vmem:[%s329 + $0x5c] sm:%s321] %v376
                  %v378 = vld [vmem:[%s328 + $0xa0] sm:%s321]
                  %379 = vst [vmem:[%s329 + $0x60] sm:%s321] %v378
                  %v380 = vld [vmem:[%s328 + $0xa4] sm:%s321]
                  %381 = vst [vmem:[%s329 + $0x64] sm:%s321] %v380
                  %v382 = vld [vmem:[%s328 + $0xa8] sm:%s321]
                  %383 = vst [vmem:[%s329 + $0x68] sm:%s321] %v382
                  %v384 = vld [vmem:[%s328 + $0xac] sm:%s321]
                  %385 = vst [vmem:[%s329 + $0x6c] sm:%s321] %v384
                  %v386 = vld [vmem:[%s328 + $0xb0] sm:%s321]
                  %387 = vst [vmem:[%s329 + $0x70] sm:%s321] %v386
                  %v388 = vld [vmem:[%s328 + $0xb4] sm:%s321]
                  %389 = vst [vmem:[%s329 + $0x74] sm:%s321] %v388
                  %v390 = vld [vmem:[%s328 + $0xb8] sm:%s321]
                  %391 = vst [vmem:[%s329 + $0x78] sm:%s321] %v390
                  %v392 = vld [vmem:[%s328 + $0xbc] sm:%s321]
                  %393 = vst [vmem:[%s329 + $0x7c] sm:%s321] %v392
                  %v394 = vld [vmem:[%s328 + $0x100] sm:%s321]
                  %395 = vst [vmem:[%s329 + $0x80] sm:%s321] %v394
                  %v396 = vld [vmem:[%s328 + $0x104] sm:%s321]
                  %397 = vst [vmem:[%s329 + $0x84] sm:%s321] %v396
                  %v398 = vld [vmem:[%s328 + $0x108] sm:%s321]
                  %399 = vst [vmem:[%s329 + $0x88] sm:%s321] %v398
                  %v400 = vld [vmem:[%s328 + $0x10c] sm:%s321]
                  %401 = vst [vmem:[%s329 + $0x8c] sm:%s321] %v400
                  %v402 = vld [vmem:[%s328 + $0x110] sm:%s321]
                  %403 = vst [vmem:[%s329 + $0x90] sm:%s321] %v402
                  %v404 = vld [vmem:[%s328 + $0x114] sm:%s321]
                  %405 = vst [vmem:[%s329 + $0x94] sm:%s321] %v404
                  %v406 = vld [vmem:[%s328 + $0x118] sm:%s321]
                  %407 = vst [vmem:[%s329 + $0x98] sm:%s321] %v406
                  %v408 = vld [vmem:[%s328 + $0x11c] sm:%s321]
                  %409 = vst [vmem:[%s329 + $0x9c] sm:%s321] %v408
                  %v410 = vld [vmem:[%s328 + $0x120] sm:%s321]
                  %411 = vst [vmem:[%s329 + $0xa0] sm:%s321] %v410
                  %v412 = vld [vmem:[%s328 + $0x124] sm:%s321]
                  %413 = vst [vmem:[%s329 + $0xa4] sm:%s321] %v412
                  %v414 = vld [vmem:[%s328 + $0x128] sm:%s321]
                  %415 = vst [vmem:[%s329 + $0xa8] sm:%s321] %v414
                  %v416 = vld [vmem:[%s328 + $0x12c] sm:%s321]
                  %417 = vst [vmem:[%s329 + $0xac] sm:%s321] %v416
                  %v418 = vld [vmem:[%s328 + $0x130] sm:%s321]
                  %419 = vst [vmem:[%s329 + $0xb0] sm:%s321] %v418
                  %v420 = vld [vmem:[%s328 + $0x134] sm:%s321]
                  %421 = vst [vmem:[%s329 + $0xb4] sm:%s321] %v420
                  %v422 = vld [vmem:[%s328 + $0x138] sm:%s321]
                  %423 = vst [vmem:[%s329 + $0xb8] sm:%s321] %v422
                  %v424 = vld [vmem:[%s328 + $0x13c] sm:%s321]
                  %425 = vst [vmem:[%s329 + $0xbc] sm:%s321] %v424
                  %v426 = vld [vmem:[%s328 + $0x180] sm:%s321]
                  %427 = vst [vmem:[%s329 + $0xc0] sm:%s321] %v426
                  %v428 = vld [vmem:[%s328 + $0x184] sm:%s321]
                  %429 = vst [vmem:[%s329 + $0xc4] sm:%s321] %v428
                  %v430 = vld [vmem:[%s328 + $0x188] sm:%s321]
                  %431 = vst [vmem:[%s329 + $0xc8] sm:%s321] %v430
                  %v432 = vld [vmem:[%s328 + $0x18c] sm:%s321]
                  %433 = vst [vmem:[%s329 + $0xcc] sm:%s321] %v432
                  %v434 = vld [vmem:[%s328 + $0x190] sm:%s321]
                  %435 = vst [vmem:[%s329 + $0xd0] sm:%s321] %v434
                  %v436 = vld [vmem:[%s328 + $0x194] sm:%s321]
                  %437 = vst [vmem:[%s329 + $0xd4] sm:%s321] %v436
                  %v438 = vld [vmem:[%s328 + $0x198] sm:%s321]
                  %439 = vst [vmem:[%s329 + $0xd8] sm:%s321] %v438
                  %v440 = vld [vmem:[%s328 + $0x19c] sm:%s321]
                  %441 = vst [vmem:[%s329 + $0xdc] sm:%s321] %v440
                  %v442 = vld [vmem:[%s328 + $0x1a0] sm:%s321]
                  %443 = vst [vmem:[%s329 + $0xe0] sm:%s321] %v442
                  %v444 = vld [vmem:[%s328 + $0x1a4] sm:%s321]
                  %445 = vst [vmem:[%s329 + $0xe4] sm:%s321] %v444
                  %v446 = vld [vmem:[%s328 + $0x1a8] sm:%s321]
                  %447 = vst [vmem:[%s329 + $0xe8] sm:%s321] %v446
                  %v448 = vld [vmem:[%s328 + $0x1ac] sm:%s321]
                  %449 = vst [vmem:[%s329 + $0xec] sm:%s321] %v448
                  %v450 = vld [vmem:[%s328 + $0x1b0] sm:%s321]
                  %451 = vst [vmem:[%s329 + $0xf0] sm:%s321] %v450
                  %v452 = vld [vmem:[%s328 + $0x1b4] sm:%s321]
                  %453 = vst [vmem:[%s329 + $0xf4] sm:%s321] %v452
                  %v454 = vld [vmem:[%s328 + $0x1b8] sm:%s321]
                  %455 = vst [vmem:[%s329 + $0xf8] sm:%s321] %v454
                  %v456 = vld [vmem:[%s328 + $0x1bc] sm:%s321]
                  %457 = vst [vmem:[%s329 + $0xfc] sm:%s321] %v456
                $region67: #{tpu_custom_call.1} parent=54 // loop_footer
                  %s327 = sadd.s32 1, %s323
                $region68: #{tpu_custom_call.1} parent=54 // loop_footer_branch
                  %322 = sbr.rel target = $region64
                $region69: #{tpu_custom_call.1} parent=54 // loop_exit
                  _
              $region55: #{tpu_custom_call.1} parent=39 // pred_fallthru
                _
            $region40: #{tpu_custom_call.1} parent=35 // pred_fallthru
              _
            // Predicated region
            $region41: #{tpu_custom_call.1} parent=35 // pred_check
              _
            $region42: #{tpu_custom_call.1} parent=35 // pred_check_branch
              %171 = sbr.rel (0) target = $region44
            $region43: #{tpu_custom_call.1} parent=35 // pred_region
              %s173 = ssub.s32 16, 1
              loop: start=0, step=1, limit=1
              $region45: #{tpu_custom_call.1} parent=43 // loop_pre_header
                _
              $region46: #{tpu_custom_call.1} parent=43 // loop_header
                %s175 = sphi 0, %s179
                %p176 = scmp.ge.s32.totalorder %s175, 1
                %s180 = sphi %s165, %s165
                %s181 = sphi %s162, %s162
              $region47: #{tpu_custom_call.1} parent=43 // loop_header_branch
                %178 = sbr.rel (%p176) target = $region51
              $region48: #{tpu_custom_call.1} parent=43 // loop_body
                %v182 = vld [vmem:[%s180] sm:%s173]
                %183 = vst [vmem:[%s181] sm:%s173] %v182
                %v184 = vld [vmem:[%s180 + $0x4] sm:%s173]
                %185 = vst [vmem:[%s181 + $0x4] sm:%s173] %v184
                %v186 = vld [vmem:[%s180 + $0x8] sm:%s173]
                %187 = vst [vmem:[%s181 + $0x8] sm:%s173] %v186
                %v188 = vld [vmem:[%s180 + $0xc] sm:%s173]
                %189 = vst [vmem:[%s181 + $0xc] sm:%s173] %v188
                %v190 = vld [vmem:[%s180 + $0x10] sm:%s173]
                %191 = vst [vmem:[%s181 + $0x10] sm:%s173] %v190
                %v192 = vld [vmem:[%s180 + $0x14] sm:%s173]
                %193 = vst [vmem:[%s181 + $0x14] sm:%s173] %v192
                %v194 = vld [vmem:[%s180 + $0x18] sm:%s173]
                %195 = vst [vmem:[%s181 + $0x18] sm:%s173] %v194
                %v196 = vld [vmem:[%s180 + $0x1c] sm:%s173]
                %197 = vst [vmem:[%s181 + $0x1c] sm:%s173] %v196
                %v198 = vld [vmem:[%s180 + $0x20] sm:%s173]
                %199 = vst [vmem:[%s181 + $0x20] sm:%s173] %v198
                %v200 = vld [vmem:[%s180 + $0x24] sm:%s173]
                %201 = vst [vmem:[%s181 + $0x24] sm:%s173] %v200
                %v202 = vld [vmem:[%s180 + $0x28] sm:%s173]
                %203 = vst [vmem:[%s181 + $0x28] sm:%s173] %v202
                %v204 = vld [vmem:[%s180 + $0x2c] sm:%s173]
                %205 = vst [vmem:[%s181 + $0x2c] sm:%s173] %v204
                %v206 = vld [vmem:[%s180 + $0x30] sm:%s173]
                %207 = vst [vmem:[%s181 + $0x30] sm:%s173] %v206
                %v208 = vld [vmem:[%s180 + $0x34] sm:%s173]
                %209 = vst [vmem:[%s181 + $0x34] sm:%s173] %v208
                %v210 = vld [vmem:[%s180 + $0x38] sm:%s173]
                %211 = vst [vmem:[%s181 + $0x38] sm:%s173] %v210
                %v212 = vld [vmem:[%s180 + $0x3c] sm:%s173]
                %213 = vst [vmem:[%s181 + $0x3c] sm:%s173] %v212
                %v214 = vld [vmem:[%s180 + $0x80] sm:%s173]
                %215 = vst [vmem:[%s181 + $0x40] sm:%s173] %v214
                %v216 = vld [vmem:[%s180 + $0x84] sm:%s173]
                %217 = vst [vmem:[%s181 + $0x44] sm:%s173] %v216
                %v218 = vld [vmem:[%s180 + $0x88] sm:%s173]
                %219 = vst [vmem:[%s181 + $0x48] sm:%s173] %v218
                %v220 = vld [vmem:[%s180 + $0x8c] sm:%s173]
                %221 = vst [vmem:[%s181 + $0x4c] sm:%s173] %v220
                %v222 = vld [vmem:[%s180 + $0x90] sm:%s173]
                %223 = vst [vmem:[%s181 + $0x50] sm:%s173] %v222
                %v224 = vld [vmem:[%s180 + $0x94] sm:%s173]
                %225 = vst [vmem:[%s181 + $0x54] sm:%s173] %v224
                %v226 = vld [vmem:[%s180 + $0x98] sm:%s173]
                %227 = vst [vmem:[%s181 + $0x58] sm:%s173] %v226
                %v228 = vld [vmem:[%s180 + $0x9c] sm:%s173]
                %229 = vst [vmem:[%s181 + $0x5c] sm:%s173] %v228
                %v230 = vld [vmem:[%s180 + $0xa0] sm:%s173]
                %231 = vst [vmem:[%s181 + $0x60] sm:%s173] %v230
                %v232 = vld [vmem:[%s180 + $0xa4] sm:%s173]
                %233 = vst [vmem:[%s181 + $0x64] sm:%s173] %v232
                %v234 = vld [vmem:[%s180 + $0xa8] sm:%s173]
                %235 = vst [vmem:[%s181 + $0x68] sm:%s173] %v234
                %v236 = vld [vmem:[%s180 + $0xac] sm:%s173]
                %237 = vst [vmem:[%s181 + $0x6c] sm:%s173] %v236
                %v238 = vld [vmem:[%s180 + $0xb0] sm:%s173]
                %239 = vst [vmem:[%s181 + $0x70] sm:%s173] %v238
                %v240 = vld [vmem:[%s180 + $0xb4] sm:%s173]
                %241 = vst [vmem:[%s181 + $0x74] sm:%s173] %v240
                %v242 = vld [vmem:[%s180 + $0xb8] sm:%s173]
                %243 = vst [vmem:[%s181 + $0x78] sm:%s173] %v242
                %v244 = vld [vmem:[%s180 + $0xbc] sm:%s173]
                %245 = vst [vmem:[%s181 + $0x7c] sm:%s173] %v244
                %v246 = vld [vmem:[%s180 + $0x100] sm:%s173]
                %247 = vst [vmem:[%s181 + $0x80] sm:%s173] %v246
                %v248 = vld [vmem:[%s180 + $0x104] sm:%s173]
                %249 = vst [vmem:[%s181 + $0x84] sm:%s173] %v248
                %v250 = vld [vmem:[%s180 + $0x108] sm:%s173]
                %251 = vst [vmem:[%s181 + $0x88] sm:%s173] %v250
                %v252 = vld [vmem:[%s180 + $0x10c] sm:%s173]
                %253 = vst [vmem:[%s181 + $0x8c] sm:%s173] %v252
                %v254 = vld [vmem:[%s180 + $0x110] sm:%s173]
                %255 = vst [vmem:[%s181 + $0x90] sm:%s173] %v254
                %v256 = vld [vmem:[%s180 + $0x114] sm:%s173]
                %257 = vst [vmem:[%s181 + $0x94] sm:%s173] %v256
                %v258 = vld [vmem:[%s180 + $0x118] sm:%s173]
                %259 = vst [vmem:[%s181 + $0x98] sm:%s173] %v258
                %v260 = vld [vmem:[%s180 + $0x11c] sm:%s173]
                %261 = vst [vmem:[%s181 + $0x9c] sm:%s173] %v260
                %v262 = vld [vmem:[%s180 + $0x120] sm:%s173]
                %263 = vst [vmem:[%s181 + $0xa0] sm:%s173] %v262
                %v264 = vld [vmem:[%s180 + $0x124] sm:%s173]
                %265 = vst [vmem:[%s181 + $0xa4] sm:%s173] %v264
                %v266 = vld [vmem:[%s180 + $0x128] sm:%s173]
                %267 = vst [vmem:[%s181 + $0xa8] sm:%s173] %v266
                %v268 = vld [vmem:[%s180 + $0x12c] sm:%s173]
                %269 = vst [vmem:[%s181 + $0xac] sm:%s173] %v268
                %v270 = vld [vmem:[%s180 + $0x130] sm:%s173]
                %271 = vst [vmem:[%s181 + $0xb0] sm:%s173] %v270
                %v272 = vld [vmem:[%s180 + $0x134] sm:%s173]
                %273 = vst [vmem:[%s181 + $0xb4] sm:%s173] %v272
                %v274 = vld [vmem:[%s180 + $0x138] sm:%s173]
                %275 = vst [vmem:[%s181 + $0xb8] sm:%s173] %v274
                %v276 = vld [vmem:[%s180 + $0x13c] sm:%s173]
                %277 = vst [vmem:[%s181 + $0xbc] sm:%s173] %v276
                %v278 = vld [vmem:[%s180 + $0x180] sm:%s173]
                %279 = vst [vmem:[%s181 + $0xc0] sm:%s173] %v278
                %v280 = vld [vmem:[%s180 + $0x184] sm:%s173]
                %281 = vst [vmem:[%s181 + $0xc4] sm:%s173] %v280
                %v282 = vld [vmem:[%s180 + $0x188] sm:%s173]
                %283 = vst [vmem:[%s181 + $0xc8] sm:%s173] %v282
                %v284 = vld [vmem:[%s180 + $0x18c] sm:%s173]
                %285 = vst [vmem:[%s181 + $0xcc] sm:%s173] %v284
                %v286 = vld [vmem:[%s180 + $0x190] sm:%s173]
                %287 = vst [vmem:[%s181 + $0xd0] sm:%s173] %v286
                %v288 = vld [vmem:[%s180 + $0x194] sm:%s173]
                %289 = vst [vmem:[%s181 + $0xd4] sm:%s173] %v288
                %v290 = vld [vmem:[%s180 + $0x198] sm:%s173]
                %291 = vst [vmem:[%s181 + $0xd8] sm:%s173] %v290
                %v292 = vld [vmem:[%s180 + $0x19c] sm:%s173]
                %293 = vst [vmem:[%s181 + $0xdc] sm:%s173] %v292
                %v294 = vld [vmem:[%s180 + $0x1a0] sm:%s173]
                %295 = vst [vmem:[%s181 + $0xe0] sm:%s173] %v294
                %v296 = vld [vmem:[%s180 + $0x1a4] sm:%s173]
                %297 = vst [vmem:[%s181 + $0xe4] sm:%s173] %v296
                %v298 = vld [vmem:[%s180 + $0x1a8] sm:%s173]
                %299 = vst [vmem:[%s181 + $0xe8] sm:%s173] %v298
                %v300 = vld [vmem:[%s180 + $0x1ac] sm:%s173]
                %301 = vst [vmem:[%s181 + $0xec] sm:%s173] %v300
                %v302 = vld [vmem:[%s180 + $0x1b0] sm:%s173]
                %303 = vst [vmem:[%s181 + $0xf0] sm:%s173] %v302
                %v304 = vld [vmem:[%s180 + $0x1b4] sm:%s173]
                %305 = vst [vmem:[%s181 + $0xf4] sm:%s173] %v304
                %v306 = vld [vmem:[%s180 + $0x1b8] sm:%s173]
                %307 = vst [vmem:[%s181 + $0xf8] sm:%s173] %v306
                %v308 = vld [vmem:[%s180 + $0x1bc] sm:%s173]
                %309 = vst [vmem:[%s181 + $0xfc] sm:%s173] %v308
              $region49: #{tpu_custom_call.1} parent=43 // loop_footer
                %s179 = sadd.s32 1, %s175
              $region50: #{tpu_custom_call.1} parent=43 // loop_footer_branch
                %174 = sbr.rel target = $region46
              $region51: #{tpu_custom_call.1} parent=43 // loop_exit
                _
            $region44: #{tpu_custom_call.1} parent=35 // pred_fallthru
              _
          $region36: #{tpu_custom_call.1} parent=31 // pred_fallthru
            _
          %458 = vnop
        $region32: #{tpu_custom_call.1} parent=27 // pred_fallthru
          _
      $region28: #{tpu_custom_call.1} parent=5 // pred_fallthru
        _
      %p459 = scmp.le.s32.totalorder 1, %s13
      %p460 = scmp.lt.s32.totalorder %s13, 3
      %p461 = pnand %p459, %p460
      %p462 = pneg %p461
      // Predicated region
      $region70: #{tpu_custom_call.1} parent=5 // pred_check
        _
      $region71: #{tpu_custom_call.1} parent=5 // pred_check_branch
        %464 = sbr.rel (%p461) target = $region73
      $region72: #{tpu_custom_call.1} parent=5 // pred_region
        %s465 = ssub.s32 %s13, 1
        %s466 = sand.u32 %s26, 1
        %s467 = sand.u32 %s26, 1
        %s468 = smul.addr %s467, 256
        %s469 = scalar_lea.vmem [#allocation3], %s468
        // Predicated region
        $region74: #{tpu_custom_call.1} parent=72 // pred_check
          %p470 = pneg %p39
        $region75: #{tpu_custom_call.1} parent=72 // pred_check_branch
          %472 = sbr.rel (%p470) target = $region77
        $region76: #{tpu_custom_call.1} parent=72 // pred_region
          _
        $region77: #{tpu_custom_call.1} parent=72 // pred_fallthru
          _
        %s473 = sand.u32 %s26, 1
        %s474 = sand.u32 %s26, 1
        %s475 = smul.addr %s474, 256
        %s476 = scalar_lea.vmem [#allocation3], %s475
        %p477 = pneg %p39
        %p478 = pneg %p36
        %p479 = pneg %p60
        %p480 = pneg %p57
        %p481 = pneg %p81
        %p482 = pneg %p78
        %p483 = pneg %p102
        %p484 = pneg %p99
        %p485 = pneg %p128
        %p486 = pneg %p125
        %s487 = sand.u32 %s115, 1
        %s488 = scalar_lea.sflag [#allocation5], %s487
        %s489 = sand.u32 %s115, 1
        %s490 = smul.addr %s489, 64
        %s491 = scalar_lea.vmem [#allocation4], %s490
        %s492 = smul.u32 16, %s18
        %v494 = vld [vmem:[%s1] sm:$0xff]
        %v495 = vld [vmem:[%s1 + $0x8] sm:$0xff]
        %v496 = vld [vmem:[%s1 + $0x10] sm:$0xff]
        %v497 = vld [vmem:[%s1 + $0x18] sm:$0xff]
        %v498 = vld [vmem:[%s1 + $0x20] sm:$0xff]
        %v499 = vld [vmem:[%s1 + $0x28] sm:$0xff]
        %v500 = vld [vmem:[%s1 + $0x30] sm:$0xff]
        %v501 = vld [vmem:[%s1 + $0x38] sm:$0xff]
        %v502 = vld [vmem:[%s2] sm:$0xff]
        %v503 = vld [vmem:[%s2 + $0x8] sm:$0xff]
        %v504 = vld [vmem:[%s2 + $0x10] sm:$0xff]
        %v505 = vld [vmem:[%s2 + $0x18] sm:$0xff]
        %v506 = vld [vmem:[%s2 + $0x20] sm:$0xff]
        %v507 = vld [vmem:[%s2 + $0x28] sm:$0xff]
        %v508 = vld [vmem:[%s2 + $0x30] sm:$0xff]
        %v509 = vld [vmem:[%s2 + $0x38] sm:$0xff]
        %v510 = vld [vmem:[%s3] sm:$0x3]
        %v511 = vlaneseq
        %v512 = vand.u32 %v511, 127
        %v513 = vadd.s32 %v512, 128
        %vm514 = vcmp.lt.s32.totalorder %v512, 0
        %v515 = vsub.s32 0, %v512
        %v516 = vsel %vm514, %v515, %v512
        %v517 = vshrl.u32 %v516, 6
        %v518 = vand.u32 %v516, 63
        %v519 = vsub.s32 0, %v518
        %v520 = vsel %vm514, %v519, %v518
        %vm521 = vcmp.lt.s32.totalorder %v513, 0
        %v522 = vsub.s32 0, %v513
        %v523 = vsel %vm521, %v522, %v513
        %v524 = vshrl.u32 %v523, 6
        %v525 = vand.u32 %v523, 63
        %v526 = vsub.s32 0, %v525
        %v527 = vsel %vm521, %v526, %v525
        %vm528 = vcmp.ne.s32.totalorder %v520, 0
        %vm529 = vcmp.ne.s32.totalorder %v527, 0
        %vm530 = vcmp.lt.s32.totalorder %v520, 0
        %vm531 = vcmp.lt.s32.totalorder %v527, 0
        %vm532 = vmand %vm530, %vm528
        %vm533 = vmand %vm531, %vm529
        %v534 = vadd.s32 %v520, 64
        %v535 = vadd.s32 %v527, 64
        %v536 = vsel %vm532, %v534, %v520
        %v537 = vsel %vm533, %v535, %v527
        %vm538 = vcmp.lt.s32.totalorder %v536, 32
        %vm539 = vcmp.lt.s32.totalorder %v537, 32
        %v540 = vld [vmem:[%s469] sm:$0xf]
        %v541 = vld [vmem:[%s469 + $0x4] sm:$0xf]
        %v542 = vld [vmem:[%s469 + $0x8] sm:$0xf]
        %v543 = vld [vmem:[%s469 + $0xc] sm:$0xf]
        %v544 = vld [vmem:[%s469 + $0x10] sm:$0xf]
        %v545 = vld [vmem:[%s469 + $0x14] sm:$0xf]
        %v546 = vld [vmem:[%s469 + $0x18] sm:$0xf]
        %v547 = vld [vmem:[%s469 + $0x1c] sm:$0xf]
        %v548 = vld [vmem:[%s469 + $0x20] sm:$0xf]
        %v549 = vld [vmem:[%s469 + $0x24] sm:$0xf]
        %v550 = vld [vmem:[%s469 + $0x28] sm:$0xf]
        %v551 = vld [vmem:[%s469 + $0x2c] sm:$0xf]
        %v552 = vld [vmem:[%s469 + $0x30] sm:$0xf]
        %v553 = vld [vmem:[%s469 + $0x34] sm:$0xf]
        %v554 = vld [vmem:[%s469 + $0x38] sm:$0xf]
        %v555 = vld [vmem:[%s469 + $0x3c] sm:$0xf]
        %v557 = vperm.slane %v510, 0
        %v558 = vperm.slane %v510, 1
        %v577 = vunpack.c.l.b16 %v540
        %v578 = vunpack.c.l.b16 %v541
        %v579 = vunpack.c.l.b16 %v542
        %v580 = vunpack.c.l.b16 %v543
        %v581 = vunpack.c.l.b16 %v544
        %v582 = vunpack.c.l.b16 %v545
        %v583 = vunpack.c.l.b16 %v546
        %v584 = vunpack.c.l.b16 %v547
        %v585 = vunpack.c.l.b16 %v548
        %v586 = vunpack.c.l.b16 %v549
        %v587 = vunpack.c.l.b16 %v550
        %v588 = vunpack.c.l.b16 %v551
        %v589 = vunpack.c.l.b16 %v552
        %v590 = vunpack.c.l.b16 %v553
        %v591 = vunpack.c.l.b16 %v554
        %v592 = vunpack.c.l.b16 %v555
        %v593 = vpack.c.b16 %v578, %v577
        %v594 = vpack.c.b16 %v580, %v579
        %v595 = vpack.c.b16 %v582, %v581
        %v596 = vpack.c.b16 %v584, %v583
        %v597 = vpack.c.b16 %v586, %v585
        %v598 = vpack.c.b16 %v588, %v587
        %v599 = vpack.c.b16 %v590, %v589
        %v600 = vpack.c.b16 %v592, %v591
        %v609 = vunpack.c.l.b16 %v494
        %v610 = vunpack.c.h.b16 %v494
        %v611 = vunpack.c.l.b16 %v495
        %v612 = vunpack.c.h.b16 %v495
        %v613 = vunpack.c.l.b16 %v496
        %v614 = vunpack.c.h.b16 %v496
        %v615 = vunpack.c.l.b16 %v497
        %v616 = vunpack.c.h.b16 %v497
        %v617 = vunpack.c.l.b16 %v498
        %v618 = vunpack.c.h.b16 %v498
        %v619 = vunpack.c.l.b16 %v499
        %v620 = vunpack.c.h.b16 %v499
        %v621 = vunpack.c.l.b16 %v500
        %v622 = vunpack.c.h.b16 %v500
        %v623 = vunpack.c.l.b16 %v501
        %v624 = vunpack.c.h.b16 %v501
        %v625 = vpack.c.b16 %v611, %v609
        %v626 = vpack.c.b16 %v612, %v610
        %v627 = vpack.c.b16 %v615, %v613
        %v628 = vpack.c.b16 %v616, %v614
        %v629 = vpack.c.b16 %v619, %v617
        %v630 = vpack.c.b16 %v620, %v618
        %v631 = vpack.c.b16 %v623, %v621
        %v632 = vpack.c.b16 %v624, %v622
        %vm641 = vcmask 523264
        %v643 = vsel %vm641, %v593, 0
        %v646 = vsel %vm641, %v594, 0
        %v649 = vsel %vm641, %v595, 0
        %v652 = vsel %vm641, %v596, 0
        %v655 = vsel %vm641, %v597, 0
        %v658 = vsel %vm641, %v598, 0
        %v661 = vsel %vm641, %v599, 0
        %v664 = vsel %vm641, %v600, 0
        %666 = vmatpush.bf16.msra.mxu0 0
        %667 = vmatpush.bf16.msra.mxu0 0
        %668 = vmatpush.bf16.msra.mxu0 0
        %669 = vmatpush.bf16.msra.mxu0 0
        %670 = vmatpush.bf16.msra.mxu0 %v631
        %671 = vmatpush.bf16.msra.mxu0 %v629
        %672 = vmatpush.bf16.msra.mxu0 %v627
        %673 = vmatpush.bf16.msra.mxu0 %v625
        %674 = vmatmul.bf16.gmra.mxu0 %v643
        %v675 = vpop.f32.mrf.mxu0
        %v676 = vadd.f32 %v557, %v675
        %v677 = vpop.f32.mrf.mxu0
        %v678 = vadd.f32 %v557, %v677
        %679 = vmatmul.bf16.gmra.mxu0 %v646
        %v680 = vpop.f32.mrf.mxu0
        %v681 = vadd.f32 %v557, %v680
        %v682 = vpop.f32.mrf.mxu0
        %v683 = vadd.f32 %v557, %v682
        %684 = vmatmul.bf16.gmra.mxu0 %v649
        %v685 = vpop.f32.mrf.mxu0
        %v686 = vadd.f32 %v557, %v685
        %v687 = vpop.f32.mrf.mxu0
        %v688 = vadd.f32 %v557, %v687
        %689 = vmatmul.bf16.gmra.mxu0 %v652
        %v690 = vpop.f32.mrf.mxu0
        %v691 = vadd.f32 %v557, %v690
        %v692 = vpop.f32.mrf.mxu0
        %v693 = vadd.f32 %v557, %v692
        %694 = vmatmul.bf16.gmra.mxu0 %v655
        %v695 = vpop.f32.mrf.mxu0
        %v696 = vadd.f32 %v557, %v695
        %v697 = vpop.f32.mrf.mxu0
        %v698 = vadd.f32 %v557, %v697
        %699 = vmatmul.bf16.gmra.mxu0 %v658
        %v700 = vpop.f32.mrf.mxu0
        %v701 = vadd.f32 %v557, %v700
        %v702 = vpop.f32.mrf.mxu0
        %v703 = vadd.f32 %v557, %v702
        %704 = vmatmul.bf16.gmra.mxu0 %v661
        %v705 = vpop.f32.mrf.mxu0
        %v706 = vadd.f32 %v557, %v705
        %v707 = vpop.f32.mrf.mxu0
        %v708 = vadd.f32 %v557, %v707
        %709 = vmatmul.bf16.gmra.mxu0 %v664
        %v710 = vpop.f32.mrf.mxu0
        %v711 = vadd.f32 %v557, %v710
        %v712 = vpop.f32.mrf.mxu0
        %v713 = vadd.f32 %v557, %v712
        %714 = vdwg.mxu0
        %715 = vmatpush.bf16.msra.mxu0 0
        %716 = vmatpush.bf16.msra.mxu0 0
        %717 = vmatpush.bf16.msra.mxu0 0
        %718 = vmatpush.bf16.msra.mxu0 0
        %719 = vmatpush.bf16.msra.mxu0 %v632
        %720 = vmatpush.bf16.msra.mxu0 %v630
        %721 = vmatpush.bf16.msra.mxu0 %v628
        %722 = vmatpush.bf16.msra.mxu0 %v626
        %723 = vmatmul.bf16.gmra.mxu0 %v643
        %v724 = vpop.f32.mrf.mxu0
        %v725 = vadd.f32 %v558, %v724
        %v726 = vpop.f32.mrf.mxu0
        %v727 = vadd.f32 %v558, %v726
        %728 = vmatmul.bf16.gmra.mxu0 %v646
        %v729 = vpop.f32.mrf.mxu0
        %v730 = vadd.f32 %v558, %v729
        %v731 = vpop.f32.mrf.mxu0
        %v732 = vadd.f32 %v558, %v731
        %733 = vmatmul.bf16.gmra.mxu0 %v649
        %v734 = vpop.f32.mrf.mxu0
        %v735 = vadd.f32 %v558, %v734
        %v736 = vpop.f32.mrf.mxu0
        %v737 = vadd.f32 %v558, %v736
        %738 = vmatmul.bf16.gmra.mxu0 %v652
        %v739 = vpop.f32.mrf.mxu0
        %v740 = vadd.f32 %v558, %v739
        %v741 = vpop.f32.mrf.mxu0
        %v742 = vadd.f32 %v558, %v741
        %743 = vmatmul.bf16.gmra.mxu0 %v655
        %v744 = vpop.f32.mrf.mxu0
        %v745 = vadd.f32 %v558, %v744
        %v746 = vpop.f32.mrf.mxu0
        %v747 = vadd.f32 %v558, %v746
        %748 = vmatmul.bf16.gmra.mxu0 %v658
        %v749 = vpop.f32.mrf.mxu0
        %v750 = vadd.f32 %v558, %v749
        %v751 = vpop.f32.mrf.mxu0
        %v752 = vadd.f32 %v558, %v751
        %753 = vmatmul.bf16.gmra.mxu0 %v661
        %v754 = vpop.f32.mrf.mxu0
        %v755 = vadd.f32 %v558, %v754
        %v756 = vpop.f32.mrf.mxu0
        %v757 = vadd.f32 %v558, %v756
        %758 = vmatmul.bf16.gmra.mxu0 %v664
        %v759 = vpop.f32.mrf.mxu0
        %v760 = vadd.f32 %v558, %v759
        %v761 = vpop.f32.mrf.mxu0
        %v762 = vadd.f32 %v558, %v761
        %763 = vdwg.mxu0
        %s764 = scalar_lea.vmem %s469, 192 [#allocation3]
        %v765 = vld [vmem:[%s764] sm:$0xf]
        %v766 = vld [vmem:[%s764 + $0x4] sm:$0xf]
        %v767 = vld [vmem:[%s764 + $0x8] sm:$0xf]
        %v768 = vld [vmem:[%s764 + $0xc] sm:$0xf]
        %v769 = vld [vmem:[%s764 + $0x10] sm:$0xf]
        %v770 = vld [vmem:[%s764 + $0x14] sm:$0xf]
        %v771 = vld [vmem:[%s764 + $0x18] sm:$0xf]
        %v772 = vld [vmem:[%s764 + $0x1c] sm:$0xf]
        %v773 = vld [vmem:[%s764 + $0x20] sm:$0xf]
        %v774 = vld [vmem:[%s764 + $0x24] sm:$0xf]
        %v775 = vld [vmem:[%s764 + $0x28] sm:$0xf]
        %v776 = vld [vmem:[%s764 + $0x2c] sm:$0xf]
        %v777 = vld [vmem:[%s764 + $0x30] sm:$0xf]
        %v778 = vld [vmem:[%s764 + $0x34] sm:$0xf]
        %v779 = vld [vmem:[%s764 + $0x38] sm:$0xf]
        %v780 = vld [vmem:[%s764 + $0x3c] sm:$0xf]
        %v797 = vunpack.c.l.b16 %v765
        %v798 = vunpack.c.l.b16 %v766
        %v799 = vunpack.c.l.b16 %v767
        %v800 = vunpack.c.l.b16 %v768
        %v801 = vunpack.c.l.b16 %v769
        %v802 = vunpack.c.l.b16 %v770
        %v803 = vunpack.c.l.b16 %v771
        %v804 = vunpack.c.l.b16 %v772
        %v805 = vunpack.c.l.b16 %v773
        %v806 = vunpack.c.l.b16 %v774
        %v807 = vunpack.c.l.b16 %v775
        %v808 = vunpack.c.l.b16 %v776
        %v809 = vunpack.c.l.b16 %v777
        %v810 = vunpack.c.l.b16 %v778
        %v811 = vunpack.c.l.b16 %v779
        %v812 = vunpack.c.l.b16 %v780
        %v813 = vpack.c.b16 %v798, %v797
        %v814 = vpack.c.b16 %v800, %v799
        %v815 = vpack.c.b16 %v802, %v801
        %v816 = vpack.c.b16 %v804, %v803
        %v817 = vpack.c.b16 %v806, %v805
        %v818 = vpack.c.b16 %v808, %v807
        %v819 = vpack.c.b16 %v810, %v809
        %v820 = vpack.c.b16 %v812, %v811
        %v822 = vsel %vm641, %v813, 0
        %v825 = vsel %vm641, %v814, 0
        %v828 = vsel %vm641, %v815, 0
        %v831 = vsel %vm641, %v816, 0
        %v834 = vsel %vm641, %v817, 0
        %v837 = vsel %vm641, %v818, 0
        %v840 = vsel %vm641, %v819, 0
        %v843 = vsel %vm641, %v820, 0
        %845 = vmatpush.bf16.msra.mxu0 0
        %846 = vmatpush.bf16.msra.mxu0 0
        %847 = vmatpush.bf16.msra.mxu0 0
        %848 = vmatpush.bf16.msra.mxu0 0
        %849 = vmatpush.bf16.msra.mxu0 %v631
        %850 = vmatpush.bf16.msra.mxu0 %v629
        %851 = vmatpush.bf16.msra.mxu0 %v627
        %852 = vmatpush.bf16.msra.mxu0 %v625
        %853 = vmatmul.bf16.gmra.mxu0 %v822
        %v854 = vpop.f32.mrf.mxu0
        %v855 = vadd.f32 %v557, %v854
        %v856 = vpop.f32.mrf.mxu0
        %v857 = vadd.f32 %v557, %v856
        %858 = vmatmul.bf16.gmra.mxu0 %v825
        %v859 = vpop.f32.mrf.mxu0
        %v860 = vadd.f32 %v557, %v859
        %v861 = vpop.f32.mrf.mxu0
        %v862 = vadd.f32 %v557, %v861
        %863 = vmatmul.bf16.gmra.mxu0 %v828
        %v864 = vpop.f32.mrf.mxu0
        %v865 = vadd.f32 %v557, %v864
        %v866 = vpop.f32.mrf.mxu0
        %v867 = vadd.f32 %v557, %v866
        %868 = vmatmul.bf16.gmra.mxu0 %v831
        %v869 = vpop.f32.mrf.mxu0
        %v870 = vadd.f32 %v557, %v869
        %v871 = vpop.f32.mrf.mxu0
        %v872 = vadd.f32 %v557, %v871
        %873 = vmatmul.bf16.gmra.mxu0 %v834
        %v874 = vpop.f32.mrf.mxu0
        %v875 = vadd.f32 %v557, %v874
        %v876 = vpop.f32.mrf.mxu0
        %v877 = vadd.f32 %v557, %v876
        %878 = vmatmul.bf16.gmra.mxu0 %v837
        %v879 = vpop.f32.mrf.mxu0
        %v880 = vadd.f32 %v557, %v879
        %v881 = vpop.f32.mrf.mxu0
        %v882 = vadd.f32 %v557, %v881
        %883 = vmatmul.bf16.gmra.mxu0 %v840
        %v884 = vpop.f32.mrf.mxu0
        %v885 = vadd.f32 %v557, %v884
        %v886 = vpop.f32.mrf.mxu0
        %v887 = vadd.f32 %v557, %v886
        %888 = vmatmul.bf16.gmra.mxu0 %v843
        %v889 = vpop.f32.mrf.mxu0
        %v890 = vadd.f32 %v557, %v889
        %v891 = vpop.f32.mrf.mxu0
        %v892 = vadd.f32 %v557, %v891
        %893 = vdwg.mxu0
        %894 = vmatpush.bf16.msra.mxu0 0
        %895 = vmatpush.bf16.msra.mxu0 0
        %896 = vmatpush.bf16.msra.mxu0 0
        %897 = vmatpush.bf16.msra.mxu0 0
        %898 = vmatpush.bf16.msra.mxu0 %v632
        %899 = vmatpush.bf16.msra.mxu0 %v630
        %900 = vmatpush.bf16.msra.mxu0 %v628
        %901 = vmatpush.bf16.msra.mxu0 %v626
        %902 = vmatmul.bf16.gmra.mxu0 %v822
        %v903 = vpop.f32.mrf.mxu0
        %v904 = vadd.f32 %v558, %v903
        %v905 = vpop.f32.mrf.mxu0
        %v906 = vadd.f32 %v558, %v905
        %907 = vmatmul.bf16.gmra.mxu0 %v825
        %v908 = vpop.f32.mrf.mxu0
        %v909 = vadd.f32 %v558, %v908
        %v910 = vpop.f32.mrf.mxu0
        %v911 = vadd.f32 %v558, %v910
        %912 = vmatmul.bf16.gmra.mxu0 %v828
        %v913 = vpop.f32.mrf.mxu0
        %v914 = vadd.f32 %v558, %v913
        %v915 = vpop.f32.mrf.mxu0
        %v916 = vadd.f32 %v558, %v915
        %917 = vmatmul.bf16.gmra.mxu0 %v831
        %v918 = vpop.f32.mrf.mxu0
        %v919 = vadd.f32 %v558, %v918
        %v920 = vpop.f32.mrf.mxu0
        %v921 = vadd.f32 %v558, %v920
        %922 = vmatmul.bf16.gmra.mxu0 %v834
        %v923 = vpop.f32.mrf.mxu0
        %v924 = vadd.f32 %v558, %v923
        %v925 = vpop.f32.mrf.mxu0
        %v926 = vadd.f32 %v558, %v925
        %927 = vmatmul.bf16.gmra.mxu0 %v837
        %v928 = vpop.f32.mrf.mxu0
        %v929 = vadd.f32 %v558, %v928
        %v930 = vpop.f32.mrf.mxu0
        %v931 = vadd.f32 %v558, %v930
        %932 = vmatmul.bf16.gmra.mxu0 %v840
        %v933 = vpop.f32.mrf.mxu0
        %v934 = vadd.f32 %v558, %v933
        %v935 = vpop.f32.mrf.mxu0
        %v936 = vadd.f32 %v558, %v935
        %937 = vmatmul.bf16.gmra.mxu0 %v843
        %v938 = vpop.f32.mrf.mxu0
        %v939 = vadd.f32 %v558, %v938
        %v940 = vpop.f32.mrf.mxu0
        %v941 = vadd.f32 %v558, %v940
        %942 = vdwg.mxu0
        %v943 = vsel %vm538, %v676, %v855
        %v944 = vsel %vm539, %v725, %v904
        %v945 = vsel %vm538, %v678, %v857
        %v946 = vsel %vm539, %v727, %v906
        %v947 = vsel %vm538, %v681, %v860
        %v948 = vsel %vm539, %v730, %v909
        %v949 = vsel %vm538, %v683, %v862
        %v950 = vsel %vm539, %v732, %v911
        %v951 = vsel %vm538, %v686, %v865
        %v952 = vsel %vm539, %v735, %v914
        %v953 = vsel %vm538, %v688, %v867
        %v954 = vsel %vm539, %v737, %v916
        %v955 = vsel %vm538, %v691, %v870
        %v956 = vsel %vm539, %v740, %v919
        %v957 = vsel %vm538, %v693, %v872
        %v958 = vsel %vm539, %v742, %v921
        %v959 = vsel %vm538, %v696, %v875
        %v960 = vsel %vm539, %v745, %v924
        %v961 = vsel %vm538, %v698, %v877
        %v962 = vsel %vm539, %v747, %v926
        %v963 = vsel %vm538, %v701, %v880
        %v964 = vsel %vm539, %v750, %v929
        %v965 = vsel %vm538, %v703, %v882
        %v966 = vsel %vm539, %v752, %v931
        %v967 = vsel %vm538, %v706, %v885
        %v968 = vsel %vm539, %v755, %v934
        %v969 = vsel %vm538, %v708, %v887
        %v970 = vsel %vm539, %v757, %v936
        %v971 = vsel %vm538, %v711, %v890
        %v972 = vsel %vm539, %v760, %v939
        %v973 = vsel %vm538, %v713, %v892
        %v974 = vsel %vm539, %v762, %v941
        %975 = vst [vmem:[#allocation2] sm:$0xff] %v943
        %976 = vst [vmem:[#allocation2 + $0x8] sm:$0xff] %v944
        %977 = vst [vmem:[#allocation2 + $0x10] sm:$0xff] %v945
        %978 = vst [vmem:[#allocation2 + $0x18] sm:$0xff] %v946
        %979 = vst [vmem:[#allocation2 + $0x20] sm:$0xff] %v947
        %980 = vst [vmem:[#allocation2 + $0x28] sm:$0xff] %v948
        %981 = vst [vmem:[#allocation2 + $0x30] sm:$0xff] %v949
        %982 = vst [vmem:[#allocation2 + $0x38] sm:$0xff] %v950
        %983 = vst [vmem:[#allocation2 + $0x40] sm:$0xff] %v951
        %984 = vst [vmem:[#allocation2 + $0x48] sm:$0xff] %v952
        %985 = vst [vmem:[#allocation2 + $0x50] sm:$0xff] %v953
        %986 = vst [vmem:[#allocation2 + $0x58] sm:$0xff] %v954
        %987 = vst [vmem:[#allocation2 + $0x60] sm:$0xff] %v955
        %988 = vst [vmem:[#allocation2 + $0x68] sm:$0xff] %v956
        %989 = vst [vmem:[#allocation2 + $0x70] sm:$0xff] %v957
        %990 = vst [vmem:[#allocation2 + $0x78] sm:$0xff] %v958
        %991 = vst [vmem:[#allocation2 + $0x80] sm:$0xff] %v959
        %992 = vst [vmem:[#allocation2 + $0x88] sm:$0xff] %v960
        %993 = vst [vmem:[#allocation2 + $0x90] sm:$0xff] %v961
        %994 = vst [vmem:[#allocation2 + $0x98] sm:$0xff] %v962
        %995 = vst [vmem:[#allocation2 + $0xa0] sm:$0xff] %v963
        %996 = vst [vmem:[#allocation2 + $0xa8] sm:$0xff] %v964
        %997 = vst [vmem:[#allocation2 + $0xb0] sm:$0xff] %v965
        %998 = vst [vmem:[#allocation2 + $0xb8] sm:$0xff] %v966
        %999 = vst [vmem:[#allocation2 + $0xc0] sm:$0xff] %v967
        %1000 = vst [vmem:[#allocation2 + $0xc8] sm:$0xff] %v968
        %1001 = vst [vmem:[#allocation2 + $0xd0] sm:$0xff] %v969
        %1002 = vst [vmem:[#allocation2 + $0xd8] sm:$0xff] %v970
        %1003 = vst [vmem:[#allocation2 + $0xe0] sm:$0xff] %v971
        %1004 = vst [vmem:[#allocation2 + $0xe8] sm:$0xff] %v972
        %1005 = vst [vmem:[#allocation2 + $0xf0] sm:$0xff] %v973
        %1006 = vst [vmem:[#allocation2 + $0xf8] sm:$0xff] %v974
        %v1007 = vsel %vm538, %v855, %v676
        %v1008 = vsel %vm539, %v904, %v725
        %v1009 = vsel %vm538, %v857, %v678
        %v1010 = vsel %vm539, %v906, %v727
        %v1011 = vsel %vm538, %v860, %v681
        %v1012 = vsel %vm539, %v909, %v730
        %v1013 = vsel %vm538, %v862, %v683
        %v1014 = vsel %vm539, %v911, %v732
        %v1015 = vsel %vm538, %v865, %v686
        %v1016 = vsel %vm539, %v914, %v735
        %v1017 = vsel %vm538, %v867, %v688
        %v1018 = vsel %vm539, %v916, %v737
        %v1019 = vsel %vm538, %v870, %v691
        %v1020 = vsel %vm539, %v919, %v740
        %v1021 = vsel %vm538, %v872, %v693
        %v1022 = vsel %vm539, %v921, %v742
        %v1023 = vsel %vm538, %v875, %v696
        %v1024 = vsel %vm539, %v924, %v745
        %v1025 = vsel %vm538, %v877, %v698
        %v1026 = vsel %vm539, %v926, %v747
        %v1027 = vsel %vm538, %v880, %v701
        %v1028 = vsel %vm539, %v929, %v750
        %v1029 = vsel %vm538, %v882, %v703
        %v1030 = vsel %vm539, %v931, %v752
        %v1031 = vsel %vm538, %v885, %v706
        %v1032 = vsel %vm539, %v934, %v755
        %v1033 = vsel %vm538, %v887, %v708
        %v1034 = vsel %vm539, %v936, %v757
        %v1035 = vsel %vm538, %v890, %v711
        %v1036 = vsel %vm539, %v939, %v760
        %v1037 = vsel %vm538, %v892, %v713
        %v1038 = vsel %vm539, %v941, %v762
        %1039 = vst [vmem:[#allocation2 + $0x300] sm:$0xff] %v1007
        %1040 = vst [vmem:[#allocation2 + $0x308] sm:$0xff] %v1008
        %1041 = vst [vmem:[#allocation2 + $0x310] sm:$0xff] %v1009
        %1042 = vst [vmem:[#allocation2 + $0x318] sm:$0xff] %v1010
        %1043 = vst [vmem:[#allocation2 + $0x320] sm:$0xff] %v1011
        %1044 = vst [vmem:[#allocation2 + $0x328] sm:$0xff] %v1012
        %1045 = vst [vmem:[#allocation2 + $0x330] sm:$0xff] %v1013
        %1046 = vst [vmem:[#allocation2 + $0x338] sm:$0xff] %v1014
        %1047 = vst [vmem:[#allocation2 + $0x340] sm:$0xff] %v1015
        %1048 = vst [vmem:[#allocation2 + $0x348] sm:$0xff] %v1016
        %1049 = vst [vmem:[#allocation2 + $0x350] sm:$0xff] %v1017
        %1050 = vst [vmem:[#allocation2 + $0x358] sm:$0xff] %v1018
        %1051 = vst [vmem:[#allocation2 + $0x360] sm:$0xff] %v1019
        %1052 = vst [vmem:[#allocation2 + $0x368] sm:$0xff] %v1020
        %1053 = vst [vmem:[#allocation2 + $0x370] sm:$0xff] %v1021
        %1054 = vst [vmem:[#allocation2 + $0x378] sm:$0xff] %v1022
        %1055 = vst [vmem:[#allocation2 + $0x380] sm:$0xff] %v1023
        %1056 = vst [vmem:[#allocation2 + $0x388] sm:$0xff] %v1024
        %1057 = vst [vmem:[#allocation2 + $0x390] sm:$0xff] %v1025
        %1058 = vst [vmem:[#allocation2 + $0x398] sm:$0xff] %v1026
        %1059 = vst [vmem:[#allocation2 + $0x3a0] sm:$0xff] %v1027
        %1060 = vst [vmem:[#allocation2 + $0x3a8] sm:$0xff] %v1028
        %1061 = vst [vmem:[#allocation2 + $0x3b0] sm:$0xff] %v1029
        %1062 = vst [vmem:[#allocation2 + $0x3b8] sm:$0xff] %v1030
        %1063 = vst [vmem:[#allocation2 + $0x3c0] sm:$0xff] %v1031
        %1064 = vst [vmem:[#allocation2 + $0x3c8] sm:$0xff] %v1032
        %1065 = vst [vmem:[#allocation2 + $0x3d0] sm:$0xff] %v1033
        %1066 = vst [vmem:[#allocation2 + $0x3d8] sm:$0xff] %v1034
        %1067 = vst [vmem:[#allocation2 + $0x3e0] sm:$0xff] %v1035
        %1068 = vst [vmem:[#allocation2 + $0x3e8] sm:$0xff] %v1036
        %1069 = vst [vmem:[#allocation2 + $0x3f0] sm:$0xff] %v1037
        %1070 = vst [vmem:[#allocation2 + $0x3f8] sm:$0xff] %v1038
        %s1071 = scalar_lea.vmem %s469, 64 [#allocation3]
        %v1072 = vld [vmem:[%s1071] sm:$0xf]
        %v1073 = vld [vmem:[%s1071 + $0x4] sm:$0xf]
        %v1074 = vld [vmem:[%s1071 + $0x8] sm:$0xf]
        %v1075 = vld [vmem:[%s1071 + $0xc] sm:$0xf]
        %v1076 = vld [vmem:[%s1071 + $0x10] sm:$0xf]
        %v1077 = vld [vmem:[%s1071 + $0x14] sm:$0xf]
        %v1078 = vld [vmem:[%s1071 + $0x18] sm:$0xf]
        %v1079 = vld [vmem:[%s1071 + $0x1c] sm:$0xf]
        %v1080 = vld [vmem:[%s1071 + $0x20] sm:$0xf]
        %v1081 = vld [vmem:[%s1071 + $0x24] sm:$0xf]
        %v1082 = vld [vmem:[%s1071 + $0x28] sm:$0xf]
        %v1083 = vld [vmem:[%s1071 + $0x2c] sm:$0xf]
        %v1084 = vld [vmem:[%s1071 + $0x30] sm:$0xf]
        %v1085 = vld [vmem:[%s1071 + $0x34] sm:$0xf]
        %v1086 = vld [vmem:[%s1071 + $0x38] sm:$0xf]
        %v1087 = vld [vmem:[%s1071 + $0x3c] sm:$0xf]
        %v1104 = vunpack.c.l.b16 %v1072
        %v1105 = vunpack.c.l.b16 %v1073
        %v1106 = vunpack.c.l.b16 %v1074
        %v1107 = vunpack.c.l.b16 %v1075
        %v1108 = vunpack.c.l.b16 %v1076
        %v1109 = vunpack.c.l.b16 %v1077
        %v1110 = vunpack.c.l.b16 %v1078
        %v1111 = vunpack.c.l.b16 %v1079
        %v1112 = vunpack.c.l.b16 %v1080
        %v1113 = vunpack.c.l.b16 %v1081
        %v1114 = vunpack.c.l.b16 %v1082
        %v1115 = vunpack.c.l.b16 %v1083
        %v1116 = vunpack.c.l.b16 %v1084
        %v1117 = vunpack.c.l.b16 %v1085
        %v1118 = vunpack.c.l.b16 %v1086
        %v1119 = vunpack.c.l.b16 %v1087
        %v1120 = vpack.c.b16 %v1105, %v1104
        %v1121 = vpack.c.b16 %v1107, %v1106
        %v1122 = vpack.c.b16 %v1109, %v1108
        %v1123 = vpack.c.b16 %v1111, %v1110
        %v1124 = vpack.c.b16 %v1113, %v1112
        %v1125 = vpack.c.b16 %v1115, %v1114
        %v1126 = vpack.c.b16 %v1117, %v1116
        %v1127 = vpack.c.b16 %v1119, %v1118
        %v1129 = vsel %vm641, %v1120, 0
        %v1132 = vsel %vm641, %v1121, 0
        %v1135 = vsel %vm641, %v1122, 0
        %v1138 = vsel %vm641, %v1123, 0
        %v1141 = vsel %vm641, %v1124, 0
        %v1144 = vsel %vm641, %v1125, 0
        %v1147 = vsel %vm641, %v1126, 0
        %v1150 = vsel %vm641, %v1127, 0
        %1152 = vmatpush.bf16.msra.mxu0 0
        %1153 = vmatpush.bf16.msra.mxu0 0
        %1154 = vmatpush.bf16.msra.mxu0 0
        %1155 = vmatpush.bf16.msra.mxu0 0
        %1156 = vmatpush.bf16.msra.mxu0 %v631
        %1157 = vmatpush.bf16.msra.mxu0 %v629
        %1158 = vmatpush.bf16.msra.mxu0 %v627
        %1159 = vmatpush.bf16.msra.mxu0 %v625
        %1160 = vmatmul.bf16.gmra.mxu0 %v1129
        %v1161 = vpop.f32.mrf.mxu0
        %v1162 = vadd.f32 %v557, %v1161
        %v1163 = vpop.f32.mrf.mxu0
        %v1164 = vadd.f32 %v557, %v1163
        %1165 = vmatmul.bf16.gmra.mxu0 %v1132
        %v1166 = vpop.f32.mrf.mxu0
        %v1167 = vadd.f32 %v557, %v1166
        %v1168 = vpop.f32.mrf.mxu0
        %v1169 = vadd.f32 %v557, %v1168
        %1170 = vmatmul.bf16.gmra.mxu0 %v1135
        %v1171 = vpop.f32.mrf.mxu0
        %v1172 = vadd.f32 %v557, %v1171
        %v1173 = vpop.f32.mrf.mxu0
        %v1174 = vadd.f32 %v557, %v1173
        %1175 = vmatmul.bf16.gmra.mxu0 %v1138
        %v1176 = vpop.f32.mrf.mxu0
        %v1177 = vadd.f32 %v557, %v1176
        %v1178 = vpop.f32.mrf.mxu0
        %v1179 = vadd.f32 %v557, %v1178
        %1180 = vmatmul.bf16.gmra.mxu0 %v1141
        %v1181 = vpop.f32.mrf.mxu0
        %v1182 = vadd.f32 %v557, %v1181
        %v1183 = vpop.f32.mrf.mxu0
        %v1184 = vadd.f32 %v557, %v1183
        %1185 = vmatmul.bf16.gmra.mxu0 %v1144
        %v1186 = vpop.f32.mrf.mxu0
        %v1187 = vadd.f32 %v557, %v1186
        %v1188 = vpop.f32.mrf.mxu0
        %v1189 = vadd.f32 %v557, %v1188
        %1190 = vmatmul.bf16.gmra.mxu0 %v1147
        %v1191 = vpop.f32.mrf.mxu0
        %v1192 = vadd.f32 %v557, %v1191
        %v1193 = vpop.f32.mrf.mxu0
        %v1194 = vadd.f32 %v557, %v1193
        %1195 = vmatmul.bf16.gmra.mxu0 %v1150
        %v1196 = vpop.f32.mrf.mxu0
        %v1197 = vadd.f32 %v557, %v1196
        %v1198 = vpop.f32.mrf.mxu0
        %v1199 = vadd.f32 %v557, %v1198
        %1200 = vdwg.mxu0
        %1201 = vmatpush.bf16.msra.mxu0 0
        %1202 = vmatpush.bf16.msra.mxu0 0
        %1203 = vmatpush.bf16.msra.mxu0 0
        %1204 = vmatpush.bf16.msra.mxu0 0
        %1205 = vmatpush.bf16.msra.mxu0 %v632
        %1206 = vmatpush.bf16.msra.mxu0 %v630
        %1207 = vmatpush.bf16.msra.mxu0 %v628
        %1208 = vmatpush.bf16.msra.mxu0 %v626
        %1209 = vmatmul.bf16.gmra.mxu0 %v1129
        %v1210 = vpop.f32.mrf.mxu0
        %v1211 = vadd.f32 %v558, %v1210
        %v1212 = vpop.f32.mrf.mxu0
        %v1213 = vadd.f32 %v558, %v1212
        %1214 = vmatmul.bf16.gmra.mxu0 %v1132
        %v1215 = vpop.f32.mrf.mxu0
        %v1216 = vadd.f32 %v558, %v1215
        %v1217 = vpop.f32.mrf.mxu0
        %v1218 = vadd.f32 %v558, %v1217
        %1219 = vmatmul.bf16.gmra.mxu0 %v1135
        %v1220 = vpop.f32.mrf.mxu0
        %v1221 = vadd.f32 %v558, %v1220
        %v1222 = vpop.f32.mrf.mxu0
        %v1223 = vadd.f32 %v558, %v1222
        %1224 = vmatmul.bf16.gmra.mxu0 %v1138
        %v1225 = vpop.f32.mrf.mxu0
        %v1226 = vadd.f32 %v558, %v1225
        %v1227 = vpop.f32.mrf.mxu0
        %v1228 = vadd.f32 %v558, %v1227
        %1229 = vmatmul.bf16.gmra.mxu0 %v1141
        %v1230 = vpop.f32.mrf.mxu0
        %v1231 = vadd.f32 %v558, %v1230
        %v1232 = vpop.f32.mrf.mxu0
        %v1233 = vadd.f32 %v558, %v1232
        %1234 = vmatmul.bf16.gmra.mxu0 %v1144
        %v1235 = vpop.f32.mrf.mxu0
        %v1236 = vadd.f32 %v558, %v1235
        %v1237 = vpop.f32.mrf.mxu0
        %v1238 = vadd.f32 %v558, %v1237
        %1239 = vmatmul.bf16.gmra.mxu0 %v1147
        %v1240 = vpop.f32.mrf.mxu0
        %v1241 = vadd.f32 %v558, %v1240
        %v1242 = vpop.f32.mrf.mxu0
        %v1243 = vadd.f32 %v558, %v1242
        %1244 = vmatmul.bf16.gmra.mxu0 %v1150
        %v1245 = vpop.f32.mrf.mxu0
        %v1246 = vadd.f32 %v558, %v1245
        %v1247 = vpop.f32.mrf.mxu0
        %v1248 = vadd.f32 %v558, %v1247
        %1249 = vdwg.mxu0
        %s1250 = scalar_lea.vmem %s469, 128 [#allocation3]
        %v1251 = vld [vmem:[%s1250] sm:$0xf]
        %v1252 = vld [vmem:[%s1250 + $0x4] sm:$0xf]
        %v1253 = vld [vmem:[%s1250 + $0x8] sm:$0xf]
        %v1254 = vld [vmem:[%s1250 + $0xc] sm:$0xf]
        %v1255 = vld [vmem:[%s1250 + $0x10] sm:$0xf]
        %v1256 = vld [vmem:[%s1250 + $0x14] sm:$0xf]
        %v1257 = vld [vmem:[%s1250 + $0x18] sm:$0xf]
        %v1258 = vld [vmem:[%s1250 + $0x1c] sm:$0xf]
        %v1259 = vld [vmem:[%s1250 + $0x20] sm:$0xf]
        %v1260 = vld [vmem:[%s1250 + $0x24] sm:$0xf]
        %v1261 = vld [vmem:[%s1250 + $0x28] sm:$0xf]
        %v1262 = vld [vmem:[%s1250 + $0x2c] sm:$0xf]
        %v1263 = vld [vmem:[%s1250 + $0x30] sm:$0xf]
        %v1264 = vld [vmem:[%s1250 + $0x34] sm:$0xf]
        %v1265 = vld [vmem:[%s1250 + $0x38] sm:$0xf]
        %v1266 = vld [vmem:[%s1250 + $0x3c] sm:$0xf]
        %v1283 = vunpack.c.l.b16 %v1251
        %v1284 = vunpack.c.l.b16 %v1252
        %v1285 = vunpack.c.l.b16 %v1253
        %v1286 = vunpack.c.l.b16 %v1254
        %v1287 = vunpack.c.l.b16 %v1255
        %v1288 = vunpack.c.l.b16 %v1256
        %v1289 = vunpack.c.l.b16 %v1257
        %v1290 = vunpack.c.l.b16 %v1258
        %v1291 = vunpack.c.l.b16 %v1259
        %v1292 = vunpack.c.l.b16 %v1260
        %v1293 = vunpack.c.l.b16 %v1261
        %v1294 = vunpack.c.l.b16 %v1262
        %v1295 = vunpack.c.l.b16 %v1263
        %v1296 = vunpack.c.l.b16 %v1264
        %v1297 = vunpack.c.l.b16 %v1265
        %v1298 = vunpack.c.l.b16 %v1266
        %v1299 = vpack.c.b16 %v1284, %v1283
        %v1300 = vpack.c.b16 %v1286, %v1285
        %v1301 = vpack.c.b16 %v1288, %v1287
        %v1302 = vpack.c.b16 %v1290, %v1289
        %v1303 = vpack.c.b16 %v1292, %v1291
        %v1304 = vpack.c.b16 %v1294, %v1293
        %v1305 = vpack.c.b16 %v1296, %v1295
        %v1306 = vpack.c.b16 %v1298, %v1297
        %v1308 = vsel %vm641, %v1299, 0
        %v1311 = vsel %vm641, %v1300, 0
        %v1314 = vsel %vm641, %v1301, 0
        %v1317 = vsel %vm641, %v1302, 0
        %v1320 = vsel %vm641, %v1303, 0
        %v1323 = vsel %vm641, %v1304, 0
        %v1326 = vsel %vm641, %v1305, 0
        %v1329 = vsel %vm641, %v1306, 0
        %1331 = vmatpush.bf16.msra.mxu0 0
        %1332 = vmatpush.bf16.msra.mxu0 0
        %1333 = vmatpush.bf16.msra.mxu0 0
        %1334 = vmatpush.bf16.msra.mxu0 0
        %1335 = vmatpush.bf16.msra.mxu0 %v631
        %1336 = vmatpush.bf16.msra.mxu0 %v629
        %1337 = vmatpush.bf16.msra.mxu0 %v627
        %1338 = vmatpush.bf16.msra.mxu0 %v625
        %1339 = vmatmul.bf16.gmra.mxu0 %v1308
        %v1340 = vpop.f32.mrf.mxu0
        %v1341 = vadd.f32 %v557, %v1340
        %v1342 = vpop.f32.mrf.mxu0
        %v1343 = vadd.f32 %v557, %v1342
        %1344 = vmatmul.bf16.gmra.mxu0 %v1311
        %v1345 = vpop.f32.mrf.mxu0
        %v1346 = vadd.f32 %v557, %v1345
        %v1347 = vpop.f32.mrf.mxu0
        %v1348 = vadd.f32 %v557, %v1347
        %1349 = vmatmul.bf16.gmra.mxu0 %v1314
        %v1350 = vpop.f32.mrf.mxu0
        %v1351 = vadd.f32 %v557, %v1350
        %v1352 = vpop.f32.mrf.mxu0
        %v1353 = vadd.f32 %v557, %v1352
        %1354 = vmatmul.bf16.gmra.mxu0 %v1317
        %v1355 = vpop.f32.mrf.mxu0
        %v1356 = vadd.f32 %v557, %v1355
        %v1357 = vpop.f32.mrf.mxu0
        %v1358 = vadd.f32 %v557, %v1357
        %1359 = vmatmul.bf16.gmra.mxu0 %v1320
        %v1360 = vpop.f32.mrf.mxu0
        %v1361 = vadd.f32 %v557, %v1360
        %v1362 = vpop.f32.mrf.mxu0
        %v1363 = vadd.f32 %v557, %v1362
        %1364 = vmatmul.bf16.gmra.mxu0 %v1323
        %v1365 = vpop.f32.mrf.mxu0
        %v1366 = vadd.f32 %v557, %v1365
        %v1367 = vpop.f32.mrf.mxu0
        %v1368 = vadd.f32 %v557, %v1367
        %1369 = vmatmul.bf16.gmra.mxu0 %v1326
        %v1370 = vpop.f32.mrf.mxu0
        %v1371 = vadd.f32 %v557, %v1370
        %v1372 = vpop.f32.mrf.mxu0
        %v1373 = vadd.f32 %v557, %v1372
        %1374 = vmatmul.bf16.gmra.mxu0 %v1329
        %v1375 = vpop.f32.mrf.mxu0
        %v1376 = vadd.f32 %v557, %v1375
        %v1377 = vpop.f32.mrf.mxu0
        %v1378 = vadd.f32 %v557, %v1377
        %1379 = vdwg.mxu0
        %1380 = vmatpush.bf16.msra.mxu0 0
        %1381 = vmatpush.bf16.msra.mxu0 0
        %1382 = vmatpush.bf16.msra.mxu0 0
        %1383 = vmatpush.bf16.msra.mxu0 0
        %1384 = vmatpush.bf16.msra.mxu0 %v632
        %1385 = vmatpush.bf16.msra.mxu0 %v630
        %1386 = vmatpush.bf16.msra.mxu0 %v628
        %1387 = vmatpush.bf16.msra.mxu0 %v626
        %1388 = vmatmul.bf16.gmra.mxu0 %v1308
        %v1389 = vpop.f32.mrf.mxu0
        %v1390 = vadd.f32 %v558, %v1389
        %v1391 = vpop.f32.mrf.mxu0
        %v1392 = vadd.f32 %v558, %v1391
        %1393 = vmatmul.bf16.gmra.mxu0 %v1311
        %v1394 = vpop.f32.mrf.mxu0
        %v1395 = vadd.f32 %v558, %v1394
        %v1396 = vpop.f32.mrf.mxu0
        %v1397 = vadd.f32 %v558, %v1396
        %1398 = vmatmul.bf16.gmra.mxu0 %v1314
        %v1399 = vpop.f32.mrf.mxu0
        %v1400 = vadd.f32 %v558, %v1399
        %v1401 = vpop.f32.mrf.mxu0
        %v1402 = vadd.f32 %v558, %v1401
        %1403 = vmatmul.bf16.gmra.mxu0 %v1317
        %v1404 = vpop.f32.mrf.mxu0
        %v1405 = vadd.f32 %v558, %v1404
        %v1406 = vpop.f32.mrf.mxu0
        %v1407 = vadd.f32 %v558, %v1406
        %1408 = vmatmul.bf16.gmra.mxu0 %v1320
        %v1409 = vpop.f32.mrf.mxu0
        %v1410 = vadd.f32 %v558, %v1409
        %v1411 = vpop.f32.mrf.mxu0
        %v1412 = vadd.f32 %v558, %v1411
        %1413 = vmatmul.bf16.gmra.mxu0 %v1323
        %v1414 = vpop.f32.mrf.mxu0
        %v1415 = vadd.f32 %v558, %v1414
        %v1416 = vpop.f32.mrf.mxu0
        %v1417 = vadd.f32 %v558, %v1416
        %1418 = vmatmul.bf16.gmra.mxu0 %v1326
        %v1419 = vpop.f32.mrf.mxu0
        %v1420 = vadd.f32 %v558, %v1419
        %v1421 = vpop.f32.mrf.mxu0
        %v1422 = vadd.f32 %v558, %v1421
        %1423 = vmatmul.bf16.gmra.mxu0 %v1329
        %v1424 = vpop.f32.mrf.mxu0
        %v1425 = vadd.f32 %v558, %v1424
        %v1426 = vpop.f32.mrf.mxu0
        %v1427 = vadd.f32 %v558, %v1426
        %1428 = vdwg.mxu0
        %v1429 = vsel %vm538, %v1162, %v1341
        %v1430 = vsel %vm539, %v1211, %v1390
        %v1431 = vsel %vm538, %v1164, %v1343
        %v1432 = vsel %vm539, %v1213, %v1392
        %v1433 = vsel %vm538, %v1167, %v1346
        %v1434 = vsel %vm539, %v1216, %v1395
        %v1435 = vsel %vm538, %v1169, %v1348
        %v1436 = vsel %vm539, %v1218, %v1397
        %v1437 = vsel %vm538, %v1172, %v1351
        %v1438 = vsel %vm539, %v1221, %v1400
        %v1439 = vsel %vm538, %v1174, %v1353
        %v1440 = vsel %vm539, %v1223, %v1402
        %v1441 = vsel %vm538, %v1177, %v1356
        %v1442 = vsel %vm539, %v1226, %v1405
        %v1443 = vsel %vm538, %v1179, %v1358
        %v1444 = vsel %vm539, %v1228, %v1407
        %v1445 = vsel %vm538, %v1182, %v1361
        %v1446 = vsel %vm539, %v1231, %v1410
        %v1447 = vsel %vm538, %v1184, %v1363
        %v1448 = vsel %vm539, %v1233, %v1412
        %v1449 = vsel %vm538, %v1187, %v1366
        %v1450 = vsel %vm539, %v1236, %v1415
        %v1451 = vsel %vm538, %v1189, %v1368
        %v1452 = vsel %vm539, %v1238, %v1417
        %v1453 = vsel %vm538, %v1192, %v1371
        %v1454 = vsel %vm539, %v1241, %v1420
        %v1455 = vsel %vm538, %v1194, %v1373
        %v1456 = vsel %vm539, %v1243, %v1422
        %v1457 = vsel %vm538, %v1197, %v1376
        %v1458 = vsel %vm539, %v1246, %v1425
        %v1459 = vsel %vm538, %v1199, %v1378
        %v1460 = vsel %vm539, %v1248, %v1427
        %1461 = vst [vmem:[#allocation2 + $0x100] sm:$0xff] %v1429
        %1462 = vst [vmem:[#allocation2 + $0x108] sm:$0xff] %v1430
        %1463 = vst [vmem:[#allocation2 + $0x110] sm:$0xff] %v1431
        %1464 = vst [vmem:[#allocation2 + $0x118] sm:$0xff] %v1432
        %1465 = vst [vmem:[#allocation2 + $0x120] sm:$0xff] %v1433
        %1466 = vst [vmem:[#allocation2 + $0x128] sm:$0xff] %v1434
        %1467 = vst [vmem:[#allocation2 + $0x130] sm:$0xff] %v1435
        %1468 = vst [vmem:[#allocation2 + $0x138] sm:$0xff] %v1436
        %1469 = vst [vmem:[#allocation2 + $0x140] sm:$0xff] %v1437
        %1470 = vst [vmem:[#allocation2 + $0x148] sm:$0xff] %v1438
        %1471 = vst [vmem:[#allocation2 + $0x150] sm:$0xff] %v1439
        %1472 = vst [vmem:[#allocation2 + $0x158] sm:$0xff] %v1440
        %1473 = vst [vmem:[#allocation2 + $0x160] sm:$0xff] %v1441
        %1474 = vst [vmem:[#allocation2 + $0x168] sm:$0xff] %v1442
        %1475 = vst [vmem:[#allocation2 + $0x170] sm:$0xff] %v1443
        %1476 = vst [vmem:[#allocation2 + $0x178] sm:$0xff] %v1444
        %1477 = vst [vmem:[#allocation2 + $0x180] sm:$0xff] %v1445
        %1478 = vst [vmem:[#allocation2 + $0x188] sm:$0xff] %v1446
        %1479 = vst [vmem:[#allocation2 + $0x190] sm:$0xff] %v1447
        %1480 = vst [vmem:[#allocation2 + $0x198] sm:$0xff] %v1448
        %1481 = vst [vmem:[#allocation2 + $0x1a0] sm:$0xff] %v1449
        %1482 = vst [vmem:[#allocation2 + $0x1a8] sm:$0xff] %v1450
        %1483 = vst [vmem:[#allocation2 + $0x1b0] sm:$0xff] %v1451
        %1484 = vst [vmem:[#allocation2 + $0x1b8] sm:$0xff] %v1452
        %1485 = vst [vmem:[#allocation2 + $0x1c0] sm:$0xff] %v1453
        %1486 = vst [vmem:[#allocation2 + $0x1c8] sm:$0xff] %v1454
        %1487 = vst [vmem:[#allocation2 + $0x1d0] sm:$0xff] %v1455
        %1488 = vst [vmem:[#allocation2 + $0x1d8] sm:$0xff] %v1456
        %1489 = vst [vmem:[#allocation2 + $0x1e0] sm:$0xff] %v1457
        %1490 = vst [vmem:[#allocation2 + $0x1e8] sm:$0xff] %v1458
        %1491 = vst [vmem:[#allocation2 + $0x1f0] sm:$0xff] %v1459
        %1492 = vst [vmem:[#allocation2 + $0x1f8] sm:$0xff] %v1460
        %v1493 = vsel %vm538, %v1341, %v1162
        %v1494 = vsel %vm539, %v1390, %v1211
        %v1495 = vsel %vm538, %v1343, %v1164
        %v1496 = vsel %vm539, %v1392, %v1213
        %v1497 = vsel %vm538, %v1346, %v1167
        %v1498 = vsel %vm539, %v1395, %v1216
        %v1499 = vsel %vm538, %v1348, %v1169
        %v1500 = vsel %vm539, %v1397, %v1218
        %v1501 = vsel %vm538, %v1351, %v1172
        %v1502 = vsel %vm539, %v1400, %v1221
        %v1503 = vsel %vm538, %v1353, %v1174
        %v1504 = vsel %vm539, %v1402, %v1223
        %v1505 = vsel %vm538, %v1356, %v1177
        %v1506 = vsel %vm539, %v1405, %v1226
        %v1507 = vsel %vm538, %v1358, %v1179
        %v1508 = vsel %vm539, %v1407, %v1228
        %v1509 = vsel %vm538, %v1361, %v1182
        %v1510 = vsel %vm539, %v1410, %v1231
        %v1511 = vsel %vm538, %v1363, %v1184
        %v1512 = vsel %vm539, %v1412, %v1233
        %v1513 = vsel %vm538, %v1366, %v1187
        %v1514 = vsel %vm539, %v1415, %v1236
        %v1515 = vsel %vm538, %v1368, %v1189
        %v1516 = vsel %vm539, %v1417, %v1238
        %v1517 = vsel %vm538, %v1371, %v1192
        %v1518 = vsel %vm539, %v1420, %v1241
        %v1519 = vsel %vm538, %v1373, %v1194
        %v1520 = vsel %vm539, %v1422, %v1243
        %v1521 = vsel %vm538, %v1376, %v1197
        %v1522 = vsel %vm539, %v1425, %v1246
        %v1523 = vsel %vm538, %v1378, %v1199
        %v1524 = vsel %vm539, %v1427, %v1248
        %1525 = vst [vmem:[#allocation2 + $0x200] sm:$0xff] %v1493
        %1526 = vst [vmem:[#allocation2 + $0x208] sm:$0xff] %v1494
        %1527 = vst [vmem:[#allocation2 + $0x210] sm:$0xff] %v1495
        %1528 = vst [vmem:[#allocation2 + $0x218] sm:$0xff] %v1496
        %1529 = vst [vmem:[#allocation2 + $0x220] sm:$0xff] %v1497
        %1530 = vst [vmem:[#allocation2 + $0x228] sm:$0xff] %v1498
        %1531 = vst [vmem:[#allocation2 + $0x230] sm:$0xff] %v1499
        %1532 = vst [vmem:[#allocation2 + $0x238] sm:$0xff] %v1500
        %1533 = vst [vmem:[#allocation2 + $0x240] sm:$0xff] %v1501
        %1534 = vst [vmem:[#allocation2 + $0x248] sm:$0xff] %v1502
        %1535 = vst [vmem:[#allocation2 + $0x250] sm:$0xff] %v1503
        %1536 = vst [vmem:[#allocation2 + $0x258] sm:$0xff] %v1504
        %1537 = vst [vmem:[#allocation2 + $0x260] sm:$0xff] %v1505
        %1538 = vst [vmem:[#allocation2 + $0x268] sm:$0xff] %v1506
        %1539 = vst [vmem:[#allocation2 + $0x270] sm:$0xff] %v1507
        %1540 = vst [vmem:[#allocation2 + $0x278] sm:$0xff] %v1508
        %1541 = vst [vmem:[#allocation2 + $0x280] sm:$0xff] %v1509
        %1542 = vst [vmem:[#allocation2 + $0x288] sm:$0xff] %v1510
        %1543 = vst [vmem:[#allocation2 + $0x290] sm:$0xff] %v1511
        %1544 = vst [vmem:[#allocation2 + $0x298] sm:$0xff] %v1512
        %1545 = vst [vmem:[#allocation2 + $0x2a0] sm:$0xff] %v1513
        %1546 = vst [vmem:[#allocation2 + $0x2a8] sm:$0xff] %v1514
        %1547 = vst [vmem:[#allocation2 + $0x2b0] sm:$0xff] %v1515
        %1548 = vst [vmem:[#allocation2 + $0x2b8] sm:$0xff] %v1516
        %1549 = vst [vmem:[#allocation2 + $0x2c0] sm:$0xff] %v1517
        %1550 = vst [vmem:[#allocation2 + $0x2c8] sm:$0xff] %v1518
        %1551 = vst [vmem:[#allocation2 + $0x2d0] sm:$0xff] %v1519
        %1552 = vst [vmem:[#allocation2 + $0x2d8] sm:$0xff] %v1520
        %1553 = vst [vmem:[#allocation2 + $0x2e0] sm:$0xff] %v1521
        %1554 = vst [vmem:[#allocation2 + $0x2e8] sm:$0xff] %v1522
        %1555 = vst [vmem:[#allocation2 + $0x2f0] sm:$0xff] %v1523
        %1556 = vst [vmem:[#allocation2 + $0x2f8] sm:$0xff] %v1524
        %v1557 = vld [vmem:[#allocation2] sm:$0xff]
        %v1558 = vld [vmem:[#allocation2 + $0x8] sm:$0xff]
        %v1559 = vld [vmem:[#allocation2 + $0x10] sm:$0xff]
        %v1560 = vld [vmem:[#allocation2 + $0x18] sm:$0xff]
        %v1561 = vld [vmem:[#allocation2 + $0x20] sm:$0xff]
        %v1562 = vld [vmem:[#allocation2 + $0x28] sm:$0xff]
        %v1563 = vld [vmem:[#allocation2 + $0x30] sm:$0xff]
        %v1564 = vld [vmem:[#allocation2 + $0x38] sm:$0xff]
        %v1565 = vld [vmem:[#allocation2 + $0x40] sm:$0xff]
        %v1566 = vld [vmem:[#allocation2 + $0x48] sm:$0xff]
        %v1567 = vld [vmem:[#allocation2 + $0x50] sm:$0xff]
        %v1568 = vld [vmem:[#allocation2 + $0x58] sm:$0xff]
        %v1569 = vld [vmem:[#allocation2 + $0x60] sm:$0xff]
        %v1570 = vld [vmem:[#allocation2 + $0x68] sm:$0xff]
        %v1571 = vld [vmem:[#allocation2 + $0x70] sm:$0xff]
        %v1572 = vld [vmem:[#allocation2 + $0x78] sm:$0xff]
        %v1573 = vld [vmem:[#allocation2 + $0x80] sm:$0xff]
        %v1574 = vld [vmem:[#allocation2 + $0x88] sm:$0xff]
        %v1575 = vld [vmem:[#allocation2 + $0x90] sm:$0xff]
        %v1576 = vld [vmem:[#allocation2 + $0x98] sm:$0xff]
        %v1577 = vld [vmem:[#allocation2 + $0xa0] sm:$0xff]
        %v1578 = vld [vmem:[#allocation2 + $0xa8] sm:$0xff]
        %v1579 = vld [vmem:[#allocation2 + $0xb0] sm:$0xff]
        %v1580 = vld [vmem:[#allocation2 + $0xb8] sm:$0xff]
        %v1581 = vld [vmem:[#allocation2 + $0xc0] sm:$0xff]
        %v1582 = vld [vmem:[#allocation2 + $0xc8] sm:$0xff]
        %v1583 = vld [vmem:[#allocation2 + $0xd0] sm:$0xff]
        %v1584 = vld [vmem:[#allocation2 + $0xd8] sm:$0xff]
        %v1585 = vld [vmem:[#allocation2 + $0xe0] sm:$0xff]
        %v1586 = vld [vmem:[#allocation2 + $0xe8] sm:$0xff]
        %v1587 = vld [vmem:[#allocation2 + $0xf0] sm:$0xff]
        %v1588 = vld [vmem:[#allocation2 + $0xf8] sm:$0xff]
        %v1597 = vunpack.c.l.b16 %v502
        %v1598 = vunpack.c.h.b16 %v502
        %v1599 = vunpack.c.l.b16 %v503
        %v1600 = vunpack.c.h.b16 %v503
        %v1601 = vunpack.c.l.b16 %v504
        %v1602 = vunpack.c.h.b16 %v504
        %v1603 = vunpack.c.l.b16 %v505
        %v1604 = vunpack.c.h.b16 %v505
        %v1605 = vunpack.c.l.b16 %v506
        %v1606 = vunpack.c.h.b16 %v506
        %v1607 = vunpack.c.l.b16 %v507
        %v1608 = vunpack.c.h.b16 %v507
        %v1609 = vunpack.c.l.b16 %v508
        %v1610 = vunpack.c.h.b16 %v508
        %v1611 = vunpack.c.l.b16 %v509
        %v1612 = vunpack.c.h.b16 %v509
        %v1613 = vpack.c.b16 %v1599, %v1597
        %v1614 = vpack.c.b16 %v1600, %v1598
        %v1615 = vpack.c.b16 %v1603, %v1601
        %v1616 = vpack.c.b16 %v1604, %v1602
        %v1617 = vpack.c.b16 %v1607, %v1605
        %v1618 = vpack.c.b16 %v1608, %v1606
        %v1619 = vpack.c.b16 %v1611, %v1609
        %v1620 = vpack.c.b16 %v1612, %v1610
        %v1630 = vsel %vm641, 0, 0
        %1632 = vmatpush.bf16.msra.mxu0 0
        %1633 = vmatpush.bf16.msra.mxu0 0
        %1634 = vmatpush.bf16.msra.mxu0 0
        %1635 = vmatpush.bf16.msra.mxu0 0
        %1636 = vmatpush.bf16.msra.mxu0 %v1619
        %1637 = vmatpush.bf16.msra.mxu0 %v1617
        %1638 = vmatpush.bf16.msra.mxu0 %v1615
        %1639 = vmatpush.bf16.msra.mxu0 %v1613
        %1640 = vmatmul.bf16.gmra.mxu0 %v1630
        %v1641 = vpop.f32.mrf.mxu0
        %v1642 = vadd.f32 0.0, %v1641
        %v1643 = vpop.f32.mrf.mxu0
        %v1644 = vadd.f32 0.0, %v1643
        %1645 = vmatmul.bf16.gmra.mxu0 %v1630
        %v1646 = vpop.f32.mrf.mxu0
        %v1647 = vadd.f32 0.0, %v1646
        %v1648 = vpop.f32.mrf.mxu0
        %v1649 = vadd.f32 0.0, %v1648
        %1650 = vmatmul.bf16.gmra.mxu0 %v1630
        %v1651 = vpop.f32.mrf.mxu0
        %v1652 = vadd.f32 0.0, %v1651
        %v1653 = vpop.f32.mrf.mxu0
        %v1654 = vadd.f32 0.0, %v1653
        %1655 = vmatmul.bf16.gmra.mxu0 %v1630
        %v1656 = vpop.f32.mrf.mxu0
        %v1657 = vadd.f32 0.0, %v1656
        %v1658 = vpop.f32.mrf.mxu0
        %v1659 = vadd.f32 0.0, %v1658
        %1660 = vmatmul.bf16.gmra.mxu0 %v1630
        %v1661 = vpop.f32.mrf.mxu0
        %v1662 = vadd.f32 0.0, %v1661
        %v1663 = vpop.f32.mrf.mxu0
        %v1664 = vadd.f32 0.0, %v1663
        %1665 = vmatmul.bf16.gmra.mxu0 %v1630
        %v1666 = vpop.f32.mrf.mxu0
        %v1667 = vadd.f32 0.0, %v1666
        %v1668 = vpop.f32.mrf.mxu0
        %v1669 = vadd.f32 0.0, %v1668
        %1670 = vmatmul.bf16.gmra.mxu0 %v1630
        %v1671 = vpop.f32.mrf.mxu0
        %v1672 = vadd.f32 0.0, %v1671
        %v1673 = vpop.f32.mrf.mxu0
        %v1674 = vadd.f32 0.0, %v1673
        %1675 = vmatmul.bf16.gmra.mxu0 %v1630
        %v1676 = vpop.f32.mrf.mxu0
        %v1677 = vadd.f32 0.0, %v1676
        %v1678 = vpop.f32.mrf.mxu0
        %v1679 = vadd.f32 0.0, %v1678
        %1680 = vdwg.mxu0
        %1681 = vmatpush.bf16.msra.mxu0 0
        %1682 = vmatpush.bf16.msra.mxu0 0
        %1683 = vmatpush.bf16.msra.mxu0 0
        %1684 = vmatpush.bf16.msra.mxu0 0
        %1685 = vmatpush.bf16.msra.mxu0 %v1620
        %1686 = vmatpush.bf16.msra.mxu0 %v1618
        %1687 = vmatpush.bf16.msra.mxu0 %v1616
        %1688 = vmatpush.bf16.msra.mxu0 %v1614
        %1689 = vmatmul.bf16.gmra.mxu0 %v1630
        %v1690 = vpop.f32.mrf.mxu0
        %v1691 = vadd.f32 0.0, %v1690
        %v1692 = vpop.f32.mrf.mxu0
        %v1693 = vadd.f32 0.0, %v1692
        %1694 = vmatmul.bf16.gmra.mxu0 %v1630
        %v1695 = vpop.f32.mrf.mxu0
        %v1696 = vadd.f32 0.0, %v1695
        %v1697 = vpop.f32.mrf.mxu0
        %v1698 = vadd.f32 0.0, %v1697
        %1699 = vmatmul.bf16.gmra.mxu0 %v1630
        %v1700 = vpop.f32.mrf.mxu0
        %v1701 = vadd.f32 0.0, %v1700
        %v1702 = vpop.f32.mrf.mxu0
        %v1703 = vadd.f32 0.0, %v1702
        %1704 = vmatmul.bf16.gmra.mxu0 %v1630
        %v1705 = vpop.f32.mrf.mxu0
        %v1706 = vadd.f32 0.0, %v1705
        %v1707 = vpop.f32.mrf.mxu0
        %v1708 = vadd.f32 0.0, %v1707
        %1709 = vmatmul.bf16.gmra.mxu0 %v1630
        %v1710 = vpop.f32.mrf.mxu0
        %v1711 = vadd.f32 0.0, %v1710
        %v1712 = vpop.f32.mrf.mxu0
        %v1713 = vadd.f32 0.0, %v1712
        %1714 = vmatmul.bf16.gmra.mxu0 %v1630
        %v1715 = vpop.f32.mrf.mxu0
        %v1716 = vadd.f32 0.0, %v1715
        %v1717 = vpop.f32.mrf.mxu0
        %v1718 = vadd.f32 0.0, %v1717
        %1719 = vmatmul.bf16.gmra.mxu0 %v1630
        %v1720 = vpop.f32.mrf.mxu0
        %v1721 = vadd.f32 0.0, %v1720
        %v1722 = vpop.f32.mrf.mxu0
        %v1723 = vadd.f32 0.0, %v1722
        %1724 = vmatmul.bf16.gmra.mxu0 %v1630
        %v1725 = vpop.f32.mrf.mxu0
        %v1726 = vadd.f32 0.0, %v1725
        %v1727 = vpop.f32.mrf.mxu0
        %v1728 = vadd.f32 0.0, %v1727
        %1729 = vdwg.mxu0
        %v1730 = vadd.f32 %v1557, %v1642
        %v1731 = vadd.f32 %v1558, %v1691
        %v1732 = vadd.f32 %v1559, %v1644
        %v1733 = vadd.f32 %v1560, %v1693
        %v1734 = vadd.f32 %v1561, %v1647
        %v1735 = vadd.f32 %v1562, %v1696
        %v1736 = vadd.f32 %v1563, %v1649
        %v1737 = vadd.f32 %v1564, %v1698
        %v1738 = vadd.f32 %v1565, %v1652
        %v1739 = vadd.f32 %v1566, %v1701
        %v1740 = vadd.f32 %v1567, %v1654
        %v1741 = vadd.f32 %v1568, %v1703
        %v1742 = vadd.f32 %v1569, %v1657
        %v1743 = vadd.f32 %v1570, %v1706
        %v1744 = vadd.f32 %v1571, %v1659
        %v1745 = vadd.f32 %v1572, %v1708
        %v1746 = vadd.f32 %v1573, %v1662
        %v1747 = vadd.f32 %v1574, %v1711
        %v1748 = vadd.f32 %v1575, %v1664
        %v1749 = vadd.f32 %v1576, %v1713
        %v1750 = vadd.f32 %v1577, %v1667
        %v1751 = vadd.f32 %v1578, %v1716
        %v1752 = vadd.f32 %v1579, %v1669
        %v1753 = vadd.f32 %v1580, %v1718
        %v1754 = vadd.f32 %v1581, %v1672
        %v1755 = vadd.f32 %v1582, %v1721
        %v1756 = vadd.f32 %v1583, %v1674
        %v1757 = vadd.f32 %v1584, %v1723
        %v1758 = vadd.f32 %v1585, %v1677
        %v1759 = vadd.f32 %v1586, %v1726
        %v1760 = vadd.f32 %v1587, %v1679
        %v1761 = vadd.f32 %v1588, %v1728
        %v1762 = vxor.u32 %v1730, 2147483648
        %v1763 = vxor.u32 %v1731, 2147483648
        %v1764 = vxor.u32 %v1732, 2147483648
        %v1765 = vxor.u32 %v1733, 2147483648
        %v1766 = vxor.u32 %v1734, 2147483648
        %v1767 = vxor.u32 %v1735, 2147483648
        %v1768 = vxor.u32 %v1736, 2147483648
        %v1769 = vxor.u32 %v1737, 2147483648
        %v1770 = vxor.u32 %v1738, 2147483648
        %v1771 = vxor.u32 %v1739, 2147483648
        %v1772 = vxor.u32 %v1740, 2147483648
        %v1773 = vxor.u32 %v1741, 2147483648
        %v1774 = vxor.u32 %v1742, 2147483648
        %v1775 = vxor.u32 %v1743, 2147483648
        %v1776 = vxor.u32 %v1744, 2147483648
        %v1777 = vxor.u32 %v1745, 2147483648
        %v1778 = vxor.u32 %v1746, 2147483648
        %v1779 = vxor.u32 %v1747, 2147483648
        %v1780 = vxor.u32 %v1748, 2147483648
        %v1781 = vxor.u32 %v1749, 2147483648
        %v1782 = vxor.u32 %v1750, 2147483648
        %v1783 = vxor.u32 %v1751, 2147483648
        %v1784 = vxor.u32 %v1752, 2147483648
        %v1785 = vxor.u32 %v1753, 2147483648
        %v1786 = vxor.u32 %v1754, 2147483648
        %v1787 = vxor.u32 %v1755, 2147483648
        %v1788 = vxor.u32 %v1756, 2147483648
        %v1789 = vxor.u32 %v1757, 2147483648
        %v1790 = vxor.u32 %v1758, 2147483648
        %v1791 = vxor.u32 %v1759, 2147483648
        %v1792 = vxor.u32 %v1760, 2147483648
        %v1793 = vxor.u32 %v1761, 2147483648
        %v1794 = vmul.f32 %v1762, 1.442695
        %v1795 = vpow.pop %v1794
        %v1796 = vmul.f32 %v1763, 1.442695
        %v1797 = vpow.pop %v1796
        %v1798 = vmul.f32 %v1764, 1.442695
        %v1799 = vpow.pop %v1798
        %v1800 = vmul.f32 %v1765, 1.442695
        %v1801 = vpow.pop %v1800
        %v1802 = vmul.f32 %v1766, 1.442695
        %v1803 = vpow.pop %v1802
        %v1804 = vmul.f32 %v1767, 1.442695
        %v1805 = vpow.pop %v1804
        %v1806 = vmul.f32 %v1768, 1.442695
        %v1807 = vpow.pop %v1806
        %v1808 = vmul.f32 %v1769, 1.442695
        %v1809 = vpow.pop %v1808
        %v1810 = vmul.f32 %v1770, 1.442695
        %v1811 = vpow.pop %v1810
        %v1812 = vmul.f32 %v1771, 1.442695
        %v1813 = vpow.pop %v1812
        %v1814 = vmul.f32 %v1772, 1.442695
        %v1815 = vpow.pop %v1814
        %v1816 = vmul.f32 %v1773, 1.442695
        %v1817 = vpow.pop %v1816
        %v1818 = vmul.f32 %v1774, 1.442695
        %v1819 = vpow.pop %v1818
        %v1820 = vmul.f32 %v1775, 1.442695
        %v1821 = vpow.pop %v1820
        %v1822 = vmul.f32 %v1776, 1.442695
        %v1823 = vpow.pop %v1822
        %v1824 = vmul.f32 %v1777, 1.442695
        %v1825 = vpow.pop %v1824
        %v1826 = vmul.f32 %v1778, 1.442695
        %v1827 = vpow.pop %v1826
        %v1828 = vmul.f32 %v1779, 1.442695
        %v1829 = vpow.pop %v1828
        %v1830 = vmul.f32 %v1780, 1.442695
        %v1831 = vpow.pop %v1830
        %v1832 = vmul.f32 %v1781, 1.442695
        %v1833 = vpow.pop %v1832
        %v1834 = vmul.f32 %v1782, 1.442695
        %v1835 = vpow.pop %v1834
        %v1836 = vmul.f32 %v1783, 1.442695
        %v1837 = vpow.pop %v1836
        %v1838 = vmul.f32 %v1784, 1.442695
        %v1839 = vpow.pop %v1838
        %v1840 = vmul.f32 %v1785, 1.442695
        %v1841 = vpow.pop %v1840
        %v1842 = vmul.f32 %v1786, 1.442695
        %v1843 = vpow.pop %v1842
        %v1844 = vmul.f32 %v1787, 1.442695
        %v1845 = vpow.pop %v1844
        %v1846 = vmul.f32 %v1788, 1.442695
        %v1847 = vpow.pop %v1846
        %v1848 = vmul.f32 %v1789, 1.442695
        %v1849 = vpow.pop %v1848
        %v1850 = vmul.f32 %v1790, 1.442695
        %v1851 = vpow.pop %v1850
        %v1852 = vmul.f32 %v1791, 1.442695
        %v1853 = vpow.pop %v1852
        %v1854 = vmul.f32 %v1792, 1.442695
        %v1855 = vpow.pop %v1854
        %v1856 = vmul.f32 %v1793, 1.442695
        %v1857 = vpow.pop %v1856
        %v1858 = vadd.f32 %v1795, 1.0
        %v1859 = vadd.f32 %v1797, 1.0
        %v1860 = vadd.f32 %v1799, 1.0
        %v1861 = vadd.f32 %v1801, 1.0
        %v1862 = vadd.f32 %v1803, 1.0
        %v1863 = vadd.f32 %v1805, 1.0
        %v1864 = vadd.f32 %v1807, 1.0
        %v1865 = vadd.f32 %v1809, 1.0
        %v1866 = vadd.f32 %v1811, 1.0
        %v1867 = vadd.f32 %v1813, 1.0
        %v1868 = vadd.f32 %v1815, 1.0
        %v1869 = vadd.f32 %v1817, 1.0
        %v1870 = vadd.f32 %v1819, 1.0
        %v1871 = vadd.f32 %v1821, 1.0
        %v1872 = vadd.f32 %v1823, 1.0
        %v1873 = vadd.f32 %v1825, 1.0
        %v1874 = vadd.f32 %v1827, 1.0
        %v1875 = vadd.f32 %v1829, 1.0
        %v1876 = vadd.f32 %v1831, 1.0
        %v1877 = vadd.f32 %v1833, 1.0
        %v1878 = vadd.f32 %v1835, 1.0
        %v1879 = vadd.f32 %v1837, 1.0
        %v1880 = vadd.f32 %v1839, 1.0
        %v1881 = vadd.f32 %v1841, 1.0
        %v1882 = vadd.f32 %v1843, 1.0
        %v1883 = vadd.f32 %v1845, 1.0
        %v1884 = vadd.f32 %v1847, 1.0
        %v1885 = vadd.f32 %v1849, 1.0
        %v1886 = vadd.f32 %v1851, 1.0
        %v1887 = vadd.f32 %v1853, 1.0
        %v1888 = vadd.f32 %v1855, 1.0
        %v1889 = vadd.f32 %v1857, 1.0
        %v1890 = vrcp.pop %v1858
        %v1891 = vmul.f32 %v1858, %v1890
        %v1892 = vsub.f32 1.0, %v1891
        %v1893 = vmul.f32 %v1890, %v1892
        %v1894 = vadd.f32 %v1890, %v1893
        %vm1895 = vweird.f32 %v1858
        %vm1896 = vweird.f32 %v1890
        %vm1897 = vmor %vm1895, %vm1896
        %v1898 = vsel %vm1897, %v1890, %v1894
        %v1899 = vand.u32 2147483647, %v1858
        %vm1900 = vcmp.eq.f32.partialorder %v1899, 8.507059e+37
        %v1901 = vand.u32 %v1858, 2147483648
        %v1902 = vor.u32 1.1754944e-38, %v1901
        %v1903 = vsel %vm1900, %v1902, %v1898
        %v1904 = vmul.f32 1.0, %v1903
        %v1905 = vrcp.pop %v1859
        %v1906 = vmul.f32 %v1859, %v1905
        %v1907 = vsub.f32 1.0, %v1906
        %v1908 = vmul.f32 %v1905, %v1907
        %v1909 = vadd.f32 %v1905, %v1908
        %vm1910 = vweird.f32 %v1859
        %vm1911 = vweird.f32 %v1905
        %vm1912 = vmor %vm1910, %vm1911
        %v1913 = vsel %vm1912, %v1905, %v1909
        %v1914 = vand.u32 2147483647, %v1859
        %vm1915 = vcmp.eq.f32.partialorder %v1914, 8.507059e+37
        %v1916 = vand.u32 %v1859, 2147483648
        %v1917 = vor.u32 1.1754944e-38, %v1916
        %v1918 = vsel %vm1915, %v1917, %v1913
        %v1919 = vmul.f32 1.0, %v1918
        %v1920 = vrcp.pop %v1860
        %v1921 = vmul.f32 %v1860, %v1920
        %v1922 = vsub.f32 1.0, %v1921
        %v1923 = vmul.f32 %v1920, %v1922
        %v1924 = vadd.f32 %v1920, %v1923
        %vm1925 = vweird.f32 %v1860
        %vm1926 = vweird.f32 %v1920
        %vm1927 = vmor %vm1925, %vm1926
        %v1928 = vsel %vm1927, %v1920, %v1924
        %v1929 = vand.u32 2147483647, %v1860
        %vm1930 = vcmp.eq.f32.partialorder %v1929, 8.507059e+37
        %v1931 = vand.u32 %v1860, 2147483648
        %v1932 = vor.u32 1.1754944e-38, %v1931
        %v1933 = vsel %vm1930, %v1932, %v1928
        %v1934 = vmul.f32 1.0, %v1933
        %v1935 = vrcp.pop %v1861
        %v1936 = vmul.f32 %v1861, %v1935
        %v1937 = vsub.f32 1.0, %v1936
        %v1938 = vmul.f32 %v1935, %v1937
        %v1939 = vadd.f32 %v1935, %v1938
        %vm1940 = vweird.f32 %v1861
        %vm1941 = vweird.f32 %v1935
        %vm1942 = vmor %vm1940, %vm1941
        %v1943 = vsel %vm1942, %v1935, %v1939
        %v1944 = vand.u32 2147483647, %v1861
        %vm1945 = vcmp.eq.f32.partialorder %v1944, 8.507059e+37
        %v1946 = vand.u32 %v1861, 2147483648
        %v1947 = vor.u32 1.1754944e-38, %v1946
        %v1948 = vsel %vm1945, %v1947, %v1943
        %v1949 = vmul.f32 1.0, %v1948
        %v1950 = vrcp.pop %v1862
        %v1951 = vmul.f32 %v1862, %v1950
        %v1952 = vsub.f32 1.0, %v1951
        %v1953 = vmul.f32 %v1950, %v1952
        %v1954 = vadd.f32 %v1950, %v1953
        %vm1955 = vweird.f32 %v1862
        %vm1956 = vweird.f32 %v1950
        %vm1957 = vmor %vm1955, %vm1956
        %v1958 = vsel %vm1957, %v1950, %v1954
        %v1959 = vand.u32 2147483647, %v1862
        %vm1960 = vcmp.eq.f32.partialorder %v1959, 8.507059e+37
        %v1961 = vand.u32 %v1862, 2147483648
        %v1962 = vor.u32 1.1754944e-38, %v1961
        %v1963 = vsel %vm1960, %v1962, %v1958
        %v1964 = vmul.f32 1.0, %v1963
        %v1965 = vrcp.pop %v1863
        %v1966 = vmul.f32 %v1863, %v1965
        %v1967 = vsub.f32 1.0, %v1966
        %v1968 = vmul.f32 %v1965, %v1967
        %v1969 = vadd.f32 %v1965, %v1968
        %vm1970 = vweird.f32 %v1863
        %vm1971 = vweird.f32 %v1965
        %vm1972 = vmor %vm1970, %vm1971
        %v1973 = vsel %vm1972, %v1965, %v1969
        %v1974 = vand.u32 2147483647, %v1863
        %vm1975 = vcmp.eq.f32.partialorder %v1974, 8.507059e+37
        %v1976 = vand.u32 %v1863, 2147483648
        %v1977 = vor.u32 1.1754944e-38, %v1976
        %v1978 = vsel %vm1975, %v1977, %v1973
        %v1979 = vmul.f32 1.0, %v1978
        %v1980 = vrcp.pop %v1864
        %v1981 = vmul.f32 %v1864, %v1980
        %v1982 = vsub.f32 1.0, %v1981
        %v1983 = vmul.f32 %v1980, %v1982
        %v1984 = vadd.f32 %v1980, %v1983
        %vm1985 = vweird.f32 %v1864
        %vm1986 = vweird.f32 %v1980
        %vm1987 = vmor %vm1985, %vm1986
        %v1988 = vsel %vm1987, %v1980, %v1984
        %v1989 = vand.u32 2147483647, %v1864
        %vm1990 = vcmp.eq.f32.partialorder %v1989, 8.507059e+37
        %v1991 = vand.u32 %v1864, 2147483648
        %v1992 = vor.u32 1.1754944e-38, %v1991
        %v1993 = vsel %vm1990, %v1992, %v1988
        %v1994 = vmul.f32 1.0, %v1993
        %v1995 = vrcp.pop %v1865
        %v1996 = vmul.f32 %v1865, %v1995
        %v1997 = vsub.f32 1.0, %v1996
        %v1998 = vmul.f32 %v1995, %v1997
        %v1999 = vadd.f32 %v1995, %v1998
        %vm2000 = vweird.f32 %v1865
        %vm2001 = vweird.f32 %v1995
        %vm2002 = vmor %vm2000, %vm2001
        %v2003 = vsel %vm2002, %v1995, %v1999
        %v2004 = vand.u32 2147483647, %v1865
        %vm2005 = vcmp.eq.f32.partialorder %v2004, 8.507059e+37
        %v2006 = vand.u32 %v1865, 2147483648
        %v2007 = vor.u32 1.1754944e-38, %v2006
        %v2008 = vsel %vm2005, %v2007, %v2003
        %v2009 = vmul.f32 1.0, %v2008
        %v2010 = vrcp.pop %v1866
        %v2011 = vmul.f32 %v1866, %v2010
        %v2012 = vsub.f32 1.0, %v2011
        %v2013 = vmul.f32 %v2010, %v2012
        %v2014 = vadd.f32 %v2010, %v2013
        %vm2015 = vweird.f32 %v1866
        %vm2016 = vweird.f32 %v2010
        %vm2017 = vmor %vm2015, %vm2016
        %v2018 = vsel %vm2017, %v2010, %v2014
        %v2019 = vand.u32 2147483647, %v1866
        %vm2020 = vcmp.eq.f32.partialorder %v2019, 8.507059e+37
        %v2021 = vand.u32 %v1866, 2147483648
        %v2022 = vor.u32 1.1754944e-38, %v2021
        %v2023 = vsel %vm2020, %v2022, %v2018
        %v2024 = vmul.f32 1.0, %v2023
        %v2025 = vrcp.pop %v1867
        %v2026 = vmul.f32 %v1867, %v2025
        %v2027 = vsub.f32 1.0, %v2026
        %v2028 = vmul.f32 %v2025, %v2027
        %v2029 = vadd.f32 %v2025, %v2028
        %vm2030 = vweird.f32 %v1867
        %vm2031 = vweird.f32 %v2025
        %vm2032 = vmor %vm2030, %vm2031
        %v2033 = vsel %vm2032, %v2025, %v2029
        %v2034 = vand.u32 2147483647, %v1867
        %vm2035 = vcmp.eq.f32.partialorder %v2034, 8.507059e+37
        %v2036 = vand.u32 %v1867, 2147483648
        %v2037 = vor.u32 1.1754944e-38, %v2036
        %v2038 = vsel %vm2035, %v2037, %v2033
        %v2039 = vmul.f32 1.0, %v2038
        %v2040 = vrcp.pop %v1868
        %v2041 = vmul.f32 %v1868, %v2040
        %v2042 = vsub.f32 1.0, %v2041
        %v2043 = vmul.f32 %v2040, %v2042
        %v2044 = vadd.f32 %v2040, %v2043
        %vm2045 = vweird.f32 %v1868
        %vm2046 = vweird.f32 %v2040
        %vm2047 = vmor %vm2045, %vm2046
        %v2048 = vsel %vm2047, %v2040, %v2044
        %v2049 = vand.u32 2147483647, %v1868
        %vm2050 = vcmp.eq.f32.partialorder %v2049, 8.507059e+37
        %v2051 = vand.u32 %v1868, 2147483648
        %v2052 = vor.u32 1.1754944e-38, %v2051
        %v2053 = vsel %vm2050, %v2052, %v2048
        %v2054 = vmul.f32 1.0, %v2053
        %v2055 = vrcp.pop %v1869
        %v2056 = vmul.f32 %v1869, %v2055
        %v2057 = vsub.f32 1.0, %v2056
        %v2058 = vmul.f32 %v2055, %v2057
        %v2059 = vadd.f32 %v2055, %v2058
        %vm2060 = vweird.f32 %v1869
        %vm2061 = vweird.f32 %v2055
        %vm2062 = vmor %vm2060, %vm2061
        %v2063 = vsel %vm2062, %v2055, %v2059
        %v2064 = vand.u32 2147483647, %v1869
        %vm2065 = vcmp.eq.f32.partialorder %v2064, 8.507059e+37
        %v2066 = vand.u32 %v1869, 2147483648
        %v2067 = vor.u32 1.1754944e-38, %v2066
        %v2068 = vsel %vm2065, %v2067, %v2063
        %v2069 = vmul.f32 1.0, %v2068
        %v2070 = vrcp.pop %v1870
        %v2071 = vmul.f32 %v1870, %v2070
        %v2072 = vsub.f32 1.0, %v2071
        %v2073 = vmul.f32 %v2070, %v2072
        %v2074 = vadd.f32 %v2070, %v2073
        %vm2075 = vweird.f32 %v1870
        %vm2076 = vweird.f32 %v2070
        %vm2077 = vmor %vm2075, %vm2076
        %v2078 = vsel %vm2077, %v2070, %v2074
        %v2079 = vand.u32 2147483647, %v1870
        %vm2080 = vcmp.eq.f32.partialorder %v2079, 8.507059e+37
        %v2081 = vand.u32 %v1870, 2147483648
        %v2082 = vor.u32 1.1754944e-38, %v2081
        %v2083 = vsel %vm2080, %v2082, %v2078
        %v2084 = vmul.f32 1.0, %v2083
        %v2085 = vrcp.pop %v1871
        %v2086 = vmul.f32 %v1871, %v2085
        %v2087 = vsub.f32 1.0, %v2086
        %v2088 = vmul.f32 %v2085, %v2087
        %v2089 = vadd.f32 %v2085, %v2088
        %vm2090 = vweird.f32 %v1871
        %vm2091 = vweird.f32 %v2085
        %vm2092 = vmor %vm2090, %vm2091
        %v2093 = vsel %vm2092, %v2085, %v2089
        %v2094 = vand.u32 2147483647, %v1871
        %vm2095 = vcmp.eq.f32.partialorder %v2094, 8.507059e+37
        %v2096 = vand.u32 %v1871, 2147483648
        %v2097 = vor.u32 1.1754944e-38, %v2096
        %v2098 = vsel %vm2095, %v2097, %v2093
        %v2099 = vmul.f32 1.0, %v2098
        %v2100 = vrcp.pop %v1872
        %v2101 = vmul.f32 %v1872, %v2100
        %v2102 = vsub.f32 1.0, %v2101
        %v2103 = vmul.f32 %v2100, %v2102
        %v2104 = vadd.f32 %v2100, %v2103
        %vm2105 = vweird.f32 %v1872
        %vm2106 = vweird.f32 %v2100
        %vm2107 = vmor %vm2105, %vm2106
        %v2108 = vsel %vm2107, %v2100, %v2104
        %v2109 = vand.u32 2147483647, %v1872
        %vm2110 = vcmp.eq.f32.partialorder %v2109, 8.507059e+37
        %v2111 = vand.u32 %v1872, 2147483648
        %v2112 = vor.u32 1.1754944e-38, %v2111
        %v2113 = vsel %vm2110, %v2112, %v2108
        %v2114 = vmul.f32 1.0, %v2113
        %v2115 = vrcp.pop %v1873
        %v2116 = vmul.f32 %v1873, %v2115
        %v2117 = vsub.f32 1.0, %v2116
        %v2118 = vmul.f32 %v2115, %v2117
        %v2119 = vadd.f32 %v2115, %v2118
        %vm2120 = vweird.f32 %v1873
        %vm2121 = vweird.f32 %v2115
        %vm2122 = vmor %vm2120, %vm2121
        %v2123 = vsel %vm2122, %v2115, %v2119
        %v2124 = vand.u32 2147483647, %v1873
        %vm2125 = vcmp.eq.f32.partialorder %v2124, 8.507059e+37
        %v2126 = vand.u32 %v1873, 2147483648
        %v2127 = vor.u32 1.1754944e-38, %v2126
        %v2128 = vsel %vm2125, %v2127, %v2123
        %v2129 = vmul.f32 1.0, %v2128
        %v2130 = vrcp.pop %v1874
        %v2131 = vmul.f32 %v1874, %v2130
        %v2132 = vsub.f32 1.0, %v2131
        %v2133 = vmul.f32 %v2130, %v2132
        %v2134 = vadd.f32 %v2130, %v2133
        %vm2135 = vweird.f32 %v1874
        %vm2136 = vweird.f32 %v2130
        %vm2137 = vmor %vm2135, %vm2136
        %v2138 = vsel %vm2137, %v2130, %v2134
        %v2139 = vand.u32 2147483647, %v1874
        %vm2140 = vcmp.eq.f32.partialorder %v2139, 8.507059e+37
        %v2141 = vand.u32 %v1874, 2147483648
        %v2142 = vor.u32 1.1754944e-38, %v2141
        %v2143 = vsel %vm2140, %v2142, %v2138
        %v2144 = vmul.f32 1.0, %v2143
        %v2145 = vrcp.pop %v1875
        %v2146 = vmul.f32 %v1875, %v2145
        %v2147 = vsub.f32 1.0, %v2146
        %v2148 = vmul.f32 %v2145, %v2147
        %v2149 = vadd.f32 %v2145, %v2148
        %vm2150 = vweird.f32 %v1875
        %vm2151 = vweird.f32 %v2145
        %vm2152 = vmor %vm2150, %vm2151
        %v2153 = vsel %vm2152, %v2145, %v2149
        %v2154 = vand.u32 2147483647, %v1875
        %vm2155 = vcmp.eq.f32.partialorder %v2154, 8.507059e+37
        %v2156 = vand.u32 %v1875, 2147483648
        %v2157 = vor.u32 1.1754944e-38, %v2156
        %v2158 = vsel %vm2155, %v2157, %v2153
        %v2159 = vmul.f32 1.0, %v2158
        %v2160 = vrcp.pop %v1876
        %v2161 = vmul.f32 %v1876, %v2160
        %v2162 = vsub.f32 1.0, %v2161
        %v2163 = vmul.f32 %v2160, %v2162
        %v2164 = vadd.f32 %v2160, %v2163
        %vm2165 = vweird.f32 %v1876
        %vm2166 = vweird.f32 %v2160
        %vm2167 = vmor %vm2165, %vm2166
        %v2168 = vsel %vm2167, %v2160, %v2164
        %v2169 = vand.u32 2147483647, %v1876
        %vm2170 = vcmp.eq.f32.partialorder %v2169, 8.507059e+37
        %v2171 = vand.u32 %v1876, 2147483648
        %v2172 = vor.u32 1.1754944e-38, %v2171
        %v2173 = vsel %vm2170, %v2172, %v2168
        %v2174 = vmul.f32 1.0, %v2173
        %v2175 = vrcp.pop %v1877
        %v2176 = vmul.f32 %v1877, %v2175
        %v2177 = vsub.f32 1.0, %v2176
        %v2178 = vmul.f32 %v2175, %v2177
        %v2179 = vadd.f32 %v2175, %v2178
        %vm2180 = vweird.f32 %v1877
        %vm2181 = vweird.f32 %v2175
        %vm2182 = vmor %vm2180, %vm2181
        %v2183 = vsel %vm2182, %v2175, %v2179
        %v2184 = vand.u32 2147483647, %v1877
        %vm2185 = vcmp.eq.f32.partialorder %v2184, 8.507059e+37
        %v2186 = vand.u32 %v1877, 2147483648
        %v2187 = vor.u32 1.1754944e-38, %v2186
        %v2188 = vsel %vm2185, %v2187, %v2183
        %v2189 = vmul.f32 1.0, %v2188
        %v2190 = vrcp.pop %v1878
        %v2191 = vmul.f32 %v1878, %v2190
        %v2192 = vsub.f32 1.0, %v2191
        %v2193 = vmul.f32 %v2190, %v2192
        %v2194 = vadd.f32 %v2190, %v2193
        %vm2195 = vweird.f32 %v1878
        %vm2196 = vweird.f32 %v2190
        %vm2197 = vmor %vm2195, %vm2196
        %v2198 = vsel %vm2197, %v2190, %v2194
        %v2199 = vand.u32 2147483647, %v1878
        %vm2200 = vcmp.eq.f32.partialorder %v2199, 8.507059e+37
        %v2201 = vand.u32 %v1878, 2147483648
        %v2202 = vor.u32 1.1754944e-38, %v2201
        %v2203 = vsel %vm2200, %v2202, %v2198
        %v2204 = vmul.f32 1.0, %v2203
        %v2205 = vrcp.pop %v1879
        %v2206 = vmul.f32 %v1879, %v2205
        %v2207 = vsub.f32 1.0, %v2206
        %v2208 = vmul.f32 %v2205, %v2207
        %v2209 = vadd.f32 %v2205, %v2208
        %vm2210 = vweird.f32 %v1879
        %vm2211 = vweird.f32 %v2205
        %vm2212 = vmor %vm2210, %vm2211
        %v2213 = vsel %vm2212, %v2205, %v2209
        %v2214 = vand.u32 2147483647, %v1879
        %vm2215 = vcmp.eq.f32.partialorder %v2214, 8.507059e+37
        %v2216 = vand.u32 %v1879, 2147483648
        %v2217 = vor.u32 1.1754944e-38, %v2216
        %v2218 = vsel %vm2215, %v2217, %v2213
        %v2219 = vmul.f32 1.0, %v2218
        %v2220 = vrcp.pop %v1880
        %v2221 = vmul.f32 %v1880, %v2220
        %v2222 = vsub.f32 1.0, %v2221
        %v2223 = vmul.f32 %v2220, %v2222
        %v2224 = vadd.f32 %v2220, %v2223
        %vm2225 = vweird.f32 %v1880
        %vm2226 = vweird.f32 %v2220
        %vm2227 = vmor %vm2225, %vm2226
        %v2228 = vsel %vm2227, %v2220, %v2224
        %v2229 = vand.u32 2147483647, %v1880
        %vm2230 = vcmp.eq.f32.partialorder %v2229, 8.507059e+37
        %v2231 = vand.u32 %v1880, 2147483648
        %v2232 = vor.u32 1.1754944e-38, %v2231
        %v2233 = vsel %vm2230, %v2232, %v2228
        %v2234 = vmul.f32 1.0, %v2233
        %v2235 = vrcp.pop %v1881
        %v2236 = vmul.f32 %v1881, %v2235
        %v2237 = vsub.f32 1.0, %v2236
        %v2238 = vmul.f32 %v2235, %v2237
        %v2239 = vadd.f32 %v2235, %v2238
        %vm2240 = vweird.f32 %v1881
        %vm2241 = vweird.f32 %v2235
        %vm2242 = vmor %vm2240, %vm2241
        %v2243 = vsel %vm2242, %v2235, %v2239
        %v2244 = vand.u32 2147483647, %v1881
        %vm2245 = vcmp.eq.f32.partialorder %v2244, 8.507059e+37
        %v2246 = vand.u32 %v1881, 2147483648
        %v2247 = vor.u32 1.1754944e-38, %v2246
        %v2248 = vsel %vm2245, %v2247, %v2243
        %v2249 = vmul.f32 1.0, %v2248
        %v2250 = vrcp.pop %v1882
        %v2251 = vmul.f32 %v1882, %v2250
        %v2252 = vsub.f32 1.0, %v2251
        %v2253 = vmul.f32 %v2250, %v2252
        %v2254 = vadd.f32 %v2250, %v2253
        %vm2255 = vweird.f32 %v1882
        %vm2256 = vweird.f32 %v2250
        %vm2257 = vmor %vm2255, %vm2256
        %v2258 = vsel %vm2257, %v2250, %v2254
        %v2259 = vand.u32 2147483647, %v1882
        %vm2260 = vcmp.eq.f32.partialorder %v2259, 8.507059e+37
        %v2261 = vand.u32 %v1882, 2147483648
        %v2262 = vor.u32 1.1754944e-38, %v2261
        %v2263 = vsel %vm2260, %v2262, %v2258
        %v2264 = vmul.f32 1.0, %v2263
        %v2265 = vrcp.pop %v1883
        %v2266 = vmul.f32 %v1883, %v2265
        %v2267 = vsub.f32 1.0, %v2266
        %v2268 = vmul.f32 %v2265, %v2267
        %v2269 = vadd.f32 %v2265, %v2268
        %vm2270 = vweird.f32 %v1883
        %vm2271 = vweird.f32 %v2265
        %vm2272 = vmor %vm2270, %vm2271
        %v2273 = vsel %vm2272, %v2265, %v2269
        %v2274 = vand.u32 2147483647, %v1883
        %vm2275 = vcmp.eq.f32.partialorder %v2274, 8.507059e+37
        %v2276 = vand.u32 %v1883, 2147483648
        %v2277 = vor.u32 1.1754944e-38, %v2276
        %v2278 = vsel %vm2275, %v2277, %v2273
        %v2279 = vmul.f32 1.0, %v2278
        %v2280 = vrcp.pop %v1884
        %v2281 = vmul.f32 %v1884, %v2280
        %v2282 = vsub.f32 1.0, %v2281
        %v2283 = vmul.f32 %v2280, %v2282
        %v2284 = vadd.f32 %v2280, %v2283
        %vm2285 = vweird.f32 %v1884
        %vm2286 = vweird.f32 %v2280
        %vm2287 = vmor %vm2285, %vm2286
        %v2288 = vsel %vm2287, %v2280, %v2284
        %v2289 = vand.u32 2147483647, %v1884
        %vm2290 = vcmp.eq.f32.partialorder %v2289, 8.507059e+37
        %v2291 = vand.u32 %v1884, 2147483648
        %v2292 = vor.u32 1.1754944e-38, %v2291
        %v2293 = vsel %vm2290, %v2292, %v2288
        %v2294 = vmul.f32 1.0, %v2293
        %v2295 = vrcp.pop %v1885
        %v2296 = vmul.f32 %v1885, %v2295
        %v2297 = vsub.f32 1.0, %v2296
        %v2298 = vmul.f32 %v2295, %v2297
        %v2299 = vadd.f32 %v2295, %v2298
        %vm2300 = vweird.f32 %v1885
        %vm2301 = vweird.f32 %v2295
        %vm2302 = vmor %vm2300, %vm2301
        %v2303 = vsel %vm2302, %v2295, %v2299
        %v2304 = vand.u32 2147483647, %v1885
        %vm2305 = vcmp.eq.f32.partialorder %v2304, 8.507059e+37
        %v2306 = vand.u32 %v1885, 2147483648
        %v2307 = vor.u32 1.1754944e-38, %v2306
        %v2308 = vsel %vm2305, %v2307, %v2303
        %v2309 = vmul.f32 1.0, %v2308
        %v2310 = vrcp.pop %v1886
        %v2311 = vmul.f32 %v1886, %v2310
        %v2312 = vsub.f32 1.0, %v2311
        %v2313 = vmul.f32 %v2310, %v2312
        %v2314 = vadd.f32 %v2310, %v2313
        %vm2315 = vweird.f32 %v1886
        %vm2316 = vweird.f32 %v2310
        %vm2317 = vmor %vm2315, %vm2316
        %v2318 = vsel %vm2317, %v2310, %v2314
        %v2319 = vand.u32 2147483647, %v1886
        %vm2320 = vcmp.eq.f32.partialorder %v2319, 8.507059e+37
        %v2321 = vand.u32 %v1886, 2147483648
        %v2322 = vor.u32 1.1754944e-38, %v2321
        %v2323 = vsel %vm2320, %v2322, %v2318
        %v2324 = vmul.f32 1.0, %v2323
        %v2325 = vrcp.pop %v1887
        %v2326 = vmul.f32 %v1887, %v2325
        %v2327 = vsub.f32 1.0, %v2326
        %v2328 = vmul.f32 %v2325, %v2327
        %v2329 = vadd.f32 %v2325, %v2328
        %vm2330 = vweird.f32 %v1887
        %vm2331 = vweird.f32 %v2325
        %vm2332 = vmor %vm2330, %vm2331
        %v2333 = vsel %vm2332, %v2325, %v2329
        %v2334 = vand.u32 2147483647, %v1887
        %vm2335 = vcmp.eq.f32.partialorder %v2334, 8.507059e+37
        %v2336 = vand.u32 %v1887, 2147483648
        %v2337 = vor.u32 1.1754944e-38, %v2336
        %v2338 = vsel %vm2335, %v2337, %v2333
        %v2339 = vmul.f32 1.0, %v2338
        %v2340 = vrcp.pop %v1888
        %v2341 = vmul.f32 %v1888, %v2340
        %v2342 = vsub.f32 1.0, %v2341
        %v2343 = vmul.f32 %v2340, %v2342
        %v2344 = vadd.f32 %v2340, %v2343
        %vm2345 = vweird.f32 %v1888
        %vm2346 = vweird.f32 %v2340
        %vm2347 = vmor %vm2345, %vm2346
        %v2348 = vsel %vm2347, %v2340, %v2344
        %v2349 = vand.u32 2147483647, %v1888
        %vm2350 = vcmp.eq.f32.partialorder %v2349, 8.507059e+37
        %v2351 = vand.u32 %v1888, 2147483648
        %v2352 = vor.u32 1.1754944e-38, %v2351
        %v2353 = vsel %vm2350, %v2352, %v2348
        %v2354 = vmul.f32 1.0, %v2353
        %v2355 = vrcp.pop %v1889
        %v2356 = vmul.f32 %v1889, %v2355
        %v2357 = vsub.f32 1.0, %v2356
        %v2358 = vmul.f32 %v2355, %v2357
        %v2359 = vadd.f32 %v2355, %v2358
        %vm2360 = vweird.f32 %v1889
        %vm2361 = vweird.f32 %v2355
        %vm2362 = vmor %vm2360, %vm2361
        %v2363 = vsel %vm2362, %v2355, %v2359
        %v2364 = vand.u32 2147483647, %v1889
        %vm2365 = vcmp.eq.f32.partialorder %v2364, 8.507059e+37
        %v2366 = vand.u32 %v1889, 2147483648
        %v2367 = vor.u32 1.1754944e-38, %v2366
        %v2368 = vsel %vm2365, %v2367, %v2363
        %v2369 = vmul.f32 1.0, %v2368
        %v2370 = vtanh.pop %v1731
        %v2371 = vtanh.pop %v1733
        %v2372 = vtanh.pop %v1735
        %v2373 = vtanh.pop %v1737
        %v2374 = vtanh.pop %v1739
        %v2375 = vtanh.pop %v1741
        %v2376 = vtanh.pop %v1743
        %v2377 = vtanh.pop %v1745
        %v2378 = vtanh.pop %v1747
        %v2379 = vtanh.pop %v1749
        %v2380 = vtanh.pop %v1751
        %v2381 = vtanh.pop %v1753
        %v2382 = vtanh.pop %v1755
        %v2383 = vtanh.pop %v1757
        %v2384 = vtanh.pop %v1759
        %v2385 = vtanh.pop %v1761
        %v2386 = vmul.f32 %v1904, 0.0
        %v2387 = vmul.f32 %v1934, 0.0
        %v2388 = vmul.f32 %v1964, 0.0
        %v2389 = vmul.f32 %v1994, 0.0
        %v2390 = vmul.f32 %v2024, 0.0
        %v2391 = vmul.f32 %v2054, 0.0
        %v2392 = vmul.f32 %v2084, 0.0
        %v2393 = vmul.f32 %v2114, 0.0
        %v2394 = vmul.f32 %v2144, 0.0
        %v2395 = vmul.f32 %v2174, 0.0
        %v2396 = vmul.f32 %v2204, 0.0
        %v2397 = vmul.f32 %v2234, 0.0
        %v2398 = vmul.f32 %v2264, 0.0
        %v2399 = vmul.f32 %v2294, 0.0
        %v2400 = vmul.f32 %v2324, 0.0
        %v2401 = vmul.f32 %v2354, 0.0
        %2418 = vrot.lane.b32.xlu0 %v2370, 64
        %v2419 = vpop.permute.xlu0 %2418
        %2420 = vrot.lane.b32.xlu0 %v2371, 64
        %v2421 = vpop.permute.xlu0 %2420
        %2422 = vrot.lane.b32.xlu0 %v2372, 64
        %v2423 = vpop.permute.xlu0 %2422
        %2424 = vrot.lane.b32.xlu0 %v2373, 64
        %v2425 = vpop.permute.xlu0 %2424
        %2426 = vrot.lane.b32.xlu0 %v2374, 64
        %v2427 = vpop.permute.xlu0 %2426
        %2428 = vrot.lane.b32.xlu0 %v2375, 64
        %v2429 = vpop.permute.xlu0 %2428
        %2430 = vrot.lane.b32.xlu0 %v2376, 64
        %v2431 = vpop.permute.xlu0 %2430
        %2432 = vrot.lane.b32.xlu0 %v2377, 64
        %v2433 = vpop.permute.xlu0 %2432
        %2434 = vrot.lane.b32.xlu0 %v2378, 64
        %v2435 = vpop.permute.xlu0 %2434
        %2436 = vrot.lane.b32.xlu0 %v2379, 64
        %v2437 = vpop.permute.xlu0 %2436
        %2438 = vrot.lane.b32.xlu0 %v2380, 64
        %v2439 = vpop.permute.xlu0 %2438
        %2440 = vrot.lane.b32.xlu0 %v2381, 64
        %v2441 = vpop.permute.xlu0 %2440
        %2442 = vrot.lane.b32.xlu0 %v2382, 64
        %v2443 = vpop.permute.xlu0 %2442
        %2444 = vrot.lane.b32.xlu0 %v2383, 64
        %v2445 = vpop.permute.xlu0 %2444
        %2446 = vrot.lane.b32.xlu0 %v2384, 64
        %v2447 = vpop.permute.xlu0 %2446
        %2448 = vrot.lane.b32.xlu0 %v2385, 64
        %v2449 = vpop.permute.xlu0 %2448
        %v2466 = vmul.f32 %v1904, %v2419
        %v2467 = vmul.f32 %v1934, %v2421
        %v2468 = vmul.f32 %v1964, %v2423
        %v2469 = vmul.f32 %v1994, %v2425
        %v2470 = vmul.f32 %v2024, %v2427
        %v2471 = vmul.f32 %v2054, %v2429
        %v2472 = vmul.f32 %v2084, %v2431
        %v2473 = vmul.f32 %v2114, %v2433
        %v2474 = vmul.f32 %v2144, %v2435
        %v2475 = vmul.f32 %v2174, %v2437
        %v2476 = vmul.f32 %v2204, %v2439
        %v2477 = vmul.f32 %v2234, %v2441
        %v2478 = vmul.f32 %v2264, %v2443
        %v2479 = vmul.f32 %v2294, %v2445
        %v2480 = vmul.f32 %v2324, %v2447
        %v2481 = vmul.f32 %v2354, %v2449
        %2498 = vrot.lane.b32.xlu0 %v2466, 64
        %v2499 = vpop.permute.xlu0 %2498
        %2500 = vrot.lane.b32.xlu0 %v2467, 64
        %v2501 = vpop.permute.xlu0 %2500
        %2502 = vrot.lane.b32.xlu0 %v2468, 64
        %v2503 = vpop.permute.xlu0 %2502
        %2504 = vrot.lane.b32.xlu0 %v2469, 64
        %v2505 = vpop.permute.xlu0 %2504
        %2506 = vrot.lane.b32.xlu0 %v2470, 64
        %v2507 = vpop.permute.xlu0 %2506
        %2508 = vrot.lane.b32.xlu0 %v2471, 64
        %v2509 = vpop.permute.xlu0 %2508
        %2510 = vrot.lane.b32.xlu0 %v2472, 64
        %v2511 = vpop.permute.xlu0 %2510
        %2512 = vrot.lane.b32.xlu0 %v2473, 64
        %v2513 = vpop.permute.xlu0 %2512
        %2514 = vrot.lane.b32.xlu0 %v2474, 64
        %v2515 = vpop.permute.xlu0 %2514
        %2516 = vrot.lane.b32.xlu0 %v2475, 64
        %v2517 = vpop.permute.xlu0 %2516
        %2518 = vrot.lane.b32.xlu0 %v2476, 64
        %v2519 = vpop.permute.xlu0 %2518
        %2520 = vrot.lane.b32.xlu0 %v2477, 64
        %v2521 = vpop.permute.xlu0 %2520
        %2522 = vrot.lane.b32.xlu0 %v2478, 64
        %v2523 = vpop.permute.xlu0 %2522
        %2524 = vrot.lane.b32.xlu0 %v2479, 64
        %v2525 = vpop.permute.xlu0 %2524
        %2526 = vrot.lane.b32.xlu0 %v2480, 64
        %v2527 = vpop.permute.xlu0 %2526
        %2528 = vrot.lane.b32.xlu0 %v2481, 64
        %v2529 = vpop.permute.xlu0 %2528
        %v2546 = vadd.f32 %v2386, %v2499
        %v2547 = vadd.f32 %v2387, %v2501
        %v2548 = vadd.f32 %v2388, %v2503
        %v2549 = vadd.f32 %v2389, %v2505
        %v2550 = vadd.f32 %v2390, %v2507
        %v2551 = vadd.f32 %v2391, %v2509
        %v2552 = vadd.f32 %v2392, %v2511
        %v2553 = vadd.f32 %v2393, %v2513
        %v2554 = vadd.f32 %v2394, %v2515
        %v2555 = vadd.f32 %v2395, %v2517
        %v2556 = vadd.f32 %v2396, %v2519
        %v2557 = vadd.f32 %v2397, %v2521
        %v2558 = vadd.f32 %v2398, %v2523
        %v2559 = vadd.f32 %v2399, %v2525
        %v2560 = vadd.f32 %v2400, %v2527
        %v2561 = vadd.f32 %v2401, %v2529
        %v2562 = vtanh.pop %v2546
        %v2563 = vtanh.pop %v2547
        %v2564 = vtanh.pop %v2548
        %v2565 = vtanh.pop %v2549
        %v2566 = vtanh.pop %v2550
        %v2567 = vtanh.pop %v2551
        %v2568 = vtanh.pop %v2552
        %v2569 = vtanh.pop %v2553
        %v2570 = vtanh.pop %v2554
        %v2571 = vtanh.pop %v2555
        %v2572 = vtanh.pop %v2556
        %v2573 = vtanh.pop %v2557
        %v2574 = vtanh.pop %v2558
        %v2575 = vtanh.pop %v2559
        %v2576 = vtanh.pop %v2560
        %v2577 = vtanh.pop %v2561
        %2594 = vrot.lane.b32.xlu0 %v2562, 64
        %v2595 = vpop.permute.xlu0 %2594
        %2596 = vrot.lane.b32.xlu0 %v2563, 64
        %v2597 = vpop.permute.xlu0 %2596
        %2598 = vrot.lane.b32.xlu0 %v2564, 64
        %v2599 = vpop.permute.xlu0 %2598
        %2600 = vrot.lane.b32.xlu0 %v2565, 64
        %v2601 = vpop.permute.xlu0 %2600
        %2602 = vrot.lane.b32.xlu0 %v2566, 64
        %v2603 = vpop.permute.xlu0 %2602
        %2604 = vrot.lane.b32.xlu0 %v2567, 64
        %v2605 = vpop.permute.xlu0 %2604
        %2606 = vrot.lane.b32.xlu0 %v2568, 64
        %v2607 = vpop.permute.xlu0 %2606
        %2608 = vrot.lane.b32.xlu0 %v2569, 64
        %v2609 = vpop.permute.xlu0 %2608
        %2610 = vrot.lane.b32.xlu0 %v2570, 64
        %v2611 = vpop.permute.xlu0 %2610
        %2612 = vrot.lane.b32.xlu0 %v2571, 64
        %v2613 = vpop.permute.xlu0 %2612
        %2614 = vrot.lane.b32.xlu0 %v2572, 64
        %v2615 = vpop.permute.xlu0 %2614
        %2616 = vrot.lane.b32.xlu0 %v2573, 64
        %v2617 = vpop.permute.xlu0 %2616
        %2618 = vrot.lane.b32.xlu0 %v2574, 64
        %v2619 = vpop.permute.xlu0 %2618
        %2620 = vrot.lane.b32.xlu0 %v2575, 64
        %v2621 = vpop.permute.xlu0 %2620
        %2622 = vrot.lane.b32.xlu0 %v2576, 64
        %v2623 = vpop.permute.xlu0 %2622
        %2624 = vrot.lane.b32.xlu0 %v2577, 64
        %v2625 = vpop.permute.xlu0 %2624
        %v2642 = vmul.f32 %v1919, %v2595
        %v2643 = vmul.f32 %v1949, %v2597
        %v2644 = vmul.f32 %v1979, %v2599
        %v2645 = vmul.f32 %v2009, %v2601
        %v2646 = vmul.f32 %v2039, %v2603
        %v2647 = vmul.f32 %v2069, %v2605
        %v2648 = vmul.f32 %v2099, %v2607
        %v2649 = vmul.f32 %v2129, %v2609
        %v2650 = vmul.f32 %v2159, %v2611
        %v2651 = vmul.f32 %v2189, %v2613
        %v2652 = vmul.f32 %v2219, %v2615
        %v2653 = vmul.f32 %v2249, %v2617
        %v2654 = vmul.f32 %v2279, %v2619
        %v2655 = vmul.f32 %v2309, %v2621
        %v2656 = vmul.f32 %v2339, %v2623
        %v2657 = vmul.f32 %v2369, %v2625
        %v2658 = vadd.f32 %v2642, 0.0
        %v2659 = vadd.f32 %v2643, 0.0
        %v2660 = vadd.f32 %v2644, 0.0
        %v2661 = vadd.f32 %v2645, 0.0
        %v2662 = vadd.f32 %v2646, 0.0
        %v2663 = vadd.f32 %v2647, 0.0
        %v2664 = vadd.f32 %v2648, 0.0
        %v2665 = vadd.f32 %v2649, 0.0
        %v2666 = vadd.f32 %v2650, 0.0
        %v2667 = vadd.f32 %v2651, 0.0
        %v2668 = vadd.f32 %v2652, 0.0
        %v2669 = vadd.f32 %v2653, 0.0
        %v2670 = vadd.f32 %v2654, 0.0
        %v2671 = vadd.f32 %v2655, 0.0
        %v2672 = vadd.f32 %v2656, 0.0
        %v2673 = vadd.f32 %v2657, 0.0
        %v2674 = vld [vmem:[#allocation2 + $0x100] sm:$0xff]
        %v2675 = vld [vmem:[#allocation2 + $0x108] sm:$0xff]
        %v2676 = vld [vmem:[#allocation2 + $0x110] sm:$0xff]
        %v2677 = vld [vmem:[#allocation2 + $0x118] sm:$0xff]
        %v2678 = vld [vmem:[#allocation2 + $0x120] sm:$0xff]
        %v2679 = vld [vmem:[#allocation2 + $0x128] sm:$0xff]
        %v2680 = vld [vmem:[#allocation2 + $0x130] sm:$0xff]
        %v2681 = vld [vmem:[#allocation2 + $0x138] sm:$0xff]
        %v2682 = vld [vmem:[#allocation2 + $0x140] sm:$0xff]
        %v2683 = vld [vmem:[#allocation2 + $0x148] sm:$0xff]
        %v2684 = vld [vmem:[#allocation2 + $0x150] sm:$0xff]
        %v2685 = vld [vmem:[#allocation2 + $0x158] sm:$0xff]
        %v2686 = vld [vmem:[#allocation2 + $0x160] sm:$0xff]
        %v2687 = vld [vmem:[#allocation2 + $0x168] sm:$0xff]
        %v2688 = vld [vmem:[#allocation2 + $0x170] sm:$0xff]
        %v2689 = vld [vmem:[#allocation2 + $0x178] sm:$0xff]
        %v2690 = vld [vmem:[#allocation2 + $0x180] sm:$0xff]
        %v2691 = vld [vmem:[#allocation2 + $0x188] sm:$0xff]
        %v2692 = vld [vmem:[#allocation2 + $0x190] sm:$0xff]
        %v2693 = vld [vmem:[#allocation2 + $0x198] sm:$0xff]
        %v2694 = vld [vmem:[#allocation2 + $0x1a0] sm:$0xff]
        %v2695 = vld [vmem:[#allocation2 + $0x1a8] sm:$0xff]
        %v2696 = vld [vmem:[#allocation2 + $0x1b0] sm:$0xff]
        %v2697 = vld [vmem:[#allocation2 + $0x1b8] sm:$0xff]
        %v2698 = vld [vmem:[#allocation2 + $0x1c0] sm:$0xff]
        %v2699 = vld [vmem:[#allocation2 + $0x1c8] sm:$0xff]
        %v2700 = vld [vmem:[#allocation2 + $0x1d0] sm:$0xff]
        %v2701 = vld [vmem:[#allocation2 + $0x1d8] sm:$0xff]
        %v2702 = vld [vmem:[#allocation2 + $0x1e0] sm:$0xff]
        %v2703 = vld [vmem:[#allocation2 + $0x1e8] sm:$0xff]
        %v2704 = vld [vmem:[#allocation2 + $0x1f0] sm:$0xff]
        %v2705 = vld [vmem:[#allocation2 + $0x1f8] sm:$0xff]
        %v2706 = vpack.c.bf16 %v2643, %v2642
        %v2707 = vpack.c.bf16 %v2645, %v2644
        %v2708 = vpack.c.bf16 %v2647, %v2646
        %v2709 = vpack.c.bf16 %v2649, %v2648
        %v2710 = vpack.c.bf16 %v2651, %v2650
        %v2711 = vpack.c.bf16 %v2653, %v2652
        %v2712 = vpack.c.bf16 %v2655, %v2654
        %v2713 = vpack.c.bf16 %v2657, %v2656
        %v2715 = vsel %vm641, %v2706, 0
        %v2718 = vsel %vm641, %v2707, 0
        %v2721 = vsel %vm641, %v2708, 0
        %v2724 = vsel %vm641, %v2709, 0
        %v2727 = vsel %vm641, %v2710, 0
        %v2730 = vsel %vm641, %v2711, 0
        %v2733 = vsel %vm641, %v2712, 0
        %v2736 = vsel %vm641, %v2713, 0
        %2738 = vmatpush.bf16.msra.mxu0 0
        %2739 = vmatpush.bf16.msra.mxu0 0
        %2740 = vmatpush.bf16.msra.mxu0 0
        %2741 = vmatpush.bf16.msra.mxu0 0
        %2742 = vmatpush.bf16.msra.mxu0 %v1619
        %2743 = vmatpush.bf16.msra.mxu0 %v1617
        %2744 = vmatpush.bf16.msra.mxu0 %v1615
        %2745 = vmatpush.bf16.msra.mxu0 %v1613
        %2746 = vmatmul.bf16.gmra.mxu0 %v2715
        %v2747 = vpop.f32.mrf.mxu0
        %v2748 = vadd.f32 0.0, %v2747
        %v2749 = vpop.f32.mrf.mxu0
        %v2750 = vadd.f32 0.0, %v2749
        %2751 = vmatmul.bf16.gmra.mxu0 %v2718
        %v2752 = vpop.f32.mrf.mxu0
        %v2753 = vadd.f32 0.0, %v2752
        %v2754 = vpop.f32.mrf.mxu0
        %v2755 = vadd.f32 0.0, %v2754
        %2756 = vmatmul.bf16.gmra.mxu0 %v2721
        %v2757 = vpop.f32.mrf.mxu0
        %v2758 = vadd.f32 0.0, %v2757
        %v2759 = vpop.f32.mrf.mxu0
        %v2760 = vadd.f32 0.0, %v2759
        %2761 = vmatmul.bf16.gmra.mxu0 %v2724
        %v2762 = vpop.f32.mrf.mxu0
        %v2763 = vadd.f32 0.0, %v2762
        %v2764 = vpop.f32.mrf.mxu0
        %v2765 = vadd.f32 0.0, %v2764
        %2766 = vmatmul.bf16.gmra.mxu0 %v2727
        %v2767 = vpop.f32.mrf.mxu0
        %v2768 = vadd.f32 0.0, %v2767
        %v2769 = vpop.f32.mrf.mxu0
        %v2770 = vadd.f32 0.0, %v2769
        %2771 = vmatmul.bf16.gmra.mxu0 %v2730
        %v2772 = vpop.f32.mrf.mxu0
        %v2773 = vadd.f32 0.0, %v2772
        %v2774 = vpop.f32.mrf.mxu0
        %v2775 = vadd.f32 0.0, %v2774
        %2776 = vmatmul.bf16.gmra.mxu0 %v2733
        %v2777 = vpop.f32.mrf.mxu0
        %v2778 = vadd.f32 0.0, %v2777
        %v2779 = vpop.f32.mrf.mxu0
        %v2780 = vadd.f32 0.0, %v2779
        %2781 = vmatmul.bf16.gmra.mxu0 %v2736
        %v2782 = vpop.f32.mrf.mxu0
        %v2783 = vadd.f32 0.0, %v2782
        %v2784 = vpop.f32.mrf.mxu0
        %v2785 = vadd.f32 0.0, %v2784
        %2786 = vdwg.mxu0
        %2787 = vmatpush.bf16.msra.mxu0 0
        %2788 = vmatpush.bf16.msra.mxu0 0
        %2789 = vmatpush.bf16.msra.mxu0 0
        %2790 = vmatpush.bf16.msra.mxu0 0
        %2791 = vmatpush.bf16.msra.mxu0 %v1620
        %2792 = vmatpush.bf16.msra.mxu0 %v1618
        %2793 = vmatpush.bf16.msra.mxu0 %v1616
        %2794 = vmatpush.bf16.msra.mxu0 %v1614
        %2795 = vmatmul.bf16.gmra.mxu0 %v2715
        %v2796 = vpop.f32.mrf.mxu0
        %v2797 = vadd.f32 0.0, %v2796
        %v2798 = vpop.f32.mrf.mxu0
        %v2799 = vadd.f32 0.0, %v2798
        %2800 = vmatmul.bf16.gmra.mxu0 %v2718
        %v2801 = vpop.f32.mrf.mxu0
        %v2802 = vadd.f32 0.0, %v2801
        %v2803 = vpop.f32.mrf.mxu0
        %v2804 = vadd.f32 0.0, %v2803
        %2805 = vmatmul.bf16.gmra.mxu0 %v2721
        %v2806 = vpop.f32.mrf.mxu0
        %v2807 = vadd.f32 0.0, %v2806
        %v2808 = vpop.f32.mrf.mxu0
        %v2809 = vadd.f32 0.0, %v2808
        %2810 = vmatmul.bf16.gmra.mxu0 %v2724
        %v2811 = vpop.f32.mrf.mxu0
        %v2812 = vadd.f32 0.0, %v2811
        %v2813 = vpop.f32.mrf.mxu0
        %v2814 = vadd.f32 0.0, %v2813
        %2815 = vmatmul.bf16.gmra.mxu0 %v2727
        %v2816 = vpop.f32.mrf.mxu0
        %v2817 = vadd.f32 0.0, %v2816
        %v2818 = vpop.f32.mrf.mxu0
        %v2819 = vadd.f32 0.0, %v2818
        %2820 = vmatmul.bf16.gmra.mxu0 %v2730
        %v2821 = vpop.f32.mrf.mxu0
        %v2822 = vadd.f32 0.0, %v2821
        %v2823 = vpop.f32.mrf.mxu0
        %v2824 = vadd.f32 0.0, %v2823
        %2825 = vmatmul.bf16.gmra.mxu0 %v2733
        %v2826 = vpop.f32.mrf.mxu0
        %v2827 = vadd.f32 0.0, %v2826
        %v2828 = vpop.f32.mrf.mxu0
        %v2829 = vadd.f32 0.0, %v2828
        %2830 = vmatmul.bf16.gmra.mxu0 %v2736
        %v2831 = vpop.f32.mrf.mxu0
        %v2832 = vadd.f32 0.0, %v2831
        %v2833 = vpop.f32.mrf.mxu0
        %v2834 = vadd.f32 0.0, %v2833
        %2835 = vdwg.mxu0
        %v2836 = vadd.f32 %v2674, %v2748
        %v2837 = vadd.f32 %v2675, %v2797
        %v2838 = vadd.f32 %v2676, %v2750
        %v2839 = vadd.f32 %v2677, %v2799
        %v2840 = vadd.f32 %v2678, %v2753
        %v2841 = vadd.f32 %v2679, %v2802
        %v2842 = vadd.f32 %v2680, %v2755
        %v2843 = vadd.f32 %v2681, %v2804
        %v2844 = vadd.f32 %v2682, %v2758
        %v2845 = vadd.f32 %v2683, %v2807
        %v2846 = vadd.f32 %v2684, %v2760
        %v2847 = vadd.f32 %v2685, %v2809
        %v2848 = vadd.f32 %v2686, %v2763
        %v2849 = vadd.f32 %v2687, %v2812
        %v2850 = vadd.f32 %v2688, %v2765
        %v2851 = vadd.f32 %v2689, %v2814
        %v2852 = vadd.f32 %v2690, %v2768
        %v2853 = vadd.f32 %v2691, %v2817
        %v2854 = vadd.f32 %v2692, %v2770
        %v2855 = vadd.f32 %v2693, %v2819
        %v2856 = vadd.f32 %v2694, %v2773
        %v2857 = vadd.f32 %v2695, %v2822
        %v2858 = vadd.f32 %v2696, %v2775
        %v2859 = vadd.f32 %v2697, %v2824
        %v2860 = vadd.f32 %v2698, %v2778
        %v2861 = vadd.f32 %v2699, %v2827
        %v2862 = vadd.f32 %v2700, %v2780
        %v2863 = vadd.f32 %v2701, %v2829
        %v2864 = vadd.f32 %v2702, %v2783
        %v2865 = vadd.f32 %v2703, %v2832
        %v2866 = vadd.f32 %v2704, %v2785
        %v2867 = vadd.f32 %v2705, %v2834
        %v2868 = vxor.u32 %v2836, 2147483648
        %v2869 = vxor.u32 %v2837, 2147483648
        %v2870 = vxor.u32 %v2838, 2147483648
        %v2871 = vxor.u32 %v2839, 2147483648
        %v2872 = vxor.u32 %v2840, 2147483648
        %v2873 = vxor.u32 %v2841, 2147483648
        %v2874 = vxor.u32 %v2842, 2147483648
        %v2875 = vxor.u32 %v2843, 2147483648
        %v2876 = vxor.u32 %v2844, 2147483648
        %v2877 = vxor.u32 %v2845, 2147483648
        %v2878 = vxor.u32 %v2846, 2147483648
        %v2879 = vxor.u32 %v2847, 2147483648
        %v2880 = vxor.u32 %v2848, 2147483648
        %v2881 = vxor.u32 %v2849, 2147483648
        %v2882 = vxor.u32 %v2850, 2147483648
        %v2883 = vxor.u32 %v2851, 2147483648
        %v2884 = vxor.u32 %v2852, 2147483648
        %v2885 = vxor.u32 %v2853, 2147483648
        %v2886 = vxor.u32 %v2854, 2147483648
        %v2887 = vxor.u32 %v2855, 2147483648
        %v2888 = vxor.u32 %v2856, 2147483648
        %v2889 = vxor.u32 %v2857, 2147483648
        %v2890 = vxor.u32 %v2858, 2147483648
        %v2891 = vxor.u32 %v2859, 2147483648
        %v2892 = vxor.u32 %v2860, 2147483648
        %v2893 = vxor.u32 %v2861, 2147483648
        %v2894 = vxor.u32 %v2862, 2147483648
        %v2895 = vxor.u32 %v2863, 2147483648
        %v2896 = vxor.u32 %v2864, 2147483648
        %v2897 = vxor.u32 %v2865, 2147483648
        %v2898 = vxor.u32 %v2866, 2147483648
        %v2899 = vxor.u32 %v2867, 2147483648
        %v2900 = vmul.f32 %v2868, 1.442695
        %v2901 = vpow.pop %v2900
        %v2902 = vmul.f32 %v2869, 1.442695
        %v2903 = vpow.pop %v2902
        %v2904 = vmul.f32 %v2870, 1.442695
        %v2905 = vpow.pop %v2904
        %v2906 = vmul.f32 %v2871, 1.442695
        %v2907 = vpow.pop %v2906
        %v2908 = vmul.f32 %v2872, 1.442695
        %v2909 = vpow.pop %v2908
        %v2910 = vmul.f32 %v2873, 1.442695
        %v2911 = vpow.pop %v2910
        %v2912 = vmul.f32 %v2874, 1.442695
        %v2913 = vpow.pop %v2912
        %v2914 = vmul.f32 %v2875, 1.442695
        %v2915 = vpow.pop %v2914
        %v2916 = vmul.f32 %v2876, 1.442695
        %v2917 = vpow.pop %v2916
        %v2918 = vmul.f32 %v2877, 1.442695
        %v2919 = vpow.pop %v2918
        %v2920 = vmul.f32 %v2878, 1.442695
        %v2921 = vpow.pop %v2920
        %v2922 = vmul.f32 %v2879, 1.442695
        %v2923 = vpow.pop %v2922
        %v2924 = vmul.f32 %v2880, 1.442695
        %v2925 = vpow.pop %v2924
        %v2926 = vmul.f32 %v2881, 1.442695
        %v2927 = vpow.pop %v2926
        %v2928 = vmul.f32 %v2882, 1.442695
        %v2929 = vpow.pop %v2928
        %v2930 = vmul.f32 %v2883, 1.442695
        %v2931 = vpow.pop %v2930
        %v2932 = vmul.f32 %v2884, 1.442695
        %v2933 = vpow.pop %v2932
        %v2934 = vmul.f32 %v2885, 1.442695
        %v2935 = vpow.pop %v2934
        %v2936 = vmul.f32 %v2886, 1.442695
        %v2937 = vpow.pop %v2936
        %v2938 = vmul.f32 %v2887, 1.442695
        %v2939 = vpow.pop %v2938
        %v2940 = vmul.f32 %v2888, 1.442695
        %v2941 = vpow.pop %v2940
        %v2942 = vmul.f32 %v2889, 1.442695
        %v2943 = vpow.pop %v2942
        %v2944 = vmul.f32 %v2890, 1.442695
        %v2945 = vpow.pop %v2944
        %v2946 = vmul.f32 %v2891, 1.442695
        %v2947 = vpow.pop %v2946
        %v2948 = vmul.f32 %v2892, 1.442695
        %v2949 = vpow.pop %v2948
        %v2950 = vmul.f32 %v2893, 1.442695
        %v2951 = vpow.pop %v2950
        %v2952 = vmul.f32 %v2894, 1.442695
        %v2953 = vpow.pop %v2952
        %v2954 = vmul.f32 %v2895, 1.442695
        %v2955 = vpow.pop %v2954
        %v2956 = vmul.f32 %v2896, 1.442695
        %v2957 = vpow.pop %v2956
        %v2958 = vmul.f32 %v2897, 1.442695
        %v2959 = vpow.pop %v2958
        %v2960 = vmul.f32 %v2898, 1.442695
        %v2961 = vpow.pop %v2960
        %v2962 = vmul.f32 %v2899, 1.442695
        %v2963 = vpow.pop %v2962
        %v2964 = vadd.f32 %v2901, 1.0
        %v2965 = vadd.f32 %v2903, 1.0
        %v2966 = vadd.f32 %v2905, 1.0
        %v2967 = vadd.f32 %v2907, 1.0
        %v2968 = vadd.f32 %v2909, 1.0
        %v2969 = vadd.f32 %v2911, 1.0
        %v2970 = vadd.f32 %v2913, 1.0
        %v2971 = vadd.f32 %v2915, 1.0
        %v2972 = vadd.f32 %v2917, 1.0
        %v2973 = vadd.f32 %v2919, 1.0
        %v2974 = vadd.f32 %v2921, 1.0
        %v2975 = vadd.f32 %v2923, 1.0
        %v2976 = vadd.f32 %v2925, 1.0
        %v2977 = vadd.f32 %v2927, 1.0
        %v2978 = vadd.f32 %v2929, 1.0
        %v2979 = vadd.f32 %v2931, 1.0
        %v2980 = vadd.f32 %v2933, 1.0
        %v2981 = vadd.f32 %v2935, 1.0
        %v2982 = vadd.f32 %v2937, 1.0
        %v2983 = vadd.f32 %v2939, 1.0
        %v2984 = vadd.f32 %v2941, 1.0
        %v2985 = vadd.f32 %v2943, 1.0
        %v2986 = vadd.f32 %v2945, 1.0
        %v2987 = vadd.f32 %v2947, 1.0
        %v2988 = vadd.f32 %v2949, 1.0
        %v2989 = vadd.f32 %v2951, 1.0
        %v2990 = vadd.f32 %v2953, 1.0
        %v2991 = vadd.f32 %v2955, 1.0
        %v2992 = vadd.f32 %v2957, 1.0
        %v2993 = vadd.f32 %v2959, 1.0
        %v2994 = vadd.f32 %v2961, 1.0
        %v2995 = vadd.f32 %v2963, 1.0
        %v2996 = vrcp.pop %v2964
        %v2997 = vmul.f32 %v2964, %v2996
        %v2998 = vsub.f32 1.0, %v2997
        %v2999 = vmul.f32 %v2996, %v2998
        %v3000 = vadd.f32 %v2996, %v2999
        %vm3001 = vweird.f32 %v2964
        %vm3002 = vweird.f32 %v2996
        %vm3003 = vmor %vm3001, %vm3002
        %v3004 = vsel %vm3003, %v2996, %v3000
        %v3005 = vand.u32 2147483647, %v2964
        %vm3006 = vcmp.eq.f32.partialorder %v3005, 8.507059e+37
        %v3007 = vand.u32 %v2964, 2147483648
        %v3008 = vor.u32 1.1754944e-38, %v3007
        %v3009 = vsel %vm3006, %v3008, %v3004
        %v3010 = vmul.f32 1.0, %v3009
        %v3011 = vrcp.pop %v2965
        %v3012 = vmul.f32 %v2965, %v3011
        %v3013 = vsub.f32 1.0, %v3012
        %v3014 = vmul.f32 %v3011, %v3013
        %v3015 = vadd.f32 %v3011, %v3014
        %vm3016 = vweird.f32 %v2965
        %vm3017 = vweird.f32 %v3011
        %vm3018 = vmor %vm3016, %vm3017
        %v3019 = vsel %vm3018, %v3011, %v3015
        %v3020 = vand.u32 2147483647, %v2965
        %vm3021 = vcmp.eq.f32.partialorder %v3020, 8.507059e+37
        %v3022 = vand.u32 %v2965, 2147483648
        %v3023 = vor.u32 1.1754944e-38, %v3022
        %v3024 = vsel %vm3021, %v3023, %v3019
        %v3025 = vmul.f32 1.0, %v3024
        %v3026 = vrcp.pop %v2966
        %v3027 = vmul.f32 %v2966, %v3026
        %v3028 = vsub.f32 1.0, %v3027
        %v3029 = vmul.f32 %v3026, %v3028
        %v3030 = vadd.f32 %v3026, %v3029
        %vm3031 = vweird.f32 %v2966
        %vm3032 = vweird.f32 %v3026
        %vm3033 = vmor %vm3031, %vm3032
        %v3034 = vsel %vm3033, %v3026, %v3030
        %v3035 = vand.u32 2147483647, %v2966
        %vm3036 = vcmp.eq.f32.partialorder %v3035, 8.507059e+37
        %v3037 = vand.u32 %v2966, 2147483648
        %v3038 = vor.u32 1.1754944e-38, %v3037
        %v3039 = vsel %vm3036, %v3038, %v3034
        %v3040 = vmul.f32 1.0, %v3039
        %v3041 = vrcp.pop %v2967
        %v3042 = vmul.f32 %v2967, %v3041
        %v3043 = vsub.f32 1.0, %v3042
        %v3044 = vmul.f32 %v3041, %v3043
        %v3045 = vadd.f32 %v3041, %v3044
        %vm3046 = vweird.f32 %v2967
        %vm3047 = vweird.f32 %v3041
        %vm3048 = vmor %vm3046, %vm3047
        %v3049 = vsel %vm3048, %v3041, %v3045
        %v3050 = vand.u32 2147483647, %v2967
        %vm3051 = vcmp.eq.f32.partialorder %v3050, 8.507059e+37
        %v3052 = vand.u32 %v2967, 2147483648
        %v3053 = vor.u32 1.1754944e-38, %v3052
        %v3054 = vsel %vm3051, %v3053, %v3049
        %v3055 = vmul.f32 1.0, %v3054
        %v3056 = vrcp.pop %v2968
        %v3057 = vmul.f32 %v2968, %v3056
        %v3058 = vsub.f32 1.0, %v3057
        %v3059 = vmul.f32 %v3056, %v3058
        %v3060 = vadd.f32 %v3056, %v3059
        %vm3061 = vweird.f32 %v2968
        %vm3062 = vweird.f32 %v3056
        %vm3063 = vmor %vm3061, %vm3062
        %v3064 = vsel %vm3063, %v3056, %v3060
        %v3065 = vand.u32 2147483647, %v2968
        %vm3066 = vcmp.eq.f32.partialorder %v3065, 8.507059e+37
        %v3067 = vand.u32 %v2968, 2147483648
        %v3068 = vor.u32 1.1754944e-38, %v3067
        %v3069 = vsel %vm3066, %v3068, %v3064
        %v3070 = vmul.f32 1.0, %v3069
        %v3071 = vrcp.pop %v2969
        %v3072 = vmul.f32 %v2969, %v3071
        %v3073 = vsub.f32 1.0, %v3072
        %v3074 = vmul.f32 %v3071, %v3073
        %v3075 = vadd.f32 %v3071, %v3074
        %vm3076 = vweird.f32 %v2969
        %vm3077 = vweird.f32 %v3071
        %vm3078 = vmor %vm3076, %vm3077
        %v3079 = vsel %vm3078, %v3071, %v3075
        %v3080 = vand.u32 2147483647, %v2969
        %vm3081 = vcmp.eq.f32.partialorder %v3080, 8.507059e+37
        %v3082 = vand.u32 %v2969, 2147483648
        %v3083 = vor.u32 1.1754944e-38, %v3082
        %v3084 = vsel %vm3081, %v3083, %v3079
        %v3085 = vmul.f32 1.0, %v3084
        %v3086 = vrcp.pop %v2970
        %v3087 = vmul.f32 %v2970, %v3086
        %v3088 = vsub.f32 1.0, %v3087
        %v3089 = vmul.f32 %v3086, %v3088
        %v3090 = vadd.f32 %v3086, %v3089
        %vm3091 = vweird.f32 %v2970
        %vm3092 = vweird.f32 %v3086
        %vm3093 = vmor %vm3091, %vm3092
        %v3094 = vsel %vm3093, %v3086, %v3090
        %v3095 = vand.u32 2147483647, %v2970
        %vm3096 = vcmp.eq.f32.partialorder %v3095, 8.507059e+37
        %v3097 = vand.u32 %v2970, 2147483648
        %v3098 = vor.u32 1.1754944e-38, %v3097
        %v3099 = vsel %vm3096, %v3098, %v3094
        %v3100 = vmul.f32 1.0, %v3099
        %v3101 = vrcp.pop %v2971
        %v3102 = vmul.f32 %v2971, %v3101
        %v3103 = vsub.f32 1.0, %v3102
        %v3104 = vmul.f32 %v3101, %v3103
        %v3105 = vadd.f32 %v3101, %v3104
        %vm3106 = vweird.f32 %v2971
        %vm3107 = vweird.f32 %v3101
        %vm3108 = vmor %vm3106, %vm3107
        %v3109 = vsel %vm3108, %v3101, %v3105
        %v3110 = vand.u32 2147483647, %v2971
        %vm3111 = vcmp.eq.f32.partialorder %v3110, 8.507059e+37
        %v3112 = vand.u32 %v2971, 2147483648
        %v3113 = vor.u32 1.1754944e-38, %v3112
        %v3114 = vsel %vm3111, %v3113, %v3109
        %v3115 = vmul.f32 1.0, %v3114
        %v3116 = vrcp.pop %v2972
        %v3117 = vmul.f32 %v2972, %v3116
        %v3118 = vsub.f32 1.0, %v3117
        %v3119 = vmul.f32 %v3116, %v3118
        %v3120 = vadd.f32 %v3116, %v3119
        %vm3121 = vweird.f32 %v2972
        %vm3122 = vweird.f32 %v3116
        %vm3123 = vmor %vm3121, %vm3122
        %v3124 = vsel %vm3123, %v3116, %v3120
        %v3125 = vand.u32 2147483647, %v2972
        %vm3126 = vcmp.eq.f32.partialorder %v3125, 8.507059e+37
        %v3127 = vand.u32 %v2972, 2147483648
        %v3128 = vor.u32 1.1754944e-38, %v3127
        %v3129 = vsel %vm3126, %v3128, %v3124
        %v3130 = vmul.f32 1.0, %v3129
        %v3131 = vrcp.pop %v2973
        %v3132 = vmul.f32 %v2973, %v3131
        %v3133 = vsub.f32 1.0, %v3132
        %v3134 = vmul.f32 %v3131, %v3133
        %v3135 = vadd.f32 %v3131, %v3134
        %vm3136 = vweird.f32 %v2973
        %vm3137 = vweird.f32 %v3131
        %vm3138 = vmor %vm3136, %vm3137
        %v3139 = vsel %vm3138, %v3131, %v3135
        %v3140 = vand.u32 2147483647, %v2973
        %vm3141 = vcmp.eq.f32.partialorder %v3140, 8.507059e+37
        %v3142 = vand.u32 %v2973, 2147483648
        %v3143 = vor.u32 1.1754944e-38, %v3142
        %v3144 = vsel %vm3141, %v3143, %v3139
        %v3145 = vmul.f32 1.0, %v3144
        %v3146 = vrcp.pop %v2974
        %v3147 = vmul.f32 %v2974, %v3146
        %v3148 = vsub.f32 1.0, %v3147
        %v3149 = vmul.f32 %v3146, %v3148
        %v3150 = vadd.f32 %v3146, %v3149
        %vm3151 = vweird.f32 %v2974
        %vm3152 = vweird.f32 %v3146
        %vm3153 = vmor %vm3151, %vm3152
        %v3154 = vsel %vm3153, %v3146, %v3150
        %v3155 = vand.u32 2147483647, %v2974
        %vm3156 = vcmp.eq.f32.partialorder %v3155, 8.507059e+37
        %v3157 = vand.u32 %v2974, 2147483648
        %v3158 = vor.u32 1.1754944e-38, %v3157
        %v3159 = vsel %vm3156, %v3158, %v3154
        %v3160 = vmul.f32 1.0, %v3159
        %v3161 = vrcp.pop %v2975
        %v3162 = vmul.f32 %v2975, %v3161
        %v3163 = vsub.f32 1.0, %v3162
        %v3164 = vmul.f32 %v3161, %v3163
        %v3165 = vadd.f32 %v3161, %v3164
        %vm3166 = vweird.f32 %v2975
        %vm3167 = vweird.f32 %v3161
        %vm3168 = vmor %vm3166, %vm3167
        %v3169 = vsel %vm3168, %v3161, %v3165
        %v3170 = vand.u32 2147483647, %v2975
        %vm3171 = vcmp.eq.f32.partialorder %v3170, 8.507059e+37
        %v3172 = vand.u32 %v2975, 2147483648
        %v3173 = vor.u32 1.1754944e-38, %v3172
        %v3174 = vsel %vm3171, %v3173, %v3169
        %v3175 = vmul.f32 1.0, %v3174
        %v3176 = vrcp.pop %v2976
        %v3177 = vmul.f32 %v2976, %v3176
        %v3178 = vsub.f32 1.0, %v3177
        %v3179 = vmul.f32 %v3176, %v3178
        %v3180 = vadd.f32 %v3176, %v3179
        %vm3181 = vweird.f32 %v2976
        %vm3182 = vweird.f32 %v3176
        %vm3183 = vmor %vm3181, %vm3182
        %v3184 = vsel %vm3183, %v3176, %v3180
        %v3185 = vand.u32 2147483647, %v2976
        %vm3186 = vcmp.eq.f32.partialorder %v3185, 8.507059e+37
        %v3187 = vand.u32 %v2976, 2147483648
        %v3188 = vor.u32 1.1754944e-38, %v3187
        %v3189 = vsel %vm3186, %v3188, %v3184
        %v3190 = vmul.f32 1.0, %v3189
        %v3191 = vrcp.pop %v2977
        %v3192 = vmul.f32 %v2977, %v3191
        %v3193 = vsub.f32 1.0, %v3192
        %v3194 = vmul.f32 %v3191, %v3193
        %v3195 = vadd.f32 %v3191, %v3194
        %vm3196 = vweird.f32 %v2977
        %vm3197 = vweird.f32 %v3191
        %vm3198 = vmor %vm3196, %vm3197
        %v3199 = vsel %vm3198, %v3191, %v3195
        %v3200 = vand.u32 2147483647, %v2977
        %vm3201 = vcmp.eq.f32.partialorder %v3200, 8.507059e+37
        %v3202 = vand.u32 %v2977, 2147483648
        %v3203 = vor.u32 1.1754944e-38, %v3202
        %v3204 = vsel %vm3201, %v3203, %v3199
        %v3205 = vmul.f32 1.0, %v3204
        %v3206 = vrcp.pop %v2978
        %v3207 = vmul.f32 %v2978, %v3206
        %v3208 = vsub.f32 1.0, %v3207
        %v3209 = vmul.f32 %v3206, %v3208
        %v3210 = vadd.f32 %v3206, %v3209
        %vm3211 = vweird.f32 %v2978
        %vm3212 = vweird.f32 %v3206
        %vm3213 = vmor %vm3211, %vm3212
        %v3214 = vsel %vm3213, %v3206, %v3210
        %v3215 = vand.u32 2147483647, %v2978
        %vm3216 = vcmp.eq.f32.partialorder %v3215, 8.507059e+37
        %v3217 = vand.u32 %v2978, 2147483648
        %v3218 = vor.u32 1.1754944e-38, %v3217
        %v3219 = vsel %vm3216, %v3218, %v3214
        %v3220 = vmul.f32 1.0, %v3219
        %v3221 = vrcp.pop %v2979
        %v3222 = vmul.f32 %v2979, %v3221
        %v3223 = vsub.f32 1.0, %v3222
        %v3224 = vmul.f32 %v3221, %v3223
        %v3225 = vadd.f32 %v3221, %v3224
        %vm3226 = vweird.f32 %v2979
        %vm3227 = vweird.f32 %v3221
        %vm3228 = vmor %vm3226, %vm3227
        %v3229 = vsel %vm3228, %v3221, %v3225
        %v3230 = vand.u32 2147483647, %v2979
        %vm3231 = vcmp.eq.f32.partialorder %v3230, 8.507059e+37
        %v3232 = vand.u32 %v2979, 2147483648
        %v3233 = vor.u32 1.1754944e-38, %v3232
        %v3234 = vsel %vm3231, %v3233, %v3229
        %v3235 = vmul.f32 1.0, %v3234
        %v3236 = vrcp.pop %v2980
        %v3237 = vmul.f32 %v2980, %v3236
        %v3238 = vsub.f32 1.0, %v3237
        %v3239 = vmul.f32 %v3236, %v3238
        %v3240 = vadd.f32 %v3236, %v3239
        %vm3241 = vweird.f32 %v2980
        %vm3242 = vweird.f32 %v3236
        %vm3243 = vmor %vm3241, %vm3242
        %v3244 = vsel %vm3243, %v3236, %v3240
        %v3245 = vand.u32 2147483647, %v2980
        %vm3246 = vcmp.eq.f32.partialorder %v3245, 8.507059e+37
        %v3247 = vand.u32 %v2980, 2147483648
        %v3248 = vor.u32 1.1754944e-38, %v3247
        %v3249 = vsel %vm3246, %v3248, %v3244
        %v3250 = vmul.f32 1.0, %v3249
        %v3251 = vrcp.pop %v2981
        %v3252 = vmul.f32 %v2981, %v3251
        %v3253 = vsub.f32 1.0, %v3252
        %v3254 = vmul.f32 %v3251, %v3253
        %v3255 = vadd.f32 %v3251, %v3254
        %vm3256 = vweird.f32 %v2981
        %vm3257 = vweird.f32 %v3251
        %vm3258 = vmor %vm3256, %vm3257
        %v3259 = vsel %vm3258, %v3251, %v3255
        %v3260 = vand.u32 2147483647, %v2981
        %vm3261 = vcmp.eq.f32.partialorder %v3260, 8.507059e+37
        %v3262 = vand.u32 %v2981, 2147483648
        %v3263 = vor.u32 1.1754944e-38, %v3262
        %v3264 = vsel %vm3261, %v3263, %v3259
        %v3265 = vmul.f32 1.0, %v3264
        %v3266 = vrcp.pop %v2982
        %v3267 = vmul.f32 %v2982, %v3266
        %v3268 = vsub.f32 1.0, %v3267
        %v3269 = vmul.f32 %v3266, %v3268
        %v3270 = vadd.f32 %v3266, %v3269
        %vm3271 = vweird.f32 %v2982
        %vm3272 = vweird.f32 %v3266
        %vm3273 = vmor %vm3271, %vm3272
        %v3274 = vsel %vm3273, %v3266, %v3270
        %v3275 = vand.u32 2147483647, %v2982
        %vm3276 = vcmp.eq.f32.partialorder %v3275, 8.507059e+37
        %v3277 = vand.u32 %v2982, 2147483648
        %v3278 = vor.u32 1.1754944e-38, %v3277
        %v3279 = vsel %vm3276, %v3278, %v3274
        %v3280 = vmul.f32 1.0, %v3279
        %v3281 = vrcp.pop %v2983
        %v3282 = vmul.f32 %v2983, %v3281
        %v3283 = vsub.f32 1.0, %v3282
        %v3284 = vmul.f32 %v3281, %v3283
        %v3285 = vadd.f32 %v3281, %v3284
        %vm3286 = vweird.f32 %v2983
        %vm3287 = vweird.f32 %v3281
        %vm3288 = vmor %vm3286, %vm3287
        %v3289 = vsel %vm3288, %v3281, %v3285
        %v3290 = vand.u32 2147483647, %v2983
        %vm3291 = vcmp.eq.f32.partialorder %v3290, 8.507059e+37
        %v3292 = vand.u32 %v2983, 2147483648
        %v3293 = vor.u32 1.1754944e-38, %v3292
        %v3294 = vsel %vm3291, %v3293, %v3289
        %v3295 = vmul.f32 1.0, %v3294
        %v3296 = vrcp.pop %v2984
        %v3297 = vmul.f32 %v2984, %v3296
        %v3298 = vsub.f32 1.0, %v3297
        %v3299 = vmul.f32 %v3296, %v3298
        %v3300 = vadd.f32 %v3296, %v3299
        %vm3301 = vweird.f32 %v2984
        %vm3302 = vweird.f32 %v3296
        %vm3303 = vmor %vm3301, %vm3302
        %v3304 = vsel %vm3303, %v3296, %v3300
        %v3305 = vand.u32 2147483647, %v2984
        %vm3306 = vcmp.eq.f32.partialorder %v3305, 8.507059e+37
        %v3307 = vand.u32 %v2984, 2147483648
        %v3308 = vor.u32 1.1754944e-38, %v3307
        %v3309 = vsel %vm3306, %v3308, %v3304
        %v3310 = vmul.f32 1.0, %v3309
        %v3311 = vrcp.pop %v2985
        %v3312 = vmul.f32 %v2985, %v3311
        %v3313 = vsub.f32 1.0, %v3312
        %v3314 = vmul.f32 %v3311, %v3313
        %v3315 = vadd.f32 %v3311, %v3314
        %vm3316 = vweird.f32 %v2985
        %vm3317 = vweird.f32 %v3311
        %vm3318 = vmor %vm3316, %vm3317
        %v3319 = vsel %vm3318, %v3311, %v3315
        %v3320 = vand.u32 2147483647, %v2985
        %vm3321 = vcmp.eq.f32.partialorder %v3320, 8.507059e+37
        %v3322 = vand.u32 %v2985, 2147483648
        %v3323 = vor.u32 1.1754944e-38, %v3322
        %v3324 = vsel %vm3321, %v3323, %v3319
        %v3325 = vmul.f32 1.0, %v3324
        %v3326 = vrcp.pop %v2986
        %v3327 = vmul.f32 %v2986, %v3326
        %v3328 = vsub.f32 1.0, %v3327
        %v3329 = vmul.f32 %v3326, %v3328
        %v3330 = vadd.f32 %v3326, %v3329
        %vm3331 = vweird.f32 %v2986
        %vm3332 = vweird.f32 %v3326
        %vm3333 = vmor %vm3331, %vm3332
        %v3334 = vsel %vm3333, %v3326, %v3330
        %v3335 = vand.u32 2147483647, %v2986
        %vm3336 = vcmp.eq.f32.partialorder %v3335, 8.507059e+37
        %v3337 = vand.u32 %v2986, 2147483648
        %v3338 = vor.u32 1.1754944e-38, %v3337
        %v3339 = vsel %vm3336, %v3338, %v3334
        %v3340 = vmul.f32 1.0, %v3339
        %v3341 = vrcp.pop %v2987
        %v3342 = vmul.f32 %v2987, %v3341
        %v3343 = vsub.f32 1.0, %v3342
        %v3344 = vmul.f32 %v3341, %v3343
        %v3345 = vadd.f32 %v3341, %v3344
        %vm3346 = vweird.f32 %v2987
        %vm3347 = vweird.f32 %v3341
        %vm3348 = vmor %vm3346, %vm3347
        %v3349 = vsel %vm3348, %v3341, %v3345
        %v3350 = vand.u32 2147483647, %v2987
        %vm3351 = vcmp.eq.f32.partialorder %v3350, 8.507059e+37
        %v3352 = vand.u32 %v2987, 2147483648
        %v3353 = vor.u32 1.1754944e-38, %v3352
        %v3354 = vsel %vm3351, %v3353, %v3349
        %v3355 = vmul.f32 1.0, %v3354
        %v3356 = vrcp.pop %v2988
        %v3357 = vmul.f32 %v2988, %v3356
        %v3358 = vsub.f32 1.0, %v3357
        %v3359 = vmul.f32 %v3356, %v3358
        %v3360 = vadd.f32 %v3356, %v3359
        %vm3361 = vweird.f32 %v2988
        %vm3362 = vweird.f32 %v3356
        %vm3363 = vmor %vm3361, %vm3362
        %v3364 = vsel %vm3363, %v3356, %v3360
        %v3365 = vand.u32 2147483647, %v2988
        %vm3366 = vcmp.eq.f32.partialorder %v3365, 8.507059e+37
        %v3367 = vand.u32 %v2988, 2147483648
        %v3368 = vor.u32 1.1754944e-38, %v3367
        %v3369 = vsel %vm3366, %v3368, %v3364
        %v3370 = vmul.f32 1.0, %v3369
        %v3371 = vrcp.pop %v2989
        %v3372 = vmul.f32 %v2989, %v3371
        %v3373 = vsub.f32 1.0, %v3372
        %v3374 = vmul.f32 %v3371, %v3373
        %v3375 = vadd.f32 %v3371, %v3374
        %vm3376 = vweird.f32 %v2989
        %vm3377 = vweird.f32 %v3371
        %vm3378 = vmor %vm3376, %vm3377
        %v3379 = vsel %vm3378, %v3371, %v3375
        %v3380 = vand.u32 2147483647, %v2989
        %vm3381 = vcmp.eq.f32.partialorder %v3380, 8.507059e+37
        %v3382 = vand.u32 %v2989, 2147483648
        %v3383 = vor.u32 1.1754944e-38, %v3382
        %v3384 = vsel %vm3381, %v3383, %v3379
        %v3385 = vmul.f32 1.0, %v3384
        %v3386 = vrcp.pop %v2990
        %v3387 = vmul.f32 %v2990, %v3386
        %v3388 = vsub.f32 1.0, %v3387
        %v3389 = vmul.f32 %v3386, %v3388
        %v3390 = vadd.f32 %v3386, %v3389
        %vm3391 = vweird.f32 %v2990
        %vm3392 = vweird.f32 %v3386
        %vm3393 = vmor %vm3391, %vm3392
        %v3394 = vsel %vm3393, %v3386, %v3390
        %v3395 = vand.u32 2147483647, %v2990
        %vm3396 = vcmp.eq.f32.partialorder %v3395, 8.507059e+37
        %v3397 = vand.u32 %v2990, 2147483648
        %v3398 = vor.u32 1.1754944e-38, %v3397
        %v3399 = vsel %vm3396, %v3398, %v3394
        %v3400 = vmul.f32 1.0, %v3399
        %v3401 = vrcp.pop %v2991
        %v3402 = vmul.f32 %v2991, %v3401
        %v3403 = vsub.f32 1.0, %v3402
        %v3404 = vmul.f32 %v3401, %v3403
        %v3405 = vadd.f32 %v3401, %v3404
        %vm3406 = vweird.f32 %v2991
        %vm3407 = vweird.f32 %v3401
        %vm3408 = vmor %vm3406, %vm3407
        %v3409 = vsel %vm3408, %v3401, %v3405
        %v3410 = vand.u32 2147483647, %v2991
        %vm3411 = vcmp.eq.f32.partialorder %v3410, 8.507059e+37
        %v3412 = vand.u32 %v2991, 2147483648
        %v3413 = vor.u32 1.1754944e-38, %v3412
        %v3414 = vsel %vm3411, %v3413, %v3409
        %v3415 = vmul.f32 1.0, %v3414
        %v3416 = vrcp.pop %v2992
        %v3417 = vmul.f32 %v2992, %v3416
        %v3418 = vsub.f32 1.0, %v3417
        %v3419 = vmul.f32 %v3416, %v3418
        %v3420 = vadd.f32 %v3416, %v3419
        %vm3421 = vweird.f32 %v2992
        %vm3422 = vweird.f32 %v3416
        %vm3423 = vmor %vm3421, %vm3422
        %v3424 = vsel %vm3423, %v3416, %v3420
        %v3425 = vand.u32 2147483647, %v2992
        %vm3426 = vcmp.eq.f32.partialorder %v3425, 8.507059e+37
        %v3427 = vand.u32 %v2992, 2147483648
        %v3428 = vor.u32 1.1754944e-38, %v3427
        %v3429 = vsel %vm3426, %v3428, %v3424
        %v3430 = vmul.f32 1.0, %v3429
        %v3431 = vrcp.pop %v2993
        %v3432 = vmul.f32 %v2993, %v3431
        %v3433 = vsub.f32 1.0, %v3432
        %v3434 = vmul.f32 %v3431, %v3433
        %v3435 = vadd.f32 %v3431, %v3434
        %vm3436 = vweird.f32 %v2993
        %vm3437 = vweird.f32 %v3431
        %vm3438 = vmor %vm3436, %vm3437
        %v3439 = vsel %vm3438, %v3431, %v3435
        %v3440 = vand.u32 2147483647, %v2993
        %vm3441 = vcmp.eq.f32.partialorder %v3440, 8.507059e+37
        %v3442 = vand.u32 %v2993, 2147483648
        %v3443 = vor.u32 1.1754944e-38, %v3442
        %v3444 = vsel %vm3441, %v3443, %v3439
        %v3445 = vmul.f32 1.0, %v3444
        %v3446 = vrcp.pop %v2994
        %v3447 = vmul.f32 %v2994, %v3446
        %v3448 = vsub.f32 1.0, %v3447
        %v3449 = vmul.f32 %v3446, %v3448
        %v3450 = vadd.f32 %v3446, %v3449
        %vm3451 = vweird.f32 %v2994
        %vm3452 = vweird.f32 %v3446
        %vm3453 = vmor %vm3451, %vm3452
        %v3454 = vsel %vm3453, %v3446, %v3450
        %v3455 = vand.u32 2147483647, %v2994
        %vm3456 = vcmp.eq.f32.partialorder %v3455, 8.507059e+37
        %v3457 = vand.u32 %v2994, 2147483648
        %v3458 = vor.u32 1.1754944e-38, %v3457
        %v3459 = vsel %vm3456, %v3458, %v3454
        %v3460 = vmul.f32 1.0, %v3459
        %v3461 = vrcp.pop %v2995
        %v3462 = vmul.f32 %v2995, %v3461
        %v3463 = vsub.f32 1.0, %v3462
        %v3464 = vmul.f32 %v3461, %v3463
        %v3465 = vadd.f32 %v3461, %v3464
        %vm3466 = vweird.f32 %v2995
        %vm3467 = vweird.f32 %v3461
        %vm3468 = vmor %vm3466, %vm3467
        %v3469 = vsel %vm3468, %v3461, %v3465
        %v3470 = vand.u32 2147483647, %v2995
        %vm3471 = vcmp.eq.f32.partialorder %v3470, 8.507059e+37
        %v3472 = vand.u32 %v2995, 2147483648
        %v3473 = vor.u32 1.1754944e-38, %v3472
        %v3474 = vsel %vm3471, %v3473, %v3469
        %v3475 = vmul.f32 1.0, %v3474
        %v3476 = vtanh.pop %v2837
        %v3477 = vtanh.pop %v2839
        %v3478 = vtanh.pop %v2841
        %v3479 = vtanh.pop %v2843
        %v3480 = vtanh.pop %v2845
        %v3481 = vtanh.pop %v2847
        %v3482 = vtanh.pop %v2849
        %v3483 = vtanh.pop %v2851
        %v3484 = vtanh.pop %v2853
        %v3485 = vtanh.pop %v2855
        %v3486 = vtanh.pop %v2857
        %v3487 = vtanh.pop %v2859
        %v3488 = vtanh.pop %v2861
        %v3489 = vtanh.pop %v2863
        %v3490 = vtanh.pop %v2865
        %v3491 = vtanh.pop %v2867
        %v3492 = vmul.f32 %v3010, %v2546
        %v3493 = vmul.f32 %v3040, %v2547
        %v3494 = vmul.f32 %v3070, %v2548
        %v3495 = vmul.f32 %v3100, %v2549
        %v3496 = vmul.f32 %v3130, %v2550
        %v3497 = vmul.f32 %v3160, %v2551
        %v3498 = vmul.f32 %v3190, %v2552
        %v3499 = vmul.f32 %v3220, %v2553
        %v3500 = vmul.f32 %v3250, %v2554
        %v3501 = vmul.f32 %v3280, %v2555
        %v3502 = vmul.f32 %v3310, %v2556
        %v3503 = vmul.f32 %v3340, %v2557
        %v3504 = vmul.f32 %v3370, %v2558
        %v3505 = vmul.f32 %v3400, %v2559
        %v3506 = vmul.f32 %v3430, %v2560
        %v3507 = vmul.f32 %v3460, %v2561
        %3524 = vrot.lane.b32.xlu0 %v3476, 64
        %v3525 = vpop.permute.xlu0 %3524
        %3526 = vrot.lane.b32.xlu0 %v3477, 64
        %v3527 = vpop.permute.xlu0 %3526
        %3528 = vrot.lane.b32.xlu0 %v3478, 64
        %v3529 = vpop.permute.xlu0 %3528
        %3530 = vrot.lane.b32.xlu0 %v3479, 64
        %v3531 = vpop.permute.xlu0 %3530
        %3532 = vrot.lane.b32.xlu0 %v3480, 64
        %v3533 = vpop.permute.xlu0 %3532
        %3534 = vrot.lane.b32.xlu0 %v3481, 64
        %v3535 = vpop.permute.xlu0 %3534
        %3536 = vrot.lane.b32.xlu0 %v3482, 64
        %v3537 = vpop.permute.xlu0 %3536
        %3538 = vrot.lane.b32.xlu0 %v3483, 64
        %v3539 = vpop.permute.xlu0 %3538
        %3540 = vrot.lane.b32.xlu0 %v3484, 64
        %v3541 = vpop.permute.xlu0 %3540
        %3542 = vrot.lane.b32.xlu0 %v3485, 64
        %v3543 = vpop.permute.xlu0 %3542
        %3544 = vrot.lane.b32.xlu0 %v3486, 64
        %v3545 = vpop.permute.xlu0 %3544
        %3546 = vrot.lane.b32.xlu0 %v3487, 64
        %v3547 = vpop.permute.xlu0 %3546
        %3548 = vrot.lane.b32.xlu0 %v3488, 64
        %v3549 = vpop.permute.xlu0 %3548
        %3550 = vrot.lane.b32.xlu0 %v3489, 64
        %v3551 = vpop.permute.xlu0 %3550
        %3552 = vrot.lane.b32.xlu0 %v3490, 64
        %v3553 = vpop.permute.xlu0 %3552
        %3554 = vrot.lane.b32.xlu0 %v3491, 64
        %v3555 = vpop.permute.xlu0 %3554
        %v3572 = vmul.f32 %v3010, %v3525
        %v3573 = vmul.f32 %v3040, %v3527
        %v3574 = vmul.f32 %v3070, %v3529
        %v3575 = vmul.f32 %v3100, %v3531
        %v3576 = vmul.f32 %v3130, %v3533
        %v3577 = vmul.f32 %v3160, %v3535
        %v3578 = vmul.f32 %v3190, %v3537
        %v3579 = vmul.f32 %v3220, %v3539
        %v3580 = vmul.f32 %v3250, %v3541
        %v3581 = vmul.f32 %v3280, %v3543
        %v3582 = vmul.f32 %v3310, %v3545
        %v3583 = vmul.f32 %v3340, %v3547
        %v3584 = vmul.f32 %v3370, %v3549
        %v3585 = vmul.f32 %v3400, %v3551
        %v3586 = vmul.f32 %v3430, %v3553
        %v3587 = vmul.f32 %v3460, %v3555
        %3604 = vrot.lane.b32.xlu0 %v3572, 64
        %v3605 = vpop.permute.xlu0 %3604
        %3606 = vrot.lane.b32.xlu0 %v3573, 64
        %v3607 = vpop.permute.xlu0 %3606
        %3608 = vrot.lane.b32.xlu0 %v3574, 64
        %v3609 = vpop.permute.xlu0 %3608
        %3610 = vrot.lane.b32.xlu0 %v3575, 64
        %v3611 = vpop.permute.xlu0 %3610
        %3612 = vrot.lane.b32.xlu0 %v3576, 64
        %v3613 = vpop.permute.xlu0 %3612
        %3614 = vrot.lane.b32.xlu0 %v3577, 64
        %v3615 = vpop.permute.xlu0 %3614
        %3616 = vrot.lane.b32.xlu0 %v3578, 64
        %v3617 = vpop.permute.xlu0 %3616
        %3618 = vrot.lane.b32.xlu0 %v3579, 64
        %v3619 = vpop.permute.xlu0 %3618
        %3620 = vrot.lane.b32.xlu0 %v3580, 64
        %v3621 = vpop.permute.xlu0 %3620
        %3622 = vrot.lane.b32.xlu0 %v3581, 64
        %v3623 = vpop.permute.xlu0 %3622
        %3624 = vrot.lane.b32.xlu0 %v3582, 64
        %v3625 = vpop.permute.xlu0 %3624
        %3626 = vrot.lane.b32.xlu0 %v3583, 64
        %v3627 = vpop.permute.xlu0 %3626
        %3628 = vrot.lane.b32.xlu0 %v3584, 64
        %v3629 = vpop.permute.xlu0 %3628
        %3630 = vrot.lane.b32.xlu0 %v3585, 64
        %v3631 = vpop.permute.xlu0 %3630
        %3632 = vrot.lane.b32.xlu0 %v3586, 64
        %v3633 = vpop.permute.xlu0 %3632
        %3634 = vrot.lane.b32.xlu0 %v3587, 64
        %v3635 = vpop.permute.xlu0 %3634
        %v3652 = vadd.f32 %v3492, %v3605
        %v3653 = vadd.f32 %v3493, %v3607
        %v3654 = vadd.f32 %v3494, %v3609
        %v3655 = vadd.f32 %v3495, %v3611
        %v3656 = vadd.f32 %v3496, %v3613
        %v3657 = vadd.f32 %v3497, %v3615
        %v3658 = vadd.f32 %v3498, %v3617
        %v3659 = vadd.f32 %v3499, %v3619
        %v3660 = vadd.f32 %v3500, %v3621
        %v3661 = vadd.f32 %v3501, %v3623
        %v3662 = vadd.f32 %v3502, %v3625
        %v3663 = vadd.f32 %v3503, %v3627
        %v3664 = vadd.f32 %v3504, %v3629
        %v3665 = vadd.f32 %v3505, %v3631
        %v3666 = vadd.f32 %v3506, %v3633
        %v3667 = vadd.f32 %v3507, %v3635
        %v3668 = vtanh.pop %v3652
        %v3669 = vtanh.pop %v3653
        %v3670 = vtanh.pop %v3654
        %v3671 = vtanh.pop %v3655
        %v3672 = vtanh.pop %v3656
        %v3673 = vtanh.pop %v3657
        %v3674 = vtanh.pop %v3658
        %v3675 = vtanh.pop %v3659
        %v3676 = vtanh.pop %v3660
        %v3677 = vtanh.pop %v3661
        %v3678 = vtanh.pop %v3662
        %v3679 = vtanh.pop %v3663
        %v3680 = vtanh.pop %v3664
        %v3681 = vtanh.pop %v3665
        %v3682 = vtanh.pop %v3666
        %v3683 = vtanh.pop %v3667
        %3700 = vrot.lane.b32.xlu0 %v3668, 64
        %v3701 = vpop.permute.xlu0 %3700
        %3702 = vrot.lane.b32.xlu0 %v3669, 64
        %v3703 = vpop.permute.xlu0 %3702
        %3704 = vrot.lane.b32.xlu0 %v3670, 64
        %v3705 = vpop.permute.xlu0 %3704
        %3706 = vrot.lane.b32.xlu0 %v3671, 64
        %v3707 = vpop.permute.xlu0 %3706
        %3708 = vrot.lane.b32.xlu0 %v3672, 64
        %v3709 = vpop.permute.xlu0 %3708
        %3710 = vrot.lane.b32.xlu0 %v3673, 64
        %v3711 = vpop.permute.xlu0 %3710
        %3712 = vrot.lane.b32.xlu0 %v3674, 64
        %v3713 = vpop.permute.xlu0 %3712
        %3714 = vrot.lane.b32.xlu0 %v3675, 64
        %v3715 = vpop.permute.xlu0 %3714
        %3716 = vrot.lane.b32.xlu0 %v3676, 64
        %v3717 = vpop.permute.xlu0 %3716
        %3718 = vrot.lane.b32.xlu0 %v3677, 64
        %v3719 = vpop.permute.xlu0 %3718
        %3720 = vrot.lane.b32.xlu0 %v3678, 64
        %v3721 = vpop.permute.xlu0 %3720
        %3722 = vrot.lane.b32.xlu0 %v3679, 64
        %v3723 = vpop.permute.xlu0 %3722
        %3724 = vrot.lane.b32.xlu0 %v3680, 64
        %v3725 = vpop.permute.xlu0 %3724
        %3726 = vrot.lane.b32.xlu0 %v3681, 64
        %v3727 = vpop.permute.xlu0 %3726
        %3728 = vrot.lane.b32.xlu0 %v3682, 64
        %v3729 = vpop.permute.xlu0 %3728
        %3730 = vrot.lane.b32.xlu0 %v3683, 64
        %v3731 = vpop.permute.xlu0 %3730
        %v3748 = vmul.f32 %v3025, %v3701
        %v3749 = vmul.f32 %v3055, %v3703
        %v3750 = vmul.f32 %v3085, %v3705
        %v3751 = vmul.f32 %v3115, %v3707
        %v3752 = vmul.f32 %v3145, %v3709
        %v3753 = vmul.f32 %v3175, %v3711
        %v3754 = vmul.f32 %v3205, %v3713
        %v3755 = vmul.f32 %v3235, %v3715
        %v3756 = vmul.f32 %v3265, %v3717
        %v3757 = vmul.f32 %v3295, %v3719
        %v3758 = vmul.f32 %v3325, %v3721
        %v3759 = vmul.f32 %v3355, %v3723
        %v3760 = vmul.f32 %v3385, %v3725
        %v3761 = vmul.f32 %v3415, %v3727
        %v3762 = vmul.f32 %v3445, %v3729
        %v3763 = vmul.f32 %v3475, %v3731
        %v3764 = vadd.f32 %v2658, %v3748
        %v3765 = vadd.f32 %v2659, %v3749
        %v3766 = vadd.f32 %v2660, %v3750
        %v3767 = vadd.f32 %v2661, %v3751
        %v3768 = vadd.f32 %v2662, %v3752
        %v3769 = vadd.f32 %v2663, %v3753
        %v3770 = vadd.f32 %v2664, %v3754
        %v3771 = vadd.f32 %v2665, %v3755
        %v3772 = vadd.f32 %v2666, %v3756
        %v3773 = vadd.f32 %v2667, %v3757
        %v3774 = vadd.f32 %v2668, %v3758
        %v3775 = vadd.f32 %v2669, %v3759
        %v3776 = vadd.f32 %v2670, %v3760
        %v3777 = vadd.f32 %v2671, %v3761
        %v3778 = vadd.f32 %v2672, %v3762
        %v3779 = vadd.f32 %v2673, %v3763
        %v3780 = vld [vmem:[#allocation2 + $0x200] sm:$0xff]
        %v3781 = vld [vmem:[#allocation2 + $0x208] sm:$0xff]
        %v3782 = vld [vmem:[#allocation2 + $0x210] sm:$0xff]
        %v3783 = vld [vmem:[#allocation2 + $0x218] sm:$0xff]
        %v3784 = vld [vmem:[#allocation2 + $0x220] sm:$0xff]
        %v3785 = vld [vmem:[#allocation2 + $0x228] sm:$0xff]
        %v3786 = vld [vmem:[#allocation2 + $0x230] sm:$0xff]
        %v3787 = vld [vmem:[#allocation2 + $0x238] sm:$0xff]
        %v3788 = vld [vmem:[#allocation2 + $0x240] sm:$0xff]
        %v3789 = vld [vmem:[#allocation2 + $0x248] sm:$0xff]
        %v3790 = vld [vmem:[#allocation2 + $0x250] sm:$0xff]
        %v3791 = vld [vmem:[#allocation2 + $0x258] sm:$0xff]
        %v3792 = vld [vmem:[#allocation2 + $0x260] sm:$0xff]
        %v3793 = vld [vmem:[#allocation2 + $0x268] sm:$0xff]
        %v3794 = vld [vmem:[#allocation2 + $0x270] sm:$0xff]
        %v3795 = vld [vmem:[#allocation2 + $0x278] sm:$0xff]
        %v3796 = vld [vmem:[#allocation2 + $0x280] sm:$0xff]
        %v3797 = vld [vmem:[#allocation2 + $0x288] sm:$0xff]
        %v3798 = vld [vmem:[#allocation2 + $0x290] sm:$0xff]
        %v3799 = vld [vmem:[#allocation2 + $0x298] sm:$0xff]
        %v3800 = vld [vmem:[#allocation2 + $0x2a0] sm:$0xff]
        %v3801 = vld [vmem:[#allocation2 + $0x2a8] sm:$0xff]
        %v3802 = vld [vmem:[#allocation2 + $0x2b0] sm:$0xff]
        %v3803 = vld [vmem:[#allocation2 + $0x2b8] sm:$0xff]
        %v3804 = vld [vmem:[#allocation2 + $0x2c0] sm:$0xff]
        %v3805 = vld [vmem:[#allocation2 + $0x2c8] sm:$0xff]
        %v3806 = vld [vmem:[#allocation2 + $0x2d0] sm:$0xff]
        %v3807 = vld [vmem:[#allocation2 + $0x2d8] sm:$0xff]
        %v3808 = vld [vmem:[#allocation2 + $0x2e0] sm:$0xff]
        %v3809 = vld [vmem:[#allocation2 + $0x2e8] sm:$0xff]
        %v3810 = vld [vmem:[#allocation2 + $0x2f0] sm:$0xff]
        %v3811 = vld [vmem:[#allocation2 + $0x2f8] sm:$0xff]
        %v3812 = vpack.c.bf16 %v3749, %v3748
        %v3813 = vpack.c.bf16 %v3751, %v3750
        %v3814 = vpack.c.bf16 %v3753, %v3752
        %v3815 = vpack.c.bf16 %v3755, %v3754
        %v3816 = vpack.c.bf16 %v3757, %v3756
        %v3817 = vpack.c.bf16 %v3759, %v3758
        %v3818 = vpack.c.bf16 %v3761, %v3760
        %v3819 = vpack.c.bf16 %v3763, %v3762
        %v3821 = vsel %vm641, %v3812, 0
        %v3824 = vsel %vm641, %v3813, 0
        %v3827 = vsel %vm641, %v3814, 0
        %v3830 = vsel %vm641, %v3815, 0
        %v3833 = vsel %vm641, %v3816, 0
        %v3836 = vsel %vm641, %v3817, 0
        %v3839 = vsel %vm641, %v3818, 0
        %v3842 = vsel %vm641, %v3819, 0
        %3844 = vmatpush.bf16.msra.mxu0 0
        %3845 = vmatpush.bf16.msra.mxu0 0
        %3846 = vmatpush.bf16.msra.mxu0 0
        %3847 = vmatpush.bf16.msra.mxu0 0
        %3848 = vmatpush.bf16.msra.mxu0 %v1619
        %3849 = vmatpush.bf16.msra.mxu0 %v1617
        %3850 = vmatpush.bf16.msra.mxu0 %v1615
        %3851 = vmatpush.bf16.msra.mxu0 %v1613
        %3852 = vmatmul.bf16.gmra.mxu0 %v3821
        %v3853 = vpop.f32.mrf.mxu0
        %v3854 = vadd.f32 0.0, %v3853
        %v3855 = vpop.f32.mrf.mxu0
        %v3856 = vadd.f32 0.0, %v3855
        %3857 = vmatmul.bf16.gmra.mxu0 %v3824
        %v3858 = vpop.f32.mrf.mxu0
        %v3859 = vadd.f32 0.0, %v3858
        %v3860 = vpop.f32.mrf.mxu0
        %v3861 = vadd.f32 0.0, %v3860
        %3862 = vmatmul.bf16.gmra.mxu0 %v3827
        %v3863 = vpop.f32.mrf.mxu0
        %v3864 = vadd.f32 0.0, %v3863
        %v3865 = vpop.f32.mrf.mxu0
        %v3866 = vadd.f32 0.0, %v3865
        %3867 = vmatmul.bf16.gmra.mxu0 %v3830
        %v3868 = vpop.f32.mrf.mxu0
        %v3869 = vadd.f32 0.0, %v3868
        %v3870 = vpop.f32.mrf.mxu0
        %v3871 = vadd.f32 0.0, %v3870
        %3872 = vmatmul.bf16.gmra.mxu0 %v3833
        %v3873 = vpop.f32.mrf.mxu0
        %v3874 = vadd.f32 0.0, %v3873
        %v3875 = vpop.f32.mrf.mxu0
        %v3876 = vadd.f32 0.0, %v3875
        %3877 = vmatmul.bf16.gmra.mxu0 %v3836
        %v3878 = vpop.f32.mrf.mxu0
        %v3879 = vadd.f32 0.0, %v3878
        %v3880 = vpop.f32.mrf.mxu0
        %v3881 = vadd.f32 0.0, %v3880
        %3882 = vmatmul.bf16.gmra.mxu0 %v3839
        %v3883 = vpop.f32.mrf.mxu0
        %v3884 = vadd.f32 0.0, %v3883
        %v3885 = vpop.f32.mrf.mxu0
        %v3886 = vadd.f32 0.0, %v3885
        %3887 = vmatmul.bf16.gmra.mxu0 %v3842
        %v3888 = vpop.f32.mrf.mxu0
        %v3889 = vadd.f32 0.0, %v3888
        %v3890 = vpop.f32.mrf.mxu0
        %v3891 = vadd.f32 0.0, %v3890
        %3892 = vdwg.mxu0
        %3893 = vmatpush.bf16.msra.mxu0 0
        %3894 = vmatpush.bf16.msra.mxu0 0
        %3895 = vmatpush.bf16.msra.mxu0 0
        %3896 = vmatpush.bf16.msra.mxu0 0
        %3897 = vmatpush.bf16.msra.mxu0 %v1620
        %3898 = vmatpush.bf16.msra.mxu0 %v1618
        %3899 = vmatpush.bf16.msra.mxu0 %v1616
        %3900 = vmatpush.bf16.msra.mxu0 %v1614
        %3901 = vmatmul.bf16.gmra.mxu0 %v3821
        %v3902 = vpop.f32.mrf.mxu0
        %v3903 = vadd.f32 0.0, %v3902
        %v3904 = vpop.f32.mrf.mxu0
        %v3905 = vadd.f32 0.0, %v3904
        %3906 = vmatmul.bf16.gmra.mxu0 %v3824
        %v3907 = vpop.f32.mrf.mxu0
        %v3908 = vadd.f32 0.0, %v3907
        %v3909 = vpop.f32.mrf.mxu0
        %v3910 = vadd.f32 0.0, %v3909
        %3911 = vmatmul.bf16.gmra.mxu0 %v3827
        %v3912 = vpop.f32.mrf.mxu0
        %v3913 = vadd.f32 0.0, %v3912
        %v3914 = vpop.f32.mrf.mxu0
        %v3915 = vadd.f32 0.0, %v3914
        %3916 = vmatmul.bf16.gmra.mxu0 %v3830
        %v3917 = vpop.f32.mrf.mxu0
        %v3918 = vadd.f32 0.0, %v3917
        %v3919 = vpop.f32.mrf.mxu0
        %v3920 = vadd.f32 0.0, %v3919
        %3921 = vmatmul.bf16.gmra.mxu0 %v3833
        %v3922 = vpop.f32.mrf.mxu0
        %v3923 = vadd.f32 0.0, %v3922
        %v3924 = vpop.f32.mrf.mxu0
        %v3925 = vadd.f32 0.0, %v3924
        %3926 = vmatmul.bf16.gmra.mxu0 %v3836
        %v3927 = vpop.f32.mrf.mxu0
        %v3928 = vadd.f32 0.0, %v3927
        %v3929 = vpop.f32.mrf.mxu0
        %v3930 = vadd.f32 0.0, %v3929
        %3931 = vmatmul.bf16.gmra.mxu0 %v3839
        %v3932 = vpop.f32.mrf.mxu0
        %v3933 = vadd.f32 0.0, %v3932
        %v3934 = vpop.f32.mrf.mxu0
        %v3935 = vadd.f32 0.0, %v3934
        %3936 = vmatmul.bf16.gmra.mxu0 %v3842
        %v3937 = vpop.f32.mrf.mxu0
        %v3938 = vadd.f32 0.0, %v3937
        %v3939 = vpop.f32.mrf.mxu0
        %v3940 = vadd.f32 0.0, %v3939
        %3941 = vdwg.mxu0
        %v3942 = vadd.f32 %v3780, %v3854
        %v3943 = vadd.f32 %v3781, %v3903
        %v3944 = vadd.f32 %v3782, %v3856
        %v3945 = vadd.f32 %v3783, %v3905
        %v3946 = vadd.f32 %v3784, %v3859
        %v3947 = vadd.f32 %v3785, %v3908
        %v3948 = vadd.f32 %v3786, %v3861
        %v3949 = vadd.f32 %v3787, %v3910
        %v3950 = vadd.f32 %v3788, %v3864
        %v3951 = vadd.f32 %v3789, %v3913
        %v3952 = vadd.f32 %v3790, %v3866
        %v3953 = vadd.f32 %v3791, %v3915
        %v3954 = vadd.f32 %v3792, %v3869
        %v3955 = vadd.f32 %v3793, %v3918
        %v3956 = vadd.f32 %v3794, %v3871
        %v3957 = vadd.f32 %v3795, %v3920
        %v3958 = vadd.f32 %v3796, %v3874
        %v3959 = vadd.f32 %v3797, %v3923
        %v3960 = vadd.f32 %v3798, %v3876
        %v3961 = vadd.f32 %v3799, %v3925
        %v3962 = vadd.f32 %v3800, %v3879
        %v3963 = vadd.f32 %v3801, %v3928
        %v3964 = vadd.f32 %v3802, %v3881
        %v3965 = vadd.f32 %v3803, %v3930
        %v3966 = vadd.f32 %v3804, %v3884
        %v3967 = vadd.f32 %v3805, %v3933
        %v3968 = vadd.f32 %v3806, %v3886
        %v3969 = vadd.f32 %v3807, %v3935
        %v3970 = vadd.f32 %v3808, %v3889
        %v3971 = vadd.f32 %v3809, %v3938
        %v3972 = vadd.f32 %v3810, %v3891
        %v3973 = vadd.f32 %v3811, %v3940
        %v3974 = vxor.u32 %v3942, 2147483648
        %v3975 = vxor.u32 %v3943, 2147483648
        %v3976 = vxor.u32 %v3944, 2147483648
        %v3977 = vxor.u32 %v3945, 2147483648
        %v3978 = vxor.u32 %v3946, 2147483648
        %v3979 = vxor.u32 %v3947, 2147483648
        %v3980 = vxor.u32 %v3948, 2147483648
        %v3981 = vxor.u32 %v3949, 2147483648
        %v3982 = vxor.u32 %v3950, 2147483648
        %v3983 = vxor.u32 %v3951, 2147483648
        %v3984 = vxor.u32 %v3952, 2147483648
        %v3985 = vxor.u32 %v3953, 2147483648
        %v3986 = vxor.u32 %v3954, 2147483648
        %v3987 = vxor.u32 %v3955, 2147483648
        %v3988 = vxor.u32 %v3956, 2147483648
        %v3989 = vxor.u32 %v3957, 2147483648
        %v3990 = vxor.u32 %v3958, 2147483648
        %v3991 = vxor.u32 %v3959, 2147483648
        %v3992 = vxor.u32 %v3960, 2147483648
        %v3993 = vxor.u32 %v3961, 2147483648
        %v3994 = vxor.u32 %v3962, 2147483648
        %v3995 = vxor.u32 %v3963, 2147483648
        %v3996 = vxor.u32 %v3964, 2147483648
        %v3997 = vxor.u32 %v3965, 2147483648
        %v3998 = vxor.u32 %v3966, 2147483648
        %v3999 = vxor.u32 %v3967, 2147483648
        %v4000 = vxor.u32 %v3968, 2147483648
        %v4001 = vxor.u32 %v3969, 2147483648
        %v4002 = vxor.u32 %v3970, 2147483648
        %v4003 = vxor.u32 %v3971, 2147483648
        %v4004 = vxor.u32 %v3972, 2147483648
        %v4005 = vxor.u32 %v3973, 2147483648
        %v4006 = vmul.f32 %v3974, 1.442695
        %v4007 = vpow.pop %v4006
        %v4008 = vmul.f32 %v3975, 1.442695
        %v4009 = vpow.pop %v4008
        %v4010 = vmul.f32 %v3976, 1.442695
        %v4011 = vpow.pop %v4010
        %v4012 = vmul.f32 %v3977, 1.442695
        %v4013 = vpow.pop %v4012
        %v4014 = vmul.f32 %v3978, 1.442695
        %v4015 = vpow.pop %v4014
        %v4016 = vmul.f32 %v3979, 1.442695
        %v4017 = vpow.pop %v4016
        %v4018 = vmul.f32 %v3980, 1.442695
        %v4019 = vpow.pop %v4018
        %v4020 = vmul.f32 %v3981, 1.442695
        %v4021 = vpow.pop %v4020
        %v4022 = vmul.f32 %v3982, 1.442695
        %v4023 = vpow.pop %v4022
        %v4024 = vmul.f32 %v3983, 1.442695
        %v4025 = vpow.pop %v4024
        %v4026 = vmul.f32 %v3984, 1.442695
        %v4027 = vpow.pop %v4026
        %v4028 = vmul.f32 %v3985, 1.442695
        %v4029 = vpow.pop %v4028
        %v4030 = vmul.f32 %v3986, 1.442695
        %v4031 = vpow.pop %v4030
        %v4032 = vmul.f32 %v3987, 1.442695
        %v4033 = vpow.pop %v4032
        %v4034 = vmul.f32 %v3988, 1.442695
        %v4035 = vpow.pop %v4034
        %v4036 = vmul.f32 %v3989, 1.442695
        %v4037 = vpow.pop %v4036
        %v4038 = vmul.f32 %v3990, 1.442695
        %v4039 = vpow.pop %v4038
        %v4040 = vmul.f32 %v3991, 1.442695
        %v4041 = vpow.pop %v4040
        %v4042 = vmul.f32 %v3992, 1.442695
        %v4043 = vpow.pop %v4042
        %v4044 = vmul.f32 %v3993, 1.442695
        %v4045 = vpow.pop %v4044
        %v4046 = vmul.f32 %v3994, 1.442695
        %v4047 = vpow.pop %v4046
        %v4048 = vmul.f32 %v3995, 1.442695
        %v4049 = vpow.pop %v4048
        %v4050 = vmul.f32 %v3996, 1.442695
        %v4051 = vpow.pop %v4050
        %v4052 = vmul.f32 %v3997, 1.442695
        %v4053 = vpow.pop %v4052
        %v4054 = vmul.f32 %v3998, 1.442695
        %v4055 = vpow.pop %v4054
        %v4056 = vmul.f32 %v3999, 1.442695
        %v4057 = vpow.pop %v4056
        %v4058 = vmul.f32 %v4000, 1.442695
        %v4059 = vpow.pop %v4058
        %v4060 = vmul.f32 %v4001, 1.442695
        %v4061 = vpow.pop %v4060
        %v4062 = vmul.f32 %v4002, 1.442695
        %v4063 = vpow.pop %v4062
        %v4064 = vmul.f32 %v4003, 1.442695
        %v4065 = vpow.pop %v4064
        %v4066 = vmul.f32 %v4004, 1.442695
        %v4067 = vpow.pop %v4066
        %v4068 = vmul.f32 %v4005, 1.442695
        %v4069 = vpow.pop %v4068
        %v4070 = vadd.f32 %v4007, 1.0
        %v4071 = vadd.f32 %v4009, 1.0
        %v4072 = vadd.f32 %v4011, 1.0
        %v4073 = vadd.f32 %v4013, 1.0
        %v4074 = vadd.f32 %v4015, 1.0
        %v4075 = vadd.f32 %v4017, 1.0
        %v4076 = vadd.f32 %v4019, 1.0
        %v4077 = vadd.f32 %v4021, 1.0
        %v4078 = vadd.f32 %v4023, 1.0
        %v4079 = vadd.f32 %v4025, 1.0
        %v4080 = vadd.f32 %v4027, 1.0
        %v4081 = vadd.f32 %v4029, 1.0
        %v4082 = vadd.f32 %v4031, 1.0
        %v4083 = vadd.f32 %v4033, 1.0
        %v4084 = vadd.f32 %v4035, 1.0
        %v4085 = vadd.f32 %v4037, 1.0
        %v4086 = vadd.f32 %v4039, 1.0
        %v4087 = vadd.f32 %v4041, 1.0
        %v4088 = vadd.f32 %v4043, 1.0
        %v4089 = vadd.f32 %v4045, 1.0
        %v4090 = vadd.f32 %v4047, 1.0
        %v4091 = vadd.f32 %v4049, 1.0
        %v4092 = vadd.f32 %v4051, 1.0
        %v4093 = vadd.f32 %v4053, 1.0
        %v4094 = vadd.f32 %v4055, 1.0
        %v4095 = vadd.f32 %v4057, 1.0
        %v4096 = vadd.f32 %v4059, 1.0
        %v4097 = vadd.f32 %v4061, 1.0
        %v4098 = vadd.f32 %v4063, 1.0
        %v4099 = vadd.f32 %v4065, 1.0
        %v4100 = vadd.f32 %v4067, 1.0
        %v4101 = vadd.f32 %v4069, 1.0
        %v4102 = vrcp.pop %v4070
        %v4103 = vmul.f32 %v4070, %v4102
        %v4104 = vsub.f32 1.0, %v4103
        %v4105 = vmul.f32 %v4102, %v4104
        %v4106 = vadd.f32 %v4102, %v4105
        %vm4107 = vweird.f32 %v4070
        %vm4108 = vweird.f32 %v4102
        %vm4109 = vmor %vm4107, %vm4108
        %v4110 = vsel %vm4109, %v4102, %v4106
        %v4111 = vand.u32 2147483647, %v4070
        %vm4112 = vcmp.eq.f32.partialorder %v4111, 8.507059e+37
        %v4113 = vand.u32 %v4070, 2147483648
        %v4114 = vor.u32 1.1754944e-38, %v4113
        %v4115 = vsel %vm4112, %v4114, %v4110
        %v4116 = vmul.f32 1.0, %v4115
        %v4117 = vrcp.pop %v4071
        %v4118 = vmul.f32 %v4071, %v4117
        %v4119 = vsub.f32 1.0, %v4118
        %v4120 = vmul.f32 %v4117, %v4119
        %v4121 = vadd.f32 %v4117, %v4120
        %vm4122 = vweird.f32 %v4071
        %vm4123 = vweird.f32 %v4117
        %vm4124 = vmor %vm4122, %vm4123
        %v4125 = vsel %vm4124, %v4117, %v4121
        %v4126 = vand.u32 2147483647, %v4071
        %vm4127 = vcmp.eq.f32.partialorder %v4126, 8.507059e+37
        %v4128 = vand.u32 %v4071, 2147483648
        %v4129 = vor.u32 1.1754944e-38, %v4128
        %v4130 = vsel %vm4127, %v4129, %v4125
        %v4131 = vmul.f32 1.0, %v4130
        %v4132 = vrcp.pop %v4072
        %v4133 = vmul.f32 %v4072, %v4132
        %v4134 = vsub.f32 1.0, %v4133
        %v4135 = vmul.f32 %v4132, %v4134
        %v4136 = vadd.f32 %v4132, %v4135
        %vm4137 = vweird.f32 %v4072
        %vm4138 = vweird.f32 %v4132
        %vm4139 = vmor %vm4137, %vm4138
        %v4140 = vsel %vm4139, %v4132, %v4136
        %v4141 = vand.u32 2147483647, %v4072
        %vm4142 = vcmp.eq.f32.partialorder %v4141, 8.507059e+37
        %v4143 = vand.u32 %v4072, 2147483648
        %v4144 = vor.u32 1.1754944e-38, %v4143
        %v4145 = vsel %vm4142, %v4144, %v4140
        %v4146 = vmul.f32 1.0, %v4145
        %v4147 = vrcp.pop %v4073
        %v4148 = vmul.f32 %v4073, %v4147
        %v4149 = vsub.f32 1.0, %v4148
        %v4150 = vmul.f32 %v4147, %v4149
        %v4151 = vadd.f32 %v4147, %v4150
        %vm4152 = vweird.f32 %v4073
        %vm4153 = vweird.f32 %v4147
        %vm4154 = vmor %vm4152, %vm4153
        %v4155 = vsel %vm4154, %v4147, %v4151
        %v4156 = vand.u32 2147483647, %v4073
        %vm4157 = vcmp.eq.f32.partialorder %v4156, 8.507059e+37
        %v4158 = vand.u32 %v4073, 2147483648
        %v4159 = vor.u32 1.1754944e-38, %v4158
        %v4160 = vsel %vm4157, %v4159, %v4155
        %v4161 = vmul.f32 1.0, %v4160
        %v4162 = vrcp.pop %v4074
        %v4163 = vmul.f32 %v4074, %v4162
        %v4164 = vsub.f32 1.0, %v4163
        %v4165 = vmul.f32 %v4162, %v4164
        %v4166 = vadd.f32 %v4162, %v4165
        %vm4167 = vweird.f32 %v4074
        %vm4168 = vweird.f32 %v4162
        %vm4169 = vmor %vm4167, %vm4168
        %v4170 = vsel %vm4169, %v4162, %v4166
        %v4171 = vand.u32 2147483647, %v4074
        %vm4172 = vcmp.eq.f32.partialorder %v4171, 8.507059e+37
        %v4173 = vand.u32 %v4074, 2147483648
        %v4174 = vor.u32 1.1754944e-38, %v4173
        %v4175 = vsel %vm4172, %v4174, %v4170
        %v4176 = vmul.f32 1.0, %v4175
        %v4177 = vrcp.pop %v4075
        %v4178 = vmul.f32 %v4075, %v4177
        %v4179 = vsub.f32 1.0, %v4178
        %v4180 = vmul.f32 %v4177, %v4179
        %v4181 = vadd.f32 %v4177, %v4180
        %vm4182 = vweird.f32 %v4075
        %vm4183 = vweird.f32 %v4177
        %vm4184 = vmor %vm4182, %vm4183
        %v4185 = vsel %vm4184, %v4177, %v4181
        %v4186 = vand.u32 2147483647, %v4075
        %vm4187 = vcmp.eq.f32.partialorder %v4186, 8.507059e+37
        %v4188 = vand.u32 %v4075, 2147483648
        %v4189 = vor.u32 1.1754944e-38, %v4188
        %v4190 = vsel %vm4187, %v4189, %v4185
        %v4191 = vmul.f32 1.0, %v4190
        %v4192 = vrcp.pop %v4076
        %v4193 = vmul.f32 %v4076, %v4192
        %v4194 = vsub.f32 1.0, %v4193
        %v4195 = vmul.f32 %v4192, %v4194
        %v4196 = vadd.f32 %v4192, %v4195
        %vm4197 = vweird.f32 %v4076
        %vm4198 = vweird.f32 %v4192
        %vm4199 = vmor %vm4197, %vm4198
        %v4200 = vsel %vm4199, %v4192, %v4196
        %v4201 = vand.u32 2147483647, %v4076
        %vm4202 = vcmp.eq.f32.partialorder %v4201, 8.507059e+37
        %v4203 = vand.u32 %v4076, 2147483648
        %v4204 = vor.u32 1.1754944e-38, %v4203
        %v4205 = vsel %vm4202, %v4204, %v4200
        %v4206 = vmul.f32 1.0, %v4205
        %v4207 = vrcp.pop %v4077
        %v4208 = vmul.f32 %v4077, %v4207
        %v4209 = vsub.f32 1.0, %v4208
        %v4210 = vmul.f32 %v4207, %v4209
        %v4211 = vadd.f32 %v4207, %v4210
        %vm4212 = vweird.f32 %v4077
        %vm4213 = vweird.f32 %v4207
        %vm4214 = vmor %vm4212, %vm4213
        %v4215 = vsel %vm4214, %v4207, %v4211
        %v4216 = vand.u32 2147483647, %v4077
        %vm4217 = vcmp.eq.f32.partialorder %v4216, 8.507059e+37
        %v4218 = vand.u32 %v4077, 2147483648
        %v4219 = vor.u32 1.1754944e-38, %v4218
        %v4220 = vsel %vm4217, %v4219, %v4215
        %v4221 = vmul.f32 1.0, %v4220
        %v4222 = vrcp.pop %v4078
        %v4223 = vmul.f32 %v4078, %v4222
        %v4224 = vsub.f32 1.0, %v4223
        %v4225 = vmul.f32 %v4222, %v4224
        %v4226 = vadd.f32 %v4222, %v4225
        %vm4227 = vweird.f32 %v4078
        %vm4228 = vweird.f32 %v4222
        %vm4229 = vmor %vm4227, %vm4228
        %v4230 = vsel %vm4229, %v4222, %v4226
        %v4231 = vand.u32 2147483647, %v4078
        %vm4232 = vcmp.eq.f32.partialorder %v4231, 8.507059e+37
        %v4233 = vand.u32 %v4078, 2147483648
        %v4234 = vor.u32 1.1754944e-38, %v4233
        %v4235 = vsel %vm4232, %v4234, %v4230
        %v4236 = vmul.f32 1.0, %v4235
        %v4237 = vrcp.pop %v4079
        %v4238 = vmul.f32 %v4079, %v4237
        %v4239 = vsub.f32 1.0, %v4238
        %v4240 = vmul.f32 %v4237, %v4239
        %v4241 = vadd.f32 %v4237, %v4240
        %vm4242 = vweird.f32 %v4079
        %vm4243 = vweird.f32 %v4237
        %vm4244 = vmor %vm4242, %vm4243
        %v4245 = vsel %vm4244, %v4237, %v4241
        %v4246 = vand.u32 2147483647, %v4079
        %vm4247 = vcmp.eq.f32.partialorder %v4246, 8.507059e+37
        %v4248 = vand.u32 %v4079, 2147483648
        %v4249 = vor.u32 1.1754944e-38, %v4248
        %v4250 = vsel %vm4247, %v4249, %v4245
        %v4251 = vmul.f32 1.0, %v4250
        %v4252 = vrcp.pop %v4080
        %v4253 = vmul.f32 %v4080, %v4252
        %v4254 = vsub.f32 1.0, %v4253
        %v4255 = vmul.f32 %v4252, %v4254
        %v4256 = vadd.f32 %v4252, %v4255
        %vm4257 = vweird.f32 %v4080
        %vm4258 = vweird.f32 %v4252
        %vm4259 = vmor %vm4257, %vm4258
        %v4260 = vsel %vm4259, %v4252, %v4256
        %v4261 = vand.u32 2147483647, %v4080
        %vm4262 = vcmp.eq.f32.partialorder %v4261, 8.507059e+37
        %v4263 = vand.u32 %v4080, 2147483648
        %v4264 = vor.u32 1.1754944e-38, %v4263
        %v4265 = vsel %vm4262, %v4264, %v4260
        %v4266 = vmul.f32 1.0, %v4265
        %v4267 = vrcp.pop %v4081
        %v4268 = vmul.f32 %v4081, %v4267
        %v4269 = vsub.f32 1.0, %v4268
        %v4270 = vmul.f32 %v4267, %v4269
        %v4271 = vadd.f32 %v4267, %v4270
        %vm4272 = vweird.f32 %v4081
        %vm4273 = vweird.f32 %v4267
        %vm4274 = vmor %vm4272, %vm4273
        %v4275 = vsel %vm4274, %v4267, %v4271
        %v4276 = vand.u32 2147483647, %v4081
        %vm4277 = vcmp.eq.f32.partialorder %v4276, 8.507059e+37
        %v4278 = vand.u32 %v4081, 2147483648
        %v4279 = vor.u32 1.1754944e-38, %v4278
        %v4280 = vsel %vm4277, %v4279, %v4275
        %v4281 = vmul.f32 1.0, %v4280
        %v4282 = vrcp.pop %v4082
        %v4283 = vmul.f32 %v4082, %v4282
        %v4284 = vsub.f32 1.0, %v4283
        %v4285 = vmul.f32 %v4282, %v4284
        %v4286 = vadd.f32 %v4282, %v4285
        %vm4287 = vweird.f32 %v4082
        %vm4288 = vweird.f32 %v4282
        %vm4289 = vmor %vm4287, %vm4288
        %v4290 = vsel %vm4289, %v4282, %v4286
        %v4291 = vand.u32 2147483647, %v4082
        %vm4292 = vcmp.eq.f32.partialorder %v4291, 8.507059e+37
        %v4293 = vand.u32 %v4082, 2147483648
        %v4294 = vor.u32 1.1754944e-38, %v4293
        %v4295 = vsel %vm4292, %v4294, %v4290
        %v4296 = vmul.f32 1.0, %v4295
        %v4297 = vrcp.pop %v4083
        %v4298 = vmul.f32 %v4083, %v4297
        %v4299 = vsub.f32 1.0, %v4298
        %v4300 = vmul.f32 %v4297, %v4299
        %v4301 = vadd.f32 %v4297, %v4300
        %vm4302 = vweird.f32 %v4083
        %vm4303 = vweird.f32 %v4297
        %vm4304 = vmor %vm4302, %vm4303
        %v4305 = vsel %vm4304, %v4297, %v4301
        %v4306 = vand.u32 2147483647, %v4083
        %vm4307 = vcmp.eq.f32.partialorder %v4306, 8.507059e+37
        %v4308 = vand.u32 %v4083, 2147483648
        %v4309 = vor.u32 1.1754944e-38, %v4308
        %v4310 = vsel %vm4307, %v4309, %v4305
        %v4311 = vmul.f32 1.0, %v4310
        %v4312 = vrcp.pop %v4084
        %v4313 = vmul.f32 %v4084, %v4312
        %v4314 = vsub.f32 1.0, %v4313
        %v4315 = vmul.f32 %v4312, %v4314
        %v4316 = vadd.f32 %v4312, %v4315
        %vm4317 = vweird.f32 %v4084
        %vm4318 = vweird.f32 %v4312
        %vm4319 = vmor %vm4317, %vm4318
        %v4320 = vsel %vm4319, %v4312, %v4316
        %v4321 = vand.u32 2147483647, %v4084
        %vm4322 = vcmp.eq.f32.partialorder %v4321, 8.507059e+37
        %v4323 = vand.u32 %v4084, 2147483648
        %v4324 = vor.u32 1.1754944e-38, %v4323
        %v4325 = vsel %vm4322, %v4324, %v4320
        %v4326 = vmul.f32 1.0, %v4325
        %v4327 = vrcp.pop %v4085
        %v4328 = vmul.f32 %v4085, %v4327
        %v4329 = vsub.f32 1.0, %v4328
        %v4330 = vmul.f32 %v4327, %v4329
        %v4331 = vadd.f32 %v4327, %v4330
        %vm4332 = vweird.f32 %v4085
        %vm4333 = vweird.f32 %v4327
        %vm4334 = vmor %vm4332, %vm4333
        %v4335 = vsel %vm4334, %v4327, %v4331
        %v4336 = vand.u32 2147483647, %v4085
        %vm4337 = vcmp.eq.f32.partialorder %v4336, 8.507059e+37
        %v4338 = vand.u32 %v4085, 2147483648
        %v4339 = vor.u32 1.1754944e-38, %v4338
        %v4340 = vsel %vm4337, %v4339, %v4335
        %v4341 = vmul.f32 1.0, %v4340
        %v4342 = vrcp.pop %v4086
        %v4343 = vmul.f32 %v4086, %v4342
        %v4344 = vsub.f32 1.0, %v4343
        %v4345 = vmul.f32 %v4342, %v4344
        %v4346 = vadd.f32 %v4342, %v4345
        %vm4347 = vweird.f32 %v4086
        %vm4348 = vweird.f32 %v4342
        %vm4349 = vmor %vm4347, %vm4348
        %v4350 = vsel %vm4349, %v4342, %v4346
        %v4351 = vand.u32 2147483647, %v4086
        %vm4352 = vcmp.eq.f32.partialorder %v4351, 8.507059e+37
        %v4353 = vand.u32 %v4086, 2147483648
        %v4354 = vor.u32 1.1754944e-38, %v4353
        %v4355 = vsel %vm4352, %v4354, %v4350
        %v4356 = vmul.f32 1.0, %v4355
        %v4357 = vrcp.pop %v4087
        %v4358 = vmul.f32 %v4087, %v4357
        %v4359 = vsub.f32 1.0, %v4358
        %v4360 = vmul.f32 %v4357, %v4359
        %v4361 = vadd.f32 %v4357, %v4360
        %vm4362 = vweird.f32 %v4087
        %vm4363 = vweird.f32 %v4357
        %vm4364 = vmor %vm4362, %vm4363
        %v4365 = vsel %vm4364, %v4357, %v4361
        %v4366 = vand.u32 2147483647, %v4087
        %vm4367 = vcmp.eq.f32.partialorder %v4366, 8.507059e+37
        %v4368 = vand.u32 %v4087, 2147483648
        %v4369 = vor.u32 1.1754944e-38, %v4368
        %v4370 = vsel %vm4367, %v4369, %v4365
        %v4371 = vmul.f32 1.0, %v4370
        %v4372 = vrcp.pop %v4088
        %v4373 = vmul.f32 %v4088, %v4372
        %v4374 = vsub.f32 1.0, %v4373
        %v4375 = vmul.f32 %v4372, %v4374
        %v4376 = vadd.f32 %v4372, %v4375
        %vm4377 = vweird.f32 %v4088
        %vm4378 = vweird.f32 %v4372
        %vm4379 = vmor %vm4377, %vm4378
        %v4380 = vsel %vm4379, %v4372, %v4376
        %v4381 = vand.u32 2147483647, %v4088
        %vm4382 = vcmp.eq.f32.partialorder %v4381, 8.507059e+37
        %v4383 = vand.u32 %v4088, 2147483648
        %v4384 = vor.u32 1.1754944e-38, %v4383
        %v4385 = vsel %vm4382, %v4384, %v4380
        %v4386 = vmul.f32 1.0, %v4385
        %v4387 = vrcp.pop %v4089
        %v4388 = vmul.f32 %v4089, %v4387
        %v4389 = vsub.f32 1.0, %v4388
        %v4390 = vmul.f32 %v4387, %v4389
        %v4391 = vadd.f32 %v4387, %v4390
        %vm4392 = vweird.f32 %v4089
        %vm4393 = vweird.f32 %v4387
        %vm4394 = vmor %vm4392, %vm4393
        %v4395 = vsel %vm4394, %v4387, %v4391
        %v4396 = vand.u32 2147483647, %v4089
        %vm4397 = vcmp.eq.f32.partialorder %v4396, 8.507059e+37
        %v4398 = vand.u32 %v4089, 2147483648
        %v4399 = vor.u32 1.1754944e-38, %v4398
        %v4400 = vsel %vm4397, %v4399, %v4395
        %v4401 = vmul.f32 1.0, %v4400
        %v4402 = vrcp.pop %v4090
        %v4403 = vmul.f32 %v4090, %v4402
        %v4404 = vsub.f32 1.0, %v4403
        %v4405 = vmul.f32 %v4402, %v4404
        %v4406 = vadd.f32 %v4402, %v4405
        %vm4407 = vweird.f32 %v4090
        %vm4408 = vweird.f32 %v4402
        %vm4409 = vmor %vm4407, %vm4408
        %v4410 = vsel %vm4409, %v4402, %v4406
        %v4411 = vand.u32 2147483647, %v4090
        %vm4412 = vcmp.eq.f32.partialorder %v4411, 8.507059e+37
        %v4413 = vand.u32 %v4090, 2147483648
        %v4414 = vor.u32 1.1754944e-38, %v4413
        %v4415 = vsel %vm4412, %v4414, %v4410
        %v4416 = vmul.f32 1.0, %v4415
        %v4417 = vrcp.pop %v4091
        %v4418 = vmul.f32 %v4091, %v4417
        %v4419 = vsub.f32 1.0, %v4418
        %v4420 = vmul.f32 %v4417, %v4419
        %v4421 = vadd.f32 %v4417, %v4420
        %vm4422 = vweird.f32 %v4091
        %vm4423 = vweird.f32 %v4417
        %vm4424 = vmor %vm4422, %vm4423
        %v4425 = vsel %vm4424, %v4417, %v4421
        %v4426 = vand.u32 2147483647, %v4091
        %vm4427 = vcmp.eq.f32.partialorder %v4426, 8.507059e+37
        %v4428 = vand.u32 %v4091, 2147483648
        %v4429 = vor.u32 1.1754944e-38, %v4428
        %v4430 = vsel %vm4427, %v4429, %v4425
        %v4431 = vmul.f32 1.0, %v4430
        %v4432 = vrcp.pop %v4092
        %v4433 = vmul.f32 %v4092, %v4432
        %v4434 = vsub.f32 1.0, %v4433
        %v4435 = vmul.f32 %v4432, %v4434
        %v4436 = vadd.f32 %v4432, %v4435
        %vm4437 = vweird.f32 %v4092
        %vm4438 = vweird.f32 %v4432
        %vm4439 = vmor %vm4437, %vm4438
        %v4440 = vsel %vm4439, %v4432, %v4436
        %v4441 = vand.u32 2147483647, %v4092
        %vm4442 = vcmp.eq.f32.partialorder %v4441, 8.507059e+37
        %v4443 = vand.u32 %v4092, 2147483648
        %v4444 = vor.u32 1.1754944e-38, %v4443
        %v4445 = vsel %vm4442, %v4444, %v4440
        %v4446 = vmul.f32 1.0, %v4445
        %v4447 = vrcp.pop %v4093
        %v4448 = vmul.f32 %v4093, %v4447
        %v4449 = vsub.f32 1.0, %v4448
        %v4450 = vmul.f32 %v4447, %v4449
        %v4451 = vadd.f32 %v4447, %v4450
        %vm4452 = vweird.f32 %v4093
        %vm4453 = vweird.f32 %v4447
        %vm4454 = vmor %vm4452, %vm4453
        %v4455 = vsel %vm4454, %v4447, %v4451
        %v4456 = vand.u32 2147483647, %v4093
        %vm4457 = vcmp.eq.f32.partialorder %v4456, 8.507059e+37
        %v4458 = vand.u32 %v4093, 2147483648
        %v4459 = vor.u32 1.1754944e-38, %v4458
        %v4460 = vsel %vm4457, %v4459, %v4455
        %v4461 = vmul.f32 1.0, %v4460
        %v4462 = vrcp.pop %v4094
        %v4463 = vmul.f32 %v4094, %v4462
        %v4464 = vsub.f32 1.0, %v4463
        %v4465 = vmul.f32 %v4462, %v4464
        %v4466 = vadd.f32 %v4462, %v4465
        %vm4467 = vweird.f32 %v4094
        %vm4468 = vweird.f32 %v4462
        %vm4469 = vmor %vm4467, %vm4468
        %v4470 = vsel %vm4469, %v4462, %v4466
        %v4471 = vand.u32 2147483647, %v4094
        %vm4472 = vcmp.eq.f32.partialorder %v4471, 8.507059e+37
        %v4473 = vand.u32 %v4094, 2147483648
        %v4474 = vor.u32 1.1754944e-38, %v4473
        %v4475 = vsel %vm4472, %v4474, %v4470
        %v4476 = vmul.f32 1.0, %v4475
        %v4477 = vrcp.pop %v4095
        %v4478 = vmul.f32 %v4095, %v4477
        %v4479 = vsub.f32 1.0, %v4478
        %v4480 = vmul.f32 %v4477, %v4479
        %v4481 = vadd.f32 %v4477, %v4480
        %vm4482 = vweird.f32 %v4095
        %vm4483 = vweird.f32 %v4477
        %vm4484 = vmor %vm4482, %vm4483
        %v4485 = vsel %vm4484, %v4477, %v4481
        %v4486 = vand.u32 2147483647, %v4095
        %vm4487 = vcmp.eq.f32.partialorder %v4486, 8.507059e+37
        %v4488 = vand.u32 %v4095, 2147483648
        %v4489 = vor.u32 1.1754944e-38, %v4488
        %v4490 = vsel %vm4487, %v4489, %v4485
        %v4491 = vmul.f32 1.0, %v4490
        %v4492 = vrcp.pop %v4096
        %v4493 = vmul.f32 %v4096, %v4492
        %v4494 = vsub.f32 1.0, %v4493
        %v4495 = vmul.f32 %v4492, %v4494
        %v4496 = vadd.f32 %v4492, %v4495
        %vm4497 = vweird.f32 %v4096
        %vm4498 = vweird.f32 %v4492
        %vm4499 = vmor %vm4497, %vm4498
        %v4500 = vsel %vm4499, %v4492, %v4496
        %v4501 = vand.u32 2147483647, %v4096
        %vm4502 = vcmp.eq.f32.partialorder %v4501, 8.507059e+37
        %v4503 = vand.u32 %v4096, 2147483648
        %v4504 = vor.u32 1.1754944e-38, %v4503
        %v4505 = vsel %vm4502, %v4504, %v4500
        %v4506 = vmul.f32 1.0, %v4505
        %v4507 = vrcp.pop %v4097
        %v4508 = vmul.f32 %v4097, %v4507
        %v4509 = vsub.f32 1.0, %v4508
        %v4510 = vmul.f32 %v4507, %v4509
        %v4511 = vadd.f32 %v4507, %v4510
        %vm4512 = vweird.f32 %v4097
        %vm4513 = vweird.f32 %v4507
        %vm4514 = vmor %vm4512, %vm4513
        %v4515 = vsel %vm4514, %v4507, %v4511
        %v4516 = vand.u32 2147483647, %v4097
        %vm4517 = vcmp.eq.f32.partialorder %v4516, 8.507059e+37
        %v4518 = vand.u32 %v4097, 2147483648
        %v4519 = vor.u32 1.1754944e-38, %v4518
        %v4520 = vsel %vm4517, %v4519, %v4515
        %v4521 = vmul.f32 1.0, %v4520
        %v4522 = vrcp.pop %v4098
        %v4523 = vmul.f32 %v4098, %v4522
        %v4524 = vsub.f32 1.0, %v4523
        %v4525 = vmul.f32 %v4522, %v4524
        %v4526 = vadd.f32 %v4522, %v4525
        %vm4527 = vweird.f32 %v4098
        %vm4528 = vweird.f32 %v4522
        %vm4529 = vmor %vm4527, %vm4528
        %v4530 = vsel %vm4529, %v4522, %v4526
        %v4531 = vand.u32 2147483647, %v4098
        %vm4532 = vcmp.eq.f32.partialorder %v4531, 8.507059e+37
        %v4533 = vand.u32 %v4098, 2147483648
        %v4534 = vor.u32 1.1754944e-38, %v4533
        %v4535 = vsel %vm4532, %v4534, %v4530
        %v4536 = vmul.f32 1.0, %v4535
        %v4537 = vrcp.pop %v4099
        %v4538 = vmul.f32 %v4099, %v4537
        %v4539 = vsub.f32 1.0, %v4538
        %v4540 = vmul.f32 %v4537, %v4539
        %v4541 = vadd.f32 %v4537, %v4540
        %vm4542 = vweird.f32 %v4099
        %vm4543 = vweird.f32 %v4537
        %vm4544 = vmor %vm4542, %vm4543
        %v4545 = vsel %vm4544, %v4537, %v4541
        %v4546 = vand.u32 2147483647, %v4099
        %vm4547 = vcmp.eq.f32.partialorder %v4546, 8.507059e+37
        %v4548 = vand.u32 %v4099, 2147483648
        %v4549 = vor.u32 1.1754944e-38, %v4548
        %v4550 = vsel %vm4547, %v4549, %v4545
        %v4551 = vmul.f32 1.0, %v4550
        %v4552 = vrcp.pop %v4100
        %v4553 = vmul.f32 %v4100, %v4552
        %v4554 = vsub.f32 1.0, %v4553
        %v4555 = vmul.f32 %v4552, %v4554
        %v4556 = vadd.f32 %v4552, %v4555
        %vm4557 = vweird.f32 %v4100
        %vm4558 = vweird.f32 %v4552
        %vm4559 = vmor %vm4557, %vm4558
        %v4560 = vsel %vm4559, %v4552, %v4556
        %v4561 = vand.u32 2147483647, %v4100
        %vm4562 = vcmp.eq.f32.partialorder %v4561, 8.507059e+37
        %v4563 = vand.u32 %v4100, 2147483648
        %v4564 = vor.u32 1.1754944e-38, %v4563
        %v4565 = vsel %vm4562, %v4564, %v4560
        %v4566 = vmul.f32 1.0, %v4565
        %v4567 = vrcp.pop %v4101
        %v4568 = vmul.f32 %v4101, %v4567
        %v4569 = vsub.f32 1.0, %v4568
        %v4570 = vmul.f32 %v4567, %v4569
        %v4571 = vadd.f32 %v4567, %v4570
        %vm4572 = vweird.f32 %v4101
        %vm4573 = vweird.f32 %v4567
        %vm4574 = vmor %vm4572, %vm4573
        %v4575 = vsel %vm4574, %v4567, %v4571
        %v4576 = vand.u32 2147483647, %v4101
        %vm4577 = vcmp.eq.f32.partialorder %v4576, 8.507059e+37
        %v4578 = vand.u32 %v4101, 2147483648
        %v4579 = vor.u32 1.1754944e-38, %v4578
        %v4580 = vsel %vm4577, %v4579, %v4575
        %v4581 = vmul.f32 1.0, %v4580
        %v4582 = vtanh.pop %v3943
        %v4583 = vtanh.pop %v3945
        %v4584 = vtanh.pop %v3947
        %v4585 = vtanh.pop %v3949
        %v4586 = vtanh.pop %v3951
        %v4587 = vtanh.pop %v3953
        %v4588 = vtanh.pop %v3955
        %v4589 = vtanh.pop %v3957
        %v4590 = vtanh.pop %v3959
        %v4591 = vtanh.pop %v3961
        %v4592 = vtanh.pop %v3963
        %v4593 = vtanh.pop %v3965
        %v4594 = vtanh.pop %v3967
        %v4595 = vtanh.pop %v3969
        %v4596 = vtanh.pop %v3971
        %v4597 = vtanh.pop %v3973
        %v4598 = vmul.f32 %v4116, %v3652
        %v4599 = vmul.f32 %v4146, %v3653
        %v4600 = vmul.f32 %v4176, %v3654
        %v4601 = vmul.f32 %v4206, %v3655
        %v4602 = vmul.f32 %v4236, %v3656
        %v4603 = vmul.f32 %v4266, %v3657
        %v4604 = vmul.f32 %v4296, %v3658
        %v4605 = vmul.f32 %v4326, %v3659
        %v4606 = vmul.f32 %v4356, %v3660
        %v4607 = vmul.f32 %v4386, %v3661
        %v4608 = vmul.f32 %v4416, %v3662
        %v4609 = vmul.f32 %v4446, %v3663
        %v4610 = vmul.f32 %v4476, %v3664
        %v4611 = vmul.f32 %v4506, %v3665
        %v4612 = vmul.f32 %v4536, %v3666
        %v4613 = vmul.f32 %v4566, %v3667
        %4630 = vrot.lane.b32.xlu0 %v4582, 64
        %v4631 = vpop.permute.xlu0 %4630
        %4632 = vrot.lane.b32.xlu0 %v4583, 64
        %v4633 = vpop.permute.xlu0 %4632
        %4634 = vrot.lane.b32.xlu0 %v4584, 64
        %v4635 = vpop.permute.xlu0 %4634
        %4636 = vrot.lane.b32.xlu0 %v4585, 64
        %v4637 = vpop.permute.xlu0 %4636
        %4638 = vrot.lane.b32.xlu0 %v4586, 64
        %v4639 = vpop.permute.xlu0 %4638
        %4640 = vrot.lane.b32.xlu0 %v4587, 64
        %v4641 = vpop.permute.xlu0 %4640
        %4642 = vrot.lane.b32.xlu0 %v4588, 64
        %v4643 = vpop.permute.xlu0 %4642
        %4644 = vrot.lane.b32.xlu0 %v4589, 64
        %v4645 = vpop.permute.xlu0 %4644
        %4646 = vrot.lane.b32.xlu0 %v4590, 64
        %v4647 = vpop.permute.xlu0 %4646
        %4648 = vrot.lane.b32.xlu0 %v4591, 64
        %v4649 = vpop.permute.xlu0 %4648
        %4650 = vrot.lane.b32.xlu0 %v4592, 64
        %v4651 = vpop.permute.xlu0 %4650
        %4652 = vrot.lane.b32.xlu0 %v4593, 64
        %v4653 = vpop.permute.xlu0 %4652
        %4654 = vrot.lane.b32.xlu0 %v4594, 64
        %v4655 = vpop.permute.xlu0 %4654
        %4656 = vrot.lane.b32.xlu0 %v4595, 64
        %v4657 = vpop.permute.xlu0 %4656
        %4658 = vrot.lane.b32.xlu0 %v4596, 64
        %v4659 = vpop.permute.xlu0 %4658
        %4660 = vrot.lane.b32.xlu0 %v4597, 64
        %v4661 = vpop.permute.xlu0 %4660
        %v4678 = vmul.f32 %v4116, %v4631
        %v4679 = vmul.f32 %v4146, %v4633
        %v4680 = vmul.f32 %v4176, %v4635
        %v4681 = vmul.f32 %v4206, %v4637
        %v4682 = vmul.f32 %v4236, %v4639
        %v4683 = vmul.f32 %v4266, %v4641
        %v4684 = vmul.f32 %v4296, %v4643
        %v4685 = vmul.f32 %v4326, %v4645
        %v4686 = vmul.f32 %v4356, %v4647
        %v4687 = vmul.f32 %v4386, %v4649
        %v4688 = vmul.f32 %v4416, %v4651
        %v4689 = vmul.f32 %v4446, %v4653
        %v4690 = vmul.f32 %v4476, %v4655
        %v4691 = vmul.f32 %v4506, %v4657
        %v4692 = vmul.f32 %v4536, %v4659
        %v4693 = vmul.f32 %v4566, %v4661
        %4710 = vrot.lane.b32.xlu0 %v4678, 64
        %v4711 = vpop.permute.xlu0 %4710
        %4712 = vrot.lane.b32.xlu0 %v4679, 64
        %v4713 = vpop.permute.xlu0 %4712
        %4714 = vrot.lane.b32.xlu0 %v4680, 64
        %v4715 = vpop.permute.xlu0 %4714
        %4716 = vrot.lane.b32.xlu0 %v4681, 64
        %v4717 = vpop.permute.xlu0 %4716
        %4718 = vrot.lane.b32.xlu0 %v4682, 64
        %v4719 = vpop.permute.xlu0 %4718
        %4720 = vrot.lane.b32.xlu0 %v4683, 64
        %v4721 = vpop.permute.xlu0 %4720
        %4722 = vrot.lane.b32.xlu0 %v4684, 64
        %v4723 = vpop.permute.xlu0 %4722
        %4724 = vrot.lane.b32.xlu0 %v4685, 64
        %v4725 = vpop.permute.xlu0 %4724
        %4726 = vrot.lane.b32.xlu0 %v4686, 64
        %v4727 = vpop.permute.xlu0 %4726
        %4728 = vrot.lane.b32.xlu0 %v4687, 64
        %v4729 = vpop.permute.xlu0 %4728
        %4730 = vrot.lane.b32.xlu0 %v4688, 64
        %v4731 = vpop.permute.xlu0 %4730
        %4732 = vrot.lane.b32.xlu0 %v4689, 64
        %v4733 = vpop.permute.xlu0 %4732
        %4734 = vrot.lane.b32.xlu0 %v4690, 64
        %v4735 = vpop.permute.xlu0 %4734
        %4736 = vrot.lane.b32.xlu0 %v4691, 64
        %v4737 = vpop.permute.xlu0 %4736
        %4738 = vrot.lane.b32.xlu0 %v4692, 64
        %v4739 = vpop.permute.xlu0 %4738
        %4740 = vrot.lane.b32.xlu0 %v4693, 64
        %v4741 = vpop.permute.xlu0 %4740
        %v4758 = vadd.f32 %v4598, %v4711
        %v4759 = vadd.f32 %v4599, %v4713
        %v4760 = vadd.f32 %v4600, %v4715
        %v4761 = vadd.f32 %v4601, %v4717
        %v4762 = vadd.f32 %v4602, %v4719
        %v4763 = vadd.f32 %v4603, %v4721
        %v4764 = vadd.f32 %v4604, %v4723
        %v4765 = vadd.f32 %v4605, %v4725
        %v4766 = vadd.f32 %v4606, %v4727
        %v4767 = vadd.f32 %v4607, %v4729
        %v4768 = vadd.f32 %v4608, %v4731
        %v4769 = vadd.f32 %v4609, %v4733
        %v4770 = vadd.f32 %v4610, %v4735
        %v4771 = vadd.f32 %v4611, %v4737
        %v4772 = vadd.f32 %v4612, %v4739
        %v4773 = vadd.f32 %v4613, %v4741
        %v4774 = vtanh.pop %v4758
        %v4775 = vtanh.pop %v4759
        %v4776 = vtanh.pop %v4760
        %v4777 = vtanh.pop %v4761
        %v4778 = vtanh.pop %v4762
        %v4779 = vtanh.pop %v4763
        %v4780 = vtanh.pop %v4764
        %v4781 = vtanh.pop %v4765
        %v4782 = vtanh.pop %v4766
        %v4783 = vtanh.pop %v4767
        %v4784 = vtanh.pop %v4768
        %v4785 = vtanh.pop %v4769
        %v4786 = vtanh.pop %v4770
        %v4787 = vtanh.pop %v4771
        %v4788 = vtanh.pop %v4772
        %v4789 = vtanh.pop %v4773
        %4806 = vrot.lane.b32.xlu0 %v4774, 64
        %v4807 = vpop.permute.xlu0 %4806
        %4808 = vrot.lane.b32.xlu0 %v4775, 64
        %v4809 = vpop.permute.xlu0 %4808
        %4810 = vrot.lane.b32.xlu0 %v4776, 64
        %v4811 = vpop.permute.xlu0 %4810
        %4812 = vrot.lane.b32.xlu0 %v4777, 64
        %v4813 = vpop.permute.xlu0 %4812
        %4814 = vrot.lane.b32.xlu0 %v4778, 64
        %v4815 = vpop.permute.xlu0 %4814
        %4816 = vrot.lane.b32.xlu0 %v4779, 64
        %v4817 = vpop.permute.xlu0 %4816
        %4818 = vrot.lane.b32.xlu0 %v4780, 64
        %v4819 = vpop.permute.xlu0 %4818
        %4820 = vrot.lane.b32.xlu0 %v4781, 64
        %v4821 = vpop.permute.xlu0 %4820
        %4822 = vrot.lane.b32.xlu0 %v4782, 64
        %v4823 = vpop.permute.xlu0 %4822
        %4824 = vrot.lane.b32.xlu0 %v4783, 64
        %v4825 = vpop.permute.xlu0 %4824
        %4826 = vrot.lane.b32.xlu0 %v4784, 64
        %v4827 = vpop.permute.xlu0 %4826
        %4828 = vrot.lane.b32.xlu0 %v4785, 64
        %v4829 = vpop.permute.xlu0 %4828
        %4830 = vrot.lane.b32.xlu0 %v4786, 64
        %v4831 = vpop.permute.xlu0 %4830
        %4832 = vrot.lane.b32.xlu0 %v4787, 64
        %v4833 = vpop.permute.xlu0 %4832
        %4834 = vrot.lane.b32.xlu0 %v4788, 64
        %v4835 = vpop.permute.xlu0 %4834
        %4836 = vrot.lane.b32.xlu0 %v4789, 64
        %v4837 = vpop.permute.xlu0 %4836
        %v4854 = vmul.f32 %v4131, %v4807
        %v4855 = vmul.f32 %v4161, %v4809
        %v4856 = vmul.f32 %v4191, %v4811
        %v4857 = vmul.f32 %v4221, %v4813
        %v4858 = vmul.f32 %v4251, %v4815
        %v4859 = vmul.f32 %v4281, %v4817
        %v4860 = vmul.f32 %v4311, %v4819
        %v4861 = vmul.f32 %v4341, %v4821
        %v4862 = vmul.f32 %v4371, %v4823
        %v4863 = vmul.f32 %v4401, %v4825
        %v4864 = vmul.f32 %v4431, %v4827
        %v4865 = vmul.f32 %v4461, %v4829
        %v4866 = vmul.f32 %v4491, %v4831
        %v4867 = vmul.f32 %v4521, %v4833
        %v4868 = vmul.f32 %v4551, %v4835
        %v4869 = vmul.f32 %v4581, %v4837
        %v4870 = vadd.f32 %v3764, %v4854
        %v4871 = vadd.f32 %v3765, %v4855
        %v4872 = vadd.f32 %v3766, %v4856
        %v4873 = vadd.f32 %v3767, %v4857
        %v4874 = vadd.f32 %v3768, %v4858
        %v4875 = vadd.f32 %v3769, %v4859
        %v4876 = vadd.f32 %v3770, %v4860
        %v4877 = vadd.f32 %v3771, %v4861
        %v4878 = vadd.f32 %v3772, %v4862
        %v4879 = vadd.f32 %v3773, %v4863
        %v4880 = vadd.f32 %v3774, %v4864
        %v4881 = vadd.f32 %v3775, %v4865
        %v4882 = vadd.f32 %v3776, %v4866
        %v4883 = vadd.f32 %v3777, %v4867
        %v4884 = vadd.f32 %v3778, %v4868
        %v4885 = vadd.f32 %v3779, %v4869
        %v4886 = vld [vmem:[#allocation2 + $0x300] sm:$0xff]
        %v4887 = vld [vmem:[#allocation2 + $0x308] sm:$0xff]
        %v4888 = vld [vmem:[#allocation2 + $0x310] sm:$0xff]
        %v4889 = vld [vmem:[#allocation2 + $0x318] sm:$0xff]
        %v4890 = vld [vmem:[#allocation2 + $0x320] sm:$0xff]
        %v4891 = vld [vmem:[#allocation2 + $0x328] sm:$0xff]
        %v4892 = vld [vmem:[#allocation2 + $0x330] sm:$0xff]
        %v4893 = vld [vmem:[#allocation2 + $0x338] sm:$0xff]
        %v4894 = vld [vmem:[#allocation2 + $0x340] sm:$0xff]
        %v4895 = vld [vmem:[#allocation2 + $0x348] sm:$0xff]
        %v4896 = vld [vmem:[#allocation2 + $0x350] sm:$0xff]
        %v4897 = vld [vmem:[#allocation2 + $0x358] sm:$0xff]
        %v4898 = vld [vmem:[#allocation2 + $0x360] sm:$0xff]
        %v4899 = vld [vmem:[#allocation2 + $0x368] sm:$0xff]
        %v4900 = vld [vmem:[#allocation2 + $0x370] sm:$0xff]
        %v4901 = vld [vmem:[#allocation2 + $0x378] sm:$0xff]
        %v4902 = vld [vmem:[#allocation2 + $0x380] sm:$0xff]
        %v4903 = vld [vmem:[#allocation2 + $0x388] sm:$0xff]
        %v4904 = vld [vmem:[#allocation2 + $0x390] sm:$0xff]
        %v4905 = vld [vmem:[#allocation2 + $0x398] sm:$0xff]
        %v4906 = vld [vmem:[#allocation2 + $0x3a0] sm:$0xff]
        %v4907 = vld [vmem:[#allocation2 + $0x3a8] sm:$0xff]
        %v4908 = vld [vmem:[#allocation2 + $0x3b0] sm:$0xff]
        %v4909 = vld [vmem:[#allocation2 + $0x3b8] sm:$0xff]
        %v4910 = vld [vmem:[#allocation2 + $0x3c0] sm:$0xff]
        %v4911 = vld [vmem:[#allocation2 + $0x3c8] sm:$0xff]
        %v4912 = vld [vmem:[#allocation2 + $0x3d0] sm:$0xff]
        %v4913 = vld [vmem:[#allocation2 + $0x3d8] sm:$0xff]
        %v4914 = vld [vmem:[#allocation2 + $0x3e0] sm:$0xff]
        %v4915 = vld [vmem:[#allocation2 + $0x3e8] sm:$0xff]
        %v4916 = vld [vmem:[#allocation2 + $0x3f0] sm:$0xff]
        %v4917 = vld [vmem:[#allocation2 + $0x3f8] sm:$0xff]
        %v4918 = vpack.c.bf16 %v4855, %v4854
        %v4919 = vpack.c.bf16 %v4857, %v4856
        %v4920 = vpack.c.bf16 %v4859, %v4858
        %v4921 = vpack.c.bf16 %v4861, %v4860
        %v4922 = vpack.c.bf16 %v4863, %v4862
        %v4923 = vpack.c.bf16 %v4865, %v4864
        %v4924 = vpack.c.bf16 %v4867, %v4866
        %v4925 = vpack.c.bf16 %v4869, %v4868
        %v4927 = vsel %vm641, %v4918, 0
        %v4930 = vsel %vm641, %v4919, 0
        %v4933 = vsel %vm641, %v4920, 0
        %v4936 = vsel %vm641, %v4921, 0
        %v4939 = vsel %vm641, %v4922, 0
        %v4942 = vsel %vm641, %v4923, 0
        %v4945 = vsel %vm641, %v4924, 0
        %v4948 = vsel %vm641, %v4925, 0
        %4950 = vmatpush.bf16.msra.mxu0 0
        %4951 = vmatpush.bf16.msra.mxu0 0
        %4952 = vmatpush.bf16.msra.mxu0 0
        %4953 = vmatpush.bf16.msra.mxu0 0
        %4954 = vmatpush.bf16.msra.mxu0 %v1619
        %4955 = vmatpush.bf16.msra.mxu0 %v1617
        %4956 = vmatpush.bf16.msra.mxu0 %v1615
        %4957 = vmatpush.bf16.msra.mxu0 %v1613
        %4958 = vmatmul.bf16.gmra.mxu0 %v4927
        %v4959 = vpop.f32.mrf.mxu0
        %v4960 = vadd.f32 0.0, %v4959
        %v4961 = vpop.f32.mrf.mxu0
        %v4962 = vadd.f32 0.0, %v4961
        %4963 = vmatmul.bf16.gmra.mxu0 %v4930
        %v4964 = vpop.f32.mrf.mxu0
        %v4965 = vadd.f32 0.0, %v4964
        %v4966 = vpop.f32.mrf.mxu0
        %v4967 = vadd.f32 0.0, %v4966
        %4968 = vmatmul.bf16.gmra.mxu0 %v4933
        %v4969 = vpop.f32.mrf.mxu0
        %v4970 = vadd.f32 0.0, %v4969
        %v4971 = vpop.f32.mrf.mxu0
        %v4972 = vadd.f32 0.0, %v4971
        %4973 = vmatmul.bf16.gmra.mxu0 %v4936
        %v4974 = vpop.f32.mrf.mxu0
        %v4975 = vadd.f32 0.0, %v4974
        %v4976 = vpop.f32.mrf.mxu0
        %v4977 = vadd.f32 0.0, %v4976
        %4978 = vmatmul.bf16.gmra.mxu0 %v4939
        %v4979 = vpop.f32.mrf.mxu0
        %v4980 = vadd.f32 0.0, %v4979
        %v4981 = vpop.f32.mrf.mxu0
        %v4982 = vadd.f32 0.0, %v4981
        %4983 = vmatmul.bf16.gmra.mxu0 %v4942
        %v4984 = vpop.f32.mrf.mxu0
        %v4985 = vadd.f32 0.0, %v4984
        %v4986 = vpop.f32.mrf.mxu0
        %v4987 = vadd.f32 0.0, %v4986
        %4988 = vmatmul.bf16.gmra.mxu0 %v4945
        %v4989 = vpop.f32.mrf.mxu0
        %v4990 = vadd.f32 0.0, %v4989
        %v4991 = vpop.f32.mrf.mxu0
        %v4992 = vadd.f32 0.0, %v4991
        %4993 = vmatmul.bf16.gmra.mxu0 %v4948
        %v4994 = vpop.f32.mrf.mxu0
        %v4995 = vadd.f32 0.0, %v4994
        %v4996 = vpop.f32.mrf.mxu0
        %v4997 = vadd.f32 0.0, %v4996
        %4998 = vdwg.mxu0
        %4999 = vmatpush.bf16.msra.mxu0 0
        %5000 = vmatpush.bf16.msra.mxu0 0
        %5001 = vmatpush.bf16.msra.mxu0 0
        %5002 = vmatpush.bf16.msra.mxu0 0
        %5003 = vmatpush.bf16.msra.mxu0 %v1620
        %5004 = vmatpush.bf16.msra.mxu0 %v1618
        %5005 = vmatpush.bf16.msra.mxu0 %v1616
        %5006 = vmatpush.bf16.msra.mxu0 %v1614
        %5007 = vmatmul.bf16.gmra.mxu0 %v4927
        %v5008 = vpop.f32.mrf.mxu0
        %v5009 = vadd.f32 0.0, %v5008
        %v5010 = vpop.f32.mrf.mxu0
        %v5011 = vadd.f32 0.0, %v5010
        %5012 = vmatmul.bf16.gmra.mxu0 %v4930
        %v5013 = vpop.f32.mrf.mxu0
        %v5014 = vadd.f32 0.0, %v5013
        %v5015 = vpop.f32.mrf.mxu0
        %v5016 = vadd.f32 0.0, %v5015
        %5017 = vmatmul.bf16.gmra.mxu0 %v4933
        %v5018 = vpop.f32.mrf.mxu0
        %v5019 = vadd.f32 0.0, %v5018
        %v5020 = vpop.f32.mrf.mxu0
        %v5021 = vadd.f32 0.0, %v5020
        %5022 = vmatmul.bf16.gmra.mxu0 %v4936
        %v5023 = vpop.f32.mrf.mxu0
        %v5024 = vadd.f32 0.0, %v5023
        %v5025 = vpop.f32.mrf.mxu0
        %v5026 = vadd.f32 0.0, %v5025
        %5027 = vmatmul.bf16.gmra.mxu0 %v4939
        %v5028 = vpop.f32.mrf.mxu0
        %v5029 = vadd.f32 0.0, %v5028
        %v5030 = vpop.f32.mrf.mxu0
        %v5031 = vadd.f32 0.0, %v5030
        %5032 = vmatmul.bf16.gmra.mxu0 %v4942
        %v5033 = vpop.f32.mrf.mxu0
        %v5034 = vadd.f32 0.0, %v5033
        %v5035 = vpop.f32.mrf.mxu0
        %v5036 = vadd.f32 0.0, %v5035
        %5037 = vmatmul.bf16.gmra.mxu0 %v4945
        %v5038 = vpop.f32.mrf.mxu0
        %v5039 = vadd.f32 0.0, %v5038
        %v5040 = vpop.f32.mrf.mxu0
        %v5041 = vadd.f32 0.0, %v5040
        %5042 = vmatmul.bf16.gmra.mxu0 %v4948
        %v5043 = vpop.f32.mrf.mxu0
        %v5044 = vadd.f32 0.0, %v5043
        %v5045 = vpop.f32.mrf.mxu0
        %v5046 = vadd.f32 0.0, %v5045
        %5047 = vdwg.mxu0
        %v5048 = vadd.f32 %v4886, %v4960
        %v5049 = vadd.f32 %v4887, %v5009
        %v5050 = vadd.f32 %v4888, %v4962
        %v5051 = vadd.f32 %v4889, %v5011
        %v5052 = vadd.f32 %v4890, %v4965
        %v5053 = vadd.f32 %v4891, %v5014
        %v5054 = vadd.f32 %v4892, %v4967
        %v5055 = vadd.f32 %v4893, %v5016
        %v5056 = vadd.f32 %v4894, %v4970
        %v5057 = vadd.f32 %v4895, %v5019
        %v5058 = vadd.f32 %v4896, %v4972
        %v5059 = vadd.f32 %v4897, %v5021
        %v5060 = vadd.f32 %v4898, %v4975
        %v5061 = vadd.f32 %v4899, %v5024
        %v5062 = vadd.f32 %v4900, %v4977
        %v5063 = vadd.f32 %v4901, %v5026
        %v5064 = vadd.f32 %v4902, %v4980
        %v5065 = vadd.f32 %v4903, %v5029
        %v5066 = vadd.f32 %v4904, %v4982
        %v5067 = vadd.f32 %v4905, %v5031
        %v5068 = vadd.f32 %v4906, %v4985
        %v5069 = vadd.f32 %v4907, %v5034
        %v5070 = vadd.f32 %v4908, %v4987
        %v5071 = vadd.f32 %v4909, %v5036
        %v5072 = vadd.f32 %v4910, %v4990
        %v5073 = vadd.f32 %v4911, %v5039
        %v5074 = vadd.f32 %v4912, %v4992
        %v5075 = vadd.f32 %v4913, %v5041
        %v5076 = vadd.f32 %v4914, %v4995
        %v5077 = vadd.f32 %v4915, %v5044
        %v5078 = vadd.f32 %v4916, %v4997
        %v5079 = vadd.f32 %v4917, %v5046
        %v5080 = vxor.u32 %v5048, 2147483648
        %v5081 = vxor.u32 %v5049, 2147483648
        %v5082 = vxor.u32 %v5050, 2147483648
        %v5083 = vxor.u32 %v5051, 2147483648
        %v5084 = vxor.u32 %v5052, 2147483648
        %v5085 = vxor.u32 %v5053, 2147483648
        %v5086 = vxor.u32 %v5054, 2147483648
        %v5087 = vxor.u32 %v5055, 2147483648
        %v5088 = vxor.u32 %v5056, 2147483648
        %v5089 = vxor.u32 %v5057, 2147483648
        %v5090 = vxor.u32 %v5058, 2147483648
        %v5091 = vxor.u32 %v5059, 2147483648
        %v5092 = vxor.u32 %v5060, 2147483648
        %v5093 = vxor.u32 %v5061, 2147483648
        %v5094 = vxor.u32 %v5062, 2147483648
        %v5095 = vxor.u32 %v5063, 2147483648
        %v5096 = vxor.u32 %v5064, 2147483648
        %v5097 = vxor.u32 %v5065, 2147483648
        %v5098 = vxor.u32 %v5066, 2147483648
        %v5099 = vxor.u32 %v5067, 2147483648
        %v5100 = vxor.u32 %v5068, 2147483648
        %v5101 = vxor.u32 %v5069, 2147483648
        %v5102 = vxor.u32 %v5070, 2147483648
        %v5103 = vxor.u32 %v5071, 2147483648
        %v5104 = vxor.u32 %v5072, 2147483648
        %v5105 = vxor.u32 %v5073, 2147483648
        %v5106 = vxor.u32 %v5074, 2147483648
        %v5107 = vxor.u32 %v5075, 2147483648
        %v5108 = vxor.u32 %v5076, 2147483648
        %v5109 = vxor.u32 %v5077, 2147483648
        %v5110 = vxor.u32 %v5078, 2147483648
        %v5111 = vxor.u32 %v5079, 2147483648
        %v5112 = vmul.f32 %v5080, 1.442695
        %v5113 = vpow.pop %v5112
        %v5114 = vmul.f32 %v5081, 1.442695
        %v5115 = vpow.pop %v5114
        %v5116 = vmul.f32 %v5082, 1.442695
        %v5117 = vpow.pop %v5116
        %v5118 = vmul.f32 %v5083, 1.442695
        %v5119 = vpow.pop %v5118
        %v5120 = vmul.f32 %v5084, 1.442695
        %v5121 = vpow.pop %v5120
        %v5122 = vmul.f32 %v5085, 1.442695
        %v5123 = vpow.pop %v5122
        %v5124 = vmul.f32 %v5086, 1.442695
        %v5125 = vpow.pop %v5124
        %v5126 = vmul.f32 %v5087, 1.442695
        %v5127 = vpow.pop %v5126
        %v5128 = vmul.f32 %v5088, 1.442695
        %v5129 = vpow.pop %v5128
        %v5130 = vmul.f32 %v5089, 1.442695
        %v5131 = vpow.pop %v5130
        %v5132 = vmul.f32 %v5090, 1.442695
        %v5133 = vpow.pop %v5132
        %v5134 = vmul.f32 %v5091, 1.442695
        %v5135 = vpow.pop %v5134
        %v5136 = vmul.f32 %v5092, 1.442695
        %v5137 = vpow.pop %v5136
        %v5138 = vmul.f32 %v5093, 1.442695
        %v5139 = vpow.pop %v5138
        %v5140 = vmul.f32 %v5094, 1.442695
        %v5141 = vpow.pop %v5140
        %v5142 = vmul.f32 %v5095, 1.442695
        %v5143 = vpow.pop %v5142
        %v5144 = vmul.f32 %v5096, 1.442695
        %v5145 = vpow.pop %v5144
        %v5146 = vmul.f32 %v5097, 1.442695
        %v5147 = vpow.pop %v5146
        %v5148 = vmul.f32 %v5098, 1.442695
        %v5149 = vpow.pop %v5148
        %v5150 = vmul.f32 %v5099, 1.442695
        %v5151 = vpow.pop %v5150
        %v5152 = vmul.f32 %v5100, 1.442695
        %v5153 = vpow.pop %v5152
        %v5154 = vmul.f32 %v5101, 1.442695
        %v5155 = vpow.pop %v5154
        %v5156 = vmul.f32 %v5102, 1.442695
        %v5157 = vpow.pop %v5156
        %v5158 = vmul.f32 %v5103, 1.442695
        %v5159 = vpow.pop %v5158
        %v5160 = vmul.f32 %v5104, 1.442695
        %v5161 = vpow.pop %v5160
        %v5162 = vmul.f32 %v5105, 1.442695
        %v5163 = vpow.pop %v5162
        %v5164 = vmul.f32 %v5106, 1.442695
        %v5165 = vpow.pop %v5164
        %v5166 = vmul.f32 %v5107, 1.442695
        %v5167 = vpow.pop %v5166
        %v5168 = vmul.f32 %v5108, 1.442695
        %v5169 = vpow.pop %v5168
        %v5170 = vmul.f32 %v5109, 1.442695
        %v5171 = vpow.pop %v5170
        %v5172 = vmul.f32 %v5110, 1.442695
        %v5173 = vpow.pop %v5172
        %v5174 = vmul.f32 %v5111, 1.442695
        %v5175 = vpow.pop %v5174
        %v5176 = vadd.f32 %v5113, 1.0
        %v5177 = vadd.f32 %v5115, 1.0
        %v5178 = vadd.f32 %v5117, 1.0
        %v5179 = vadd.f32 %v5119, 1.0
        %v5180 = vadd.f32 %v5121, 1.0
        %v5181 = vadd.f32 %v5123, 1.0
        %v5182 = vadd.f32 %v5125, 1.0
        %v5183 = vadd.f32 %v5127, 1.0
        %v5184 = vadd.f32 %v5129, 1.0
        %v5185 = vadd.f32 %v5131, 1.0
        %v5186 = vadd.f32 %v5133, 1.0
        %v5187 = vadd.f32 %v5135, 1.0
        %v5188 = vadd.f32 %v5137, 1.0
        %v5189 = vadd.f32 %v5139, 1.0
        %v5190 = vadd.f32 %v5141, 1.0
        %v5191 = vadd.f32 %v5143, 1.0
        %v5192 = vadd.f32 %v5145, 1.0
        %v5193 = vadd.f32 %v5147, 1.0
        %v5194 = vadd.f32 %v5149, 1.0
        %v5195 = vadd.f32 %v5151, 1.0
        %v5196 = vadd.f32 %v5153, 1.0
        %v5197 = vadd.f32 %v5155, 1.0
        %v5198 = vadd.f32 %v5157, 1.0
        %v5199 = vadd.f32 %v5159, 1.0
        %v5200 = vadd.f32 %v5161, 1.0
        %v5201 = vadd.f32 %v5163, 1.0
        %v5202 = vadd.f32 %v5165, 1.0
        %v5203 = vadd.f32 %v5167, 1.0
        %v5204 = vadd.f32 %v5169, 1.0
        %v5205 = vadd.f32 %v5171, 1.0
        %v5206 = vadd.f32 %v5173, 1.0
        %v5207 = vadd.f32 %v5175, 1.0
        %v5208 = vrcp.pop %v5176
        %v5209 = vmul.f32 %v5176, %v5208
        %v5210 = vsub.f32 1.0, %v5209
        %v5211 = vmul.f32 %v5208, %v5210
        %v5212 = vadd.f32 %v5208, %v5211
        %vm5213 = vweird.f32 %v5176
        %vm5214 = vweird.f32 %v5208
        %vm5215 = vmor %vm5213, %vm5214
        %v5216 = vsel %vm5215, %v5208, %v5212
        %v5217 = vand.u32 2147483647, %v5176
        %vm5218 = vcmp.eq.f32.partialorder %v5217, 8.507059e+37
        %v5219 = vand.u32 %v5176, 2147483648
        %v5220 = vor.u32 1.1754944e-38, %v5219
        %v5221 = vsel %vm5218, %v5220, %v5216
        %v5222 = vmul.f32 1.0, %v5221
        %v5223 = vrcp.pop %v5177
        %v5224 = vmul.f32 %v5177, %v5223
        %v5225 = vsub.f32 1.0, %v5224
        %v5226 = vmul.f32 %v5223, %v5225
        %v5227 = vadd.f32 %v5223, %v5226
        %vm5228 = vweird.f32 %v5177
        %vm5229 = vweird.f32 %v5223
        %vm5230 = vmor %vm5228, %vm5229
        %v5231 = vsel %vm5230, %v5223, %v5227
        %v5232 = vand.u32 2147483647, %v5177
        %vm5233 = vcmp.eq.f32.partialorder %v5232, 8.507059e+37
        %v5234 = vand.u32 %v5177, 2147483648
        %v5235 = vor.u32 1.1754944e-38, %v5234
        %v5236 = vsel %vm5233, %v5235, %v5231
        %v5237 = vmul.f32 1.0, %v5236
        %v5238 = vrcp.pop %v5178
        %v5239 = vmul.f32 %v5178, %v5238
        %v5240 = vsub.f32 1.0, %v5239
        %v5241 = vmul.f32 %v5238, %v5240
        %v5242 = vadd.f32 %v5238, %v5241
        %vm5243 = vweird.f32 %v5178
        %vm5244 = vweird.f32 %v5238
        %vm5245 = vmor %vm5243, %vm5244
        %v5246 = vsel %vm5245, %v5238, %v5242
        %v5247 = vand.u32 2147483647, %v5178
        %vm5248 = vcmp.eq.f32.partialorder %v5247, 8.507059e+37
        %v5249 = vand.u32 %v5178, 2147483648
        %v5250 = vor.u32 1.1754944e-38, %v5249
        %v5251 = vsel %vm5248, %v5250, %v5246
        %v5252 = vmul.f32 1.0, %v5251
        %v5253 = vrcp.pop %v5179
        %v5254 = vmul.f32 %v5179, %v5253
        %v5255 = vsub.f32 1.0, %v5254
        %v5256 = vmul.f32 %v5253, %v5255
        %v5257 = vadd.f32 %v5253, %v5256
        %vm5258 = vweird.f32 %v5179
        %vm5259 = vweird.f32 %v5253
        %vm5260 = vmor %vm5258, %vm5259
        %v5261 = vsel %vm5260, %v5253, %v5257
        %v5262 = vand.u32 2147483647, %v5179
        %vm5263 = vcmp.eq.f32.partialorder %v5262, 8.507059e+37
        %v5264 = vand.u32 %v5179, 2147483648
        %v5265 = vor.u32 1.1754944e-38, %v5264
        %v5266 = vsel %vm5263, %v5265, %v5261
        %v5267 = vmul.f32 1.0, %v5266
        %v5268 = vrcp.pop %v5180
        %v5269 = vmul.f32 %v5180, %v5268
        %v5270 = vsub.f32 1.0, %v5269
        %v5271 = vmul.f32 %v5268, %v5270
        %v5272 = vadd.f32 %v5268, %v5271
        %vm5273 = vweird.f32 %v5180
        %vm5274 = vweird.f32 %v5268
        %vm5275 = vmor %vm5273, %vm5274
        %v5276 = vsel %vm5275, %v5268, %v5272
        %v5277 = vand.u32 2147483647, %v5180
        %vm5278 = vcmp.eq.f32.partialorder %v5277, 8.507059e+37
        %v5279 = vand.u32 %v5180, 2147483648
        %v5280 = vor.u32 1.1754944e-38, %v5279
        %v5281 = vsel %vm5278, %v5280, %v5276
        %v5282 = vmul.f32 1.0, %v5281
        %v5283 = vrcp.pop %v5181
        %v5284 = vmul.f32 %v5181, %v5283
        %v5285 = vsub.f32 1.0, %v5284
        %v5286 = vmul.f32 %v5283, %v5285
        %v5287 = vadd.f32 %v5283, %v5286
        %vm5288 = vweird.f32 %v5181
        %vm5289 = vweird.f32 %v5283
        %vm5290 = vmor %vm5288, %vm5289
        %v5291 = vsel %vm5290, %v5283, %v5287
        %v5292 = vand.u32 2147483647, %v5181
        %vm5293 = vcmp.eq.f32.partialorder %v5292, 8.507059e+37
        %v5294 = vand.u32 %v5181, 2147483648
        %v5295 = vor.u32 1.1754944e-38, %v5294
        %v5296 = vsel %vm5293, %v5295, %v5291
        %v5297 = vmul.f32 1.0, %v5296
        %v5298 = vrcp.pop %v5182
        %v5299 = vmul.f32 %v5182, %v5298
        %v5300 = vsub.f32 1.0, %v5299
        %v5301 = vmul.f32 %v5298, %v5300
        %v5302 = vadd.f32 %v5298, %v5301
        %vm5303 = vweird.f32 %v5182
        %vm5304 = vweird.f32 %v5298
        %vm5305 = vmor %vm5303, %vm5304
        %v5306 = vsel %vm5305, %v5298, %v5302
        %v5307 = vand.u32 2147483647, %v5182
        %vm5308 = vcmp.eq.f32.partialorder %v5307, 8.507059e+37
        %v5309 = vand.u32 %v5182, 2147483648
        %v5310 = vor.u32 1.1754944e-38, %v5309
        %v5311 = vsel %vm5308, %v5310, %v5306
        %v5312 = vmul.f32 1.0, %v5311
        %v5313 = vrcp.pop %v5183
        %v5314 = vmul.f32 %v5183, %v5313
        %v5315 = vsub.f32 1.0, %v5314
        %v5316 = vmul.f32 %v5313, %v5315
        %v5317 = vadd.f32 %v5313, %v5316
        %vm5318 = vweird.f32 %v5183
        %vm5319 = vweird.f32 %v5313
        %vm5320 = vmor %vm5318, %vm5319
        %v5321 = vsel %vm5320, %v5313, %v5317
        %v5322 = vand.u32 2147483647, %v5183
        %vm5323 = vcmp.eq.f32.partialorder %v5322, 8.507059e+37
        %v5324 = vand.u32 %v5183, 2147483648
        %v5325 = vor.u32 1.1754944e-38, %v5324
        %v5326 = vsel %vm5323, %v5325, %v5321
        %v5327 = vmul.f32 1.0, %v5326
        %v5328 = vrcp.pop %v5184
        %v5329 = vmul.f32 %v5184, %v5328
        %v5330 = vsub.f32 1.0, %v5329
        %v5331 = vmul.f32 %v5328, %v5330
        %v5332 = vadd.f32 %v5328, %v5331
        %vm5333 = vweird.f32 %v5184
        %vm5334 = vweird.f32 %v5328
        %vm5335 = vmor %vm5333, %vm5334
        %v5336 = vsel %vm5335, %v5328, %v5332
        %v5337 = vand.u32 2147483647, %v5184
        %vm5338 = vcmp.eq.f32.partialorder %v5337, 8.507059e+37
        %v5339 = vand.u32 %v5184, 2147483648
        %v5340 = vor.u32 1.1754944e-38, %v5339
        %v5341 = vsel %vm5338, %v5340, %v5336
        %v5342 = vmul.f32 1.0, %v5341
        %v5343 = vrcp.pop %v5185
        %v5344 = vmul.f32 %v5185, %v5343
        %v5345 = vsub.f32 1.0, %v5344
        %v5346 = vmul.f32 %v5343, %v5345
        %v5347 = vadd.f32 %v5343, %v5346
        %vm5348 = vweird.f32 %v5185
        %vm5349 = vweird.f32 %v5343
        %vm5350 = vmor %vm5348, %vm5349
        %v5351 = vsel %vm5350, %v5343, %v5347
        %v5352 = vand.u32 2147483647, %v5185
        %vm5353 = vcmp.eq.f32.partialorder %v5352, 8.507059e+37
        %v5354 = vand.u32 %v5185, 2147483648
        %v5355 = vor.u32 1.1754944e-38, %v5354
        %v5356 = vsel %vm5353, %v5355, %v5351
        %v5357 = vmul.f32 1.0, %v5356
        %v5358 = vrcp.pop %v5186
        %v5359 = vmul.f32 %v5186, %v5358
        %v5360 = vsub.f32 1.0, %v5359
        %v5361 = vmul.f32 %v5358, %v5360
        %v5362 = vadd.f32 %v5358, %v5361
        %vm5363 = vweird.f32 %v5186
        %vm5364 = vweird.f32 %v5358
        %vm5365 = vmor %vm5363, %vm5364
        %v5366 = vsel %vm5365, %v5358, %v5362
        %v5367 = vand.u32 2147483647, %v5186
        %vm5368 = vcmp.eq.f32.partialorder %v5367, 8.507059e+37
        %v5369 = vand.u32 %v5186, 2147483648
        %v5370 = vor.u32 1.1754944e-38, %v5369
        %v5371 = vsel %vm5368, %v5370, %v5366
        %v5372 = vmul.f32 1.0, %v5371
        %v5373 = vrcp.pop %v5187
        %v5374 = vmul.f32 %v5187, %v5373
        %v5375 = vsub.f32 1.0, %v5374
        %v5376 = vmul.f32 %v5373, %v5375
        %v5377 = vadd.f32 %v5373, %v5376
        %vm5378 = vweird.f32 %v5187
        %vm5379 = vweird.f32 %v5373
        %vm5380 = vmor %vm5378, %vm5379
        %v5381 = vsel %vm5380, %v5373, %v5377
        %v5382 = vand.u32 2147483647, %v5187
        %vm5383 = vcmp.eq.f32.partialorder %v5382, 8.507059e+37
        %v5384 = vand.u32 %v5187, 2147483648
        %v5385 = vor.u32 1.1754944e-38, %v5384
        %v5386 = vsel %vm5383, %v5385, %v5381
        %v5387 = vmul.f32 1.0, %v5386
        %v5388 = vrcp.pop %v5188
        %v5389 = vmul.f32 %v5188, %v5388
        %v5390 = vsub.f32 1.0, %v5389
        %v5391 = vmul.f32 %v5388, %v5390
        %v5392 = vadd.f32 %v5388, %v5391
        %vm5393 = vweird.f32 %v5188
        %vm5394 = vweird.f32 %v5388
        %vm5395 = vmor %vm5393, %vm5394
        %v5396 = vsel %vm5395, %v5388, %v5392
        %v5397 = vand.u32 2147483647, %v5188
        %vm5398 = vcmp.eq.f32.partialorder %v5397, 8.507059e+37
        %v5399 = vand.u32 %v5188, 2147483648
        %v5400 = vor.u32 1.1754944e-38, %v5399
        %v5401 = vsel %vm5398, %v5400, %v5396
        %v5402 = vmul.f32 1.0, %v5401
        %v5403 = vrcp.pop %v5189
        %v5404 = vmul.f32 %v5189, %v5403
        %v5405 = vsub.f32 1.0, %v5404
        %v5406 = vmul.f32 %v5403, %v5405
        %v5407 = vadd.f32 %v5403, %v5406
        %vm5408 = vweird.f32 %v5189
        %vm5409 = vweird.f32 %v5403
        %vm5410 = vmor %vm5408, %vm5409
        %v5411 = vsel %vm5410, %v5403, %v5407
        %v5412 = vand.u32 2147483647, %v5189
        %vm5413 = vcmp.eq.f32.partialorder %v5412, 8.507059e+37
        %v5414 = vand.u32 %v5189, 2147483648
        %v5415 = vor.u32 1.1754944e-38, %v5414
        %v5416 = vsel %vm5413, %v5415, %v5411
        %v5417 = vmul.f32 1.0, %v5416
        %v5418 = vrcp.pop %v5190
        %v5419 = vmul.f32 %v5190, %v5418
        %v5420 = vsub.f32 1.0, %v5419
        %v5421 = vmul.f32 %v5418, %v5420
        %v5422 = vadd.f32 %v5418, %v5421
        %vm5423 = vweird.f32 %v5190
        %vm5424 = vweird.f32 %v5418
        %vm5425 = vmor %vm5423, %vm5424
        %v5426 = vsel %vm5425, %v5418, %v5422
        %v5427 = vand.u32 2147483647, %v5190
        %vm5428 = vcmp.eq.f32.partialorder %v5427, 8.507059e+37
        %v5429 = vand.u32 %v5190, 2147483648
        %v5430 = vor.u32 1.1754944e-38, %v5429
        %v5431 = vsel %vm5428, %v5430, %v5426
        %v5432 = vmul.f32 1.0, %v5431
        %v5433 = vrcp.pop %v5191
        %v5434 = vmul.f32 %v5191, %v5433
        %v5435 = vsub.f32 1.0, %v5434
        %v5436 = vmul.f32 %v5433, %v5435
        %v5437 = vadd.f32 %v5433, %v5436
        %vm5438 = vweird.f32 %v5191
        %vm5439 = vweird.f32 %v5433
        %vm5440 = vmor %vm5438, %vm5439
        %v5441 = vsel %vm5440, %v5433, %v5437
        %v5442 = vand.u32 2147483647, %v5191
        %vm5443 = vcmp.eq.f32.partialorder %v5442, 8.507059e+37
        %v5444 = vand.u32 %v5191, 2147483648
        %v5445 = vor.u32 1.1754944e-38, %v5444
        %v5446 = vsel %vm5443, %v5445, %v5441
        %v5447 = vmul.f32 1.0, %v5446
        %v5448 = vrcp.pop %v5192
        %v5449 = vmul.f32 %v5192, %v5448
        %v5450 = vsub.f32 1.0, %v5449
        %v5451 = vmul.f32 %v5448, %v5450
        %v5452 = vadd.f32 %v5448, %v5451
        %vm5453 = vweird.f32 %v5192
        %vm5454 = vweird.f32 %v5448
        %vm5455 = vmor %vm5453, %vm5454
        %v5456 = vsel %vm5455, %v5448, %v5452
        %v5457 = vand.u32 2147483647, %v5192
        %vm5458 = vcmp.eq.f32.partialorder %v5457, 8.507059e+37
        %v5459 = vand.u32 %v5192, 2147483648
        %v5460 = vor.u32 1.1754944e-38, %v5459
        %v5461 = vsel %vm5458, %v5460, %v5456
        %v5462 = vmul.f32 1.0, %v5461
        %v5463 = vrcp.pop %v5193
        %v5464 = vmul.f32 %v5193, %v5463
        %v5465 = vsub.f32 1.0, %v5464
        %v5466 = vmul.f32 %v5463, %v5465
        %v5467 = vadd.f32 %v5463, %v5466
        %vm5468 = vweird.f32 %v5193
        %vm5469 = vweird.f32 %v5463
        %vm5470 = vmor %vm5468, %vm5469
        %v5471 = vsel %vm5470, %v5463, %v5467
        %v5472 = vand.u32 2147483647, %v5193
        %vm5473 = vcmp.eq.f32.partialorder %v5472, 8.507059e+37
        %v5474 = vand.u32 %v5193, 2147483648
        %v5475 = vor.u32 1.1754944e-38, %v5474
        %v5476 = vsel %vm5473, %v5475, %v5471
        %v5477 = vmul.f32 1.0, %v5476
        %v5478 = vrcp.pop %v5194
        %v5479 = vmul.f32 %v5194, %v5478
        %v5480 = vsub.f32 1.0, %v5479
        %v5481 = vmul.f32 %v5478, %v5480
        %v5482 = vadd.f32 %v5478, %v5481
        %vm5483 = vweird.f32 %v5194
        %vm5484 = vweird.f32 %v5478
        %vm5485 = vmor %vm5483, %vm5484
        %v5486 = vsel %vm5485, %v5478, %v5482
        %v5487 = vand.u32 2147483647, %v5194
        %vm5488 = vcmp.eq.f32.partialorder %v5487, 8.507059e+37
        %v5489 = vand.u32 %v5194, 2147483648
        %v5490 = vor.u32 1.1754944e-38, %v5489
        %v5491 = vsel %vm5488, %v5490, %v5486
        %v5492 = vmul.f32 1.0, %v5491
        %v5493 = vrcp.pop %v5195
        %v5494 = vmul.f32 %v5195, %v5493
        %v5495 = vsub.f32 1.0, %v5494
        %v5496 = vmul.f32 %v5493, %v5495
        %v5497 = vadd.f32 %v5493, %v5496
        %vm5498 = vweird.f32 %v5195
        %vm5499 = vweird.f32 %v5493
        %vm5500 = vmor %vm5498, %vm5499
        %v5501 = vsel %vm5500, %v5493, %v5497
        %v5502 = vand.u32 2147483647, %v5195
        %vm5503 = vcmp.eq.f32.partialorder %v5502, 8.507059e+37
        %v5504 = vand.u32 %v5195, 2147483648
        %v5505 = vor.u32 1.1754944e-38, %v5504
        %v5506 = vsel %vm5503, %v5505, %v5501
        %v5507 = vmul.f32 1.0, %v5506
        %v5508 = vrcp.pop %v5196
        %v5509 = vmul.f32 %v5196, %v5508
        %v5510 = vsub.f32 1.0, %v5509
        %v5511 = vmul.f32 %v5508, %v5510
        %v5512 = vadd.f32 %v5508, %v5511
        %vm5513 = vweird.f32 %v5196
        %vm5514 = vweird.f32 %v5508
        %vm5515 = vmor %vm5513, %vm5514
        %v5516 = vsel %vm5515, %v5508, %v5512
        %v5517 = vand.u32 2147483647, %v5196
        %vm5518 = vcmp.eq.f32.partialorder %v5517, 8.507059e+37
        %v5519 = vand.u32 %v5196, 2147483648
        %v5520 = vor.u32 1.1754944e-38, %v5519
        %v5521 = vsel %vm5518, %v5520, %v5516
        %v5522 = vmul.f32 1.0, %v5521
        %v5523 = vrcp.pop %v5197
        %v5524 = vmul.f32 %v5197, %v5523
        %v5525 = vsub.f32 1.0, %v5524
        %v5526 = vmul.f32 %v5523, %v5525
        %v5527 = vadd.f32 %v5523, %v5526
        %vm5528 = vweird.f32 %v5197
        %vm5529 = vweird.f32 %v5523
        %vm5530 = vmor %vm5528, %vm5529
        %v5531 = vsel %vm5530, %v5523, %v5527
        %v5532 = vand.u32 2147483647, %v5197
        %vm5533 = vcmp.eq.f32.partialorder %v5532, 8.507059e+37
        %v5534 = vand.u32 %v5197, 2147483648
        %v5535 = vor.u32 1.1754944e-38, %v5534
        %v5536 = vsel %vm5533, %v5535, %v5531
        %v5537 = vmul.f32 1.0, %v5536
        %v5538 = vrcp.pop %v5198
        %v5539 = vmul.f32 %v5198, %v5538
        %v5540 = vsub.f32 1.0, %v5539
        %v5541 = vmul.f32 %v5538, %v5540
        %v5542 = vadd.f32 %v5538, %v5541
        %vm5543 = vweird.f32 %v5198
        %vm5544 = vweird.f32 %v5538
        %vm5545 = vmor %vm5543, %vm5544
        %v5546 = vsel %vm5545, %v5538, %v5542
        %v5547 = vand.u32 2147483647, %v5198
        %vm5548 = vcmp.eq.f32.partialorder %v5547, 8.507059e+37
        %v5549 = vand.u32 %v5198, 2147483648
        %v5550 = vor.u32 1.1754944e-38, %v5549
        %v5551 = vsel %vm5548, %v5550, %v5546
        %v5552 = vmul.f32 1.0, %v5551
        %v5553 = vrcp.pop %v5199
        %v5554 = vmul.f32 %v5199, %v5553
        %v5555 = vsub.f32 1.0, %v5554
        %v5556 = vmul.f32 %v5553, %v5555
        %v5557 = vadd.f32 %v5553, %v5556
        %vm5558 = vweird.f32 %v5199
        %vm5559 = vweird.f32 %v5553
        %vm5560 = vmor %vm5558, %vm5559
        %v5561 = vsel %vm5560, %v5553, %v5557
        %v5562 = vand.u32 2147483647, %v5199
        %vm5563 = vcmp.eq.f32.partialorder %v5562, 8.507059e+37
        %v5564 = vand.u32 %v5199, 2147483648
        %v5565 = vor.u32 1.1754944e-38, %v5564
        %v5566 = vsel %vm5563, %v5565, %v5561
        %v5567 = vmul.f32 1.0, %v5566
        %v5568 = vrcp.pop %v5200
        %v5569 = vmul.f32 %v5200, %v5568
        %v5570 = vsub.f32 1.0, %v5569
        %v5571 = vmul.f32 %v5568, %v5570
        %v5572 = vadd.f32 %v5568, %v5571
        %vm5573 = vweird.f32 %v5200
        %vm5574 = vweird.f32 %v5568
        %vm5575 = vmor %vm5573, %vm5574
        %v5576 = vsel %vm5575, %v5568, %v5572
        %v5577 = vand.u32 2147483647, %v5200
        %vm5578 = vcmp.eq.f32.partialorder %v5577, 8.507059e+37
        %v5579 = vand.u32 %v5200, 2147483648
        %v5580 = vor.u32 1.1754944e-38, %v5579
        %v5581 = vsel %vm5578, %v5580, %v5576
        %v5582 = vmul.f32 1.0, %v5581
        %v5583 = vrcp.pop %v5201
        %v5584 = vmul.f32 %v5201, %v5583
        %v5585 = vsub.f32 1.0, %v5584
        %v5586 = vmul.f32 %v5583, %v5585
        %v5587 = vadd.f32 %v5583, %v5586
        %vm5588 = vweird.f32 %v5201
        %vm5589 = vweird.f32 %v5583
        %vm5590 = vmor %vm5588, %vm5589
        %v5591 = vsel %vm5590, %v5583, %v5587
        %v5592 = vand.u32 2147483647, %v5201
        %vm5593 = vcmp.eq.f32.partialorder %v5592, 8.507059e+37
        %v5594 = vand.u32 %v5201, 2147483648
        %v5595 = vor.u32 1.1754944e-38, %v5594
        %v5596 = vsel %vm5593, %v5595, %v5591
        %v5597 = vmul.f32 1.0, %v5596
        %v5598 = vrcp.pop %v5202
        %v5599 = vmul.f32 %v5202, %v5598
        %v5600 = vsub.f32 1.0, %v5599
        %v5601 = vmul.f32 %v5598, %v5600
        %v5602 = vadd.f32 %v5598, %v5601
        %vm5603 = vweird.f32 %v5202
        %vm5604 = vweird.f32 %v5598
        %vm5605 = vmor %vm5603, %vm5604
        %v5606 = vsel %vm5605, %v5598, %v5602
        %v5607 = vand.u32 2147483647, %v5202
        %vm5608 = vcmp.eq.f32.partialorder %v5607, 8.507059e+37
        %v5609 = vand.u32 %v5202, 2147483648
        %v5610 = vor.u32 1.1754944e-38, %v5609
        %v5611 = vsel %vm5608, %v5610, %v5606
        %v5612 = vmul.f32 1.0, %v5611
        %v5613 = vrcp.pop %v5203
        %v5614 = vmul.f32 %v5203, %v5613
        %v5615 = vsub.f32 1.0, %v5614
        %v5616 = vmul.f32 %v5613, %v5615
        %v5617 = vadd.f32 %v5613, %v5616
        %vm5618 = vweird.f32 %v5203
        %vm5619 = vweird.f32 %v5613
        %vm5620 = vmor %vm5618, %vm5619
        %v5621 = vsel %vm5620, %v5613, %v5617
        %v5622 = vand.u32 2147483647, %v5203
        %vm5623 = vcmp.eq.f32.partialorder %v5622, 8.507059e+37
        %v5624 = vand.u32 %v5203, 2147483648
        %v5625 = vor.u32 1.1754944e-38, %v5624
        %v5626 = vsel %vm5623, %v5625, %v5621
        %v5627 = vmul.f32 1.0, %v5626
        %v5628 = vrcp.pop %v5204
        %v5629 = vmul.f32 %v5204, %v5628
        %v5630 = vsub.f32 1.0, %v5629
        %v5631 = vmul.f32 %v5628, %v5630
        %v5632 = vadd.f32 %v5628, %v5631
        %vm5633 = vweird.f32 %v5204
        %vm5634 = vweird.f32 %v5628
        %vm5635 = vmor %vm5633, %vm5634
        %v5636 = vsel %vm5635, %v5628, %v5632
        %v5637 = vand.u32 2147483647, %v5204
        %vm5638 = vcmp.eq.f32.partialorder %v5637, 8.507059e+37
        %v5639 = vand.u32 %v5204, 2147483648
        %v5640 = vor.u32 1.1754944e-38, %v5639
        %v5641 = vsel %vm5638, %v5640, %v5636
        %v5642 = vmul.f32 1.0, %v5641
        %v5643 = vrcp.pop %v5205
        %v5644 = vmul.f32 %v5205, %v5643
        %v5645 = vsub.f32 1.0, %v5644
        %v5646 = vmul.f32 %v5643, %v5645
        %v5647 = vadd.f32 %v5643, %v5646
        %vm5648 = vweird.f32 %v5205
        %vm5649 = vweird.f32 %v5643
        %vm5650 = vmor %vm5648, %vm5649
        %v5651 = vsel %vm5650, %v5643, %v5647
        %v5652 = vand.u32 2147483647, %v5205
        %vm5653 = vcmp.eq.f32.partialorder %v5652, 8.507059e+37
        %v5654 = vand.u32 %v5205, 2147483648
        %v5655 = vor.u32 1.1754944e-38, %v5654
        %v5656 = vsel %vm5653, %v5655, %v5651
        %v5657 = vmul.f32 1.0, %v5656
        %v5658 = vrcp.pop %v5206
        %v5659 = vmul.f32 %v5206, %v5658
        %v5660 = vsub.f32 1.0, %v5659
        %v5661 = vmul.f32 %v5658, %v5660
        %v5662 = vadd.f32 %v5658, %v5661
        %vm5663 = vweird.f32 %v5206
        %vm5664 = vweird.f32 %v5658
        %vm5665 = vmor %vm5663, %vm5664
        %v5666 = vsel %vm5665, %v5658, %v5662
        %v5667 = vand.u32 2147483647, %v5206
        %vm5668 = vcmp.eq.f32.partialorder %v5667, 8.507059e+37
        %v5669 = vand.u32 %v5206, 2147483648
        %v5670 = vor.u32 1.1754944e-38, %v5669
        %v5671 = vsel %vm5668, %v5670, %v5666
        %v5672 = vmul.f32 1.0, %v5671
        %v5673 = vrcp.pop %v5207
        %v5674 = vmul.f32 %v5207, %v5673
        %v5675 = vsub.f32 1.0, %v5674
        %v5676 = vmul.f32 %v5673, %v5675
        %v5677 = vadd.f32 %v5673, %v5676
        %vm5678 = vweird.f32 %v5207
        %vm5679 = vweird.f32 %v5673
        %vm5680 = vmor %vm5678, %vm5679
        %v5681 = vsel %vm5680, %v5673, %v5677
        %v5682 = vand.u32 2147483647, %v5207
        %vm5683 = vcmp.eq.f32.partialorder %v5682, 8.507059e+37
        %v5684 = vand.u32 %v5207, 2147483648
        %v5685 = vor.u32 1.1754944e-38, %v5684
        %v5686 = vsel %vm5683, %v5685, %v5681
        %v5687 = vmul.f32 1.0, %v5686
        %v5688 = vtanh.pop %v5049
        %v5689 = vtanh.pop %v5051
        %v5690 = vtanh.pop %v5053
        %v5691 = vtanh.pop %v5055
        %v5692 = vtanh.pop %v5057
        %v5693 = vtanh.pop %v5059
        %v5694 = vtanh.pop %v5061
        %v5695 = vtanh.pop %v5063
        %v5696 = vtanh.pop %v5065
        %v5697 = vtanh.pop %v5067
        %v5698 = vtanh.pop %v5069
        %v5699 = vtanh.pop %v5071
        %v5700 = vtanh.pop %v5073
        %v5701 = vtanh.pop %v5075
        %v5702 = vtanh.pop %v5077
        %v5703 = vtanh.pop %v5079
        %v5704 = vmul.f32 %v5222, %v4758
        %v5705 = vmul.f32 %v5252, %v4759
        %v5706 = vmul.f32 %v5282, %v4760
        %v5707 = vmul.f32 %v5312, %v4761
        %v5708 = vmul.f32 %v5342, %v4762
        %v5709 = vmul.f32 %v5372, %v4763
        %v5710 = vmul.f32 %v5402, %v4764
        %v5711 = vmul.f32 %v5432, %v4765
        %v5712 = vmul.f32 %v5462, %v4766
        %v5713 = vmul.f32 %v5492, %v4767
        %v5714 = vmul.f32 %v5522, %v4768
        %v5715 = vmul.f32 %v5552, %v4769
        %v5716 = vmul.f32 %v5582, %v4770
        %v5717 = vmul.f32 %v5612, %v4771
        %v5718 = vmul.f32 %v5642, %v4772
        %v5719 = vmul.f32 %v5672, %v4773
        %5736 = vrot.lane.b32.xlu0 %v5688, 64
        %v5737 = vpop.permute.xlu0 %5736
        %5738 = vrot.lane.b32.xlu0 %v5689, 64
        %v5739 = vpop.permute.xlu0 %5738
        %5740 = vrot.lane.b32.xlu0 %v5690, 64
        %v5741 = vpop.permute.xlu0 %5740
        %5742 = vrot.lane.b32.xlu0 %v5691, 64
        %v5743 = vpop.permute.xlu0 %5742
        %5744 = vrot.lane.b32.xlu0 %v5692, 64
        %v5745 = vpop.permute.xlu0 %5744
        %5746 = vrot.lane.b32.xlu0 %v5693, 64
        %v5747 = vpop.permute.xlu0 %5746
        %5748 = vrot.lane.b32.xlu0 %v5694, 64
        %v5749 = vpop.permute.xlu0 %5748
        %5750 = vrot.lane.b32.xlu0 %v5695, 64
        %v5751 = vpop.permute.xlu0 %5750
        %5752 = vrot.lane.b32.xlu0 %v5696, 64
        %v5753 = vpop.permute.xlu0 %5752
        %5754 = vrot.lane.b32.xlu0 %v5697, 64
        %v5755 = vpop.permute.xlu0 %5754
        %5756 = vrot.lane.b32.xlu0 %v5698, 64
        %v5757 = vpop.permute.xlu0 %5756
        %5758 = vrot.lane.b32.xlu0 %v5699, 64
        %v5759 = vpop.permute.xlu0 %5758
        %5760 = vrot.lane.b32.xlu0 %v5700, 64
        %v5761 = vpop.permute.xlu0 %5760
        %5762 = vrot.lane.b32.xlu0 %v5701, 64
        %v5763 = vpop.permute.xlu0 %5762
        %5764 = vrot.lane.b32.xlu0 %v5702, 64
        %v5765 = vpop.permute.xlu0 %5764
        %5766 = vrot.lane.b32.xlu0 %v5703, 64
        %v5767 = vpop.permute.xlu0 %5766
        %v5784 = vmul.f32 %v5222, %v5737
        %v5785 = vmul.f32 %v5252, %v5739
        %v5786 = vmul.f32 %v5282, %v5741
        %v5787 = vmul.f32 %v5312, %v5743
        %v5788 = vmul.f32 %v5342, %v5745
        %v5789 = vmul.f32 %v5372, %v5747
        %v5790 = vmul.f32 %v5402, %v5749
        %v5791 = vmul.f32 %v5432, %v5751
        %v5792 = vmul.f32 %v5462, %v5753
        %v5793 = vmul.f32 %v5492, %v5755
        %v5794 = vmul.f32 %v5522, %v5757
        %v5795 = vmul.f32 %v5552, %v5759
        %v5796 = vmul.f32 %v5582, %v5761
        %v5797 = vmul.f32 %v5612, %v5763
        %v5798 = vmul.f32 %v5642, %v5765
        %v5799 = vmul.f32 %v5672, %v5767
        %5816 = vrot.lane.b32.xlu0 %v5784, 64
        %v5817 = vpop.permute.xlu0 %5816
        %5818 = vrot.lane.b32.xlu0 %v5785, 64
        %v5819 = vpop.permute.xlu0 %5818
        %5820 = vrot.lane.b32.xlu0 %v5786, 64
        %v5821 = vpop.permute.xlu0 %5820
        %5822 = vrot.lane.b32.xlu0 %v5787, 64
        %v5823 = vpop.permute.xlu0 %5822
        %5824 = vrot.lane.b32.xlu0 %v5788, 64
        %v5825 = vpop.permute.xlu0 %5824
        %5826 = vrot.lane.b32.xlu0 %v5789, 64
        %v5827 = vpop.permute.xlu0 %5826
        %5828 = vrot.lane.b32.xlu0 %v5790, 64
        %v5829 = vpop.permute.xlu0 %5828
        %5830 = vrot.lane.b32.xlu0 %v5791, 64
        %v5831 = vpop.permute.xlu0 %5830
        %5832 = vrot.lane.b32.xlu0 %v5792, 64
        %v5833 = vpop.permute.xlu0 %5832
        %5834 = vrot.lane.b32.xlu0 %v5793, 64
        %v5835 = vpop.permute.xlu0 %5834
        %5836 = vrot.lane.b32.xlu0 %v5794, 64
        %v5837 = vpop.permute.xlu0 %5836
        %5838 = vrot.lane.b32.xlu0 %v5795, 64
        %v5839 = vpop.permute.xlu0 %5838
        %5840 = vrot.lane.b32.xlu0 %v5796, 64
        %v5841 = vpop.permute.xlu0 %5840
        %5842 = vrot.lane.b32.xlu0 %v5797, 64
        %v5843 = vpop.permute.xlu0 %5842
        %5844 = vrot.lane.b32.xlu0 %v5798, 64
        %v5845 = vpop.permute.xlu0 %5844
        %5846 = vrot.lane.b32.xlu0 %v5799, 64
        %v5847 = vpop.permute.xlu0 %5846
        %v5864 = vadd.f32 %v5704, %v5817
        %v5865 = vadd.f32 %v5705, %v5819
        %v5866 = vadd.f32 %v5706, %v5821
        %v5867 = vadd.f32 %v5707, %v5823
        %v5868 = vadd.f32 %v5708, %v5825
        %v5869 = vadd.f32 %v5709, %v5827
        %v5870 = vadd.f32 %v5710, %v5829
        %v5871 = vadd.f32 %v5711, %v5831
        %v5872 = vadd.f32 %v5712, %v5833
        %v5873 = vadd.f32 %v5713, %v5835
        %v5874 = vadd.f32 %v5714, %v5837
        %v5875 = vadd.f32 %v5715, %v5839
        %v5876 = vadd.f32 %v5716, %v5841
        %v5877 = vadd.f32 %v5717, %v5843
        %v5878 = vadd.f32 %v5718, %v5845
        %v5879 = vadd.f32 %v5719, %v5847
        %v5880 = vtanh.pop %v5864
        %v5881 = vtanh.pop %v5865
        %v5882 = vtanh.pop %v5866
        %v5883 = vtanh.pop %v5867
        %v5884 = vtanh.pop %v5868
        %v5885 = vtanh.pop %v5869
        %v5886 = vtanh.pop %v5870
        %v5887 = vtanh.pop %v5871
        %v5888 = vtanh.pop %v5872
        %v5889 = vtanh.pop %v5873
        %v5890 = vtanh.pop %v5874
        %v5891 = vtanh.pop %v5875
        %v5892 = vtanh.pop %v5876
        %v5893 = vtanh.pop %v5877
        %v5894 = vtanh.pop %v5878
        %v5895 = vtanh.pop %v5879
        %5912 = vrot.lane.b32.xlu0 %v5880, 64
        %v5913 = vpop.permute.xlu0 %5912
        %5914 = vrot.lane.b32.xlu0 %v5881, 64
        %v5915 = vpop.permute.xlu0 %5914
        %5916 = vrot.lane.b32.xlu0 %v5882, 64
        %v5917 = vpop.permute.xlu0 %5916
        %5918 = vrot.lane.b32.xlu0 %v5883, 64
        %v5919 = vpop.permute.xlu0 %5918
        %5920 = vrot.lane.b32.xlu0 %v5884, 64
        %v5921 = vpop.permute.xlu0 %5920
        %5922 = vrot.lane.b32.xlu0 %v5885, 64
        %v5923 = vpop.permute.xlu0 %5922
        %5924 = vrot.lane.b32.xlu0 %v5886, 64
        %v5925 = vpop.permute.xlu0 %5924
        %5926 = vrot.lane.b32.xlu0 %v5887, 64
        %v5927 = vpop.permute.xlu0 %5926
        %5928 = vrot.lane.b32.xlu0 %v5888, 64
        %v5929 = vpop.permute.xlu0 %5928
        %5930 = vrot.lane.b32.xlu0 %v5889, 64
        %v5931 = vpop.permute.xlu0 %5930
        %5932 = vrot.lane.b32.xlu0 %v5890, 64
        %v5933 = vpop.permute.xlu0 %5932
        %5934 = vrot.lane.b32.xlu0 %v5891, 64
        %v5935 = vpop.permute.xlu0 %5934
        %5936 = vrot.lane.b32.xlu0 %v5892, 64
        %v5937 = vpop.permute.xlu0 %5936
        %5938 = vrot.lane.b32.xlu0 %v5893, 64
        %v5939 = vpop.permute.xlu0 %5938
        %5940 = vrot.lane.b32.xlu0 %v5894, 64
        %v5941 = vpop.permute.xlu0 %5940
        %5942 = vrot.lane.b32.xlu0 %v5895, 64
        %v5943 = vpop.permute.xlu0 %5942
        %v5960 = vmul.f32 %v5237, %v5913
        %v5961 = vmul.f32 %v5267, %v5915
        %v5962 = vmul.f32 %v5297, %v5917
        %v5963 = vmul.f32 %v5327, %v5919
        %v5964 = vmul.f32 %v5357, %v5921
        %v5965 = vmul.f32 %v5387, %v5923
        %v5966 = vmul.f32 %v5417, %v5925
        %v5967 = vmul.f32 %v5447, %v5927
        %v5968 = vmul.f32 %v5477, %v5929
        %v5969 = vmul.f32 %v5507, %v5931
        %v5970 = vmul.f32 %v5537, %v5933
        %v5971 = vmul.f32 %v5567, %v5935
        %v5972 = vmul.f32 %v5597, %v5937
        %v5973 = vmul.f32 %v5627, %v5939
        %v5974 = vmul.f32 %v5657, %v5941
        %v5975 = vmul.f32 %v5687, %v5943
        %v5976 = vadd.f32 %v4870, %v5960
        %v5977 = vadd.f32 %v4871, %v5961
        %v5978 = vadd.f32 %v4872, %v5962
        %v5979 = vadd.f32 %v4873, %v5963
        %v5980 = vadd.f32 %v4874, %v5964
        %v5981 = vadd.f32 %v4875, %v5965
        %v5982 = vadd.f32 %v4876, %v5966
        %v5983 = vadd.f32 %v4877, %v5967
        %v5984 = vadd.f32 %v4878, %v5968
        %v5985 = vadd.f32 %v4879, %v5969
        %v5986 = vadd.f32 %v4880, %v5970
        %v5987 = vadd.f32 %v4881, %v5971
        %v5988 = vadd.f32 %v4882, %v5972
        %v5989 = vadd.f32 %v4883, %v5973
        %v5990 = vadd.f32 %v4884, %v5974
        %v5991 = vadd.f32 %v4885, %v5975
        %v5992 = vmul.f32 %v5976, 0.25
        %v5993 = vmul.f32 %v5977, 0.25
        %v5994 = vmul.f32 %v5978, 0.25
        %v5995 = vmul.f32 %v5979, 0.25
        %v5996 = vmul.f32 %v5980, 0.25
        %v5997 = vmul.f32 %v5981, 0.25
        %v5998 = vmul.f32 %v5982, 0.25
        %v5999 = vmul.f32 %v5983, 0.25
        %v6000 = vmul.f32 %v5984, 0.25
        %v6001 = vmul.f32 %v5985, 0.25
        %v6002 = vmul.f32 %v5986, 0.25
        %v6003 = vmul.f32 %v5987, 0.25
        %v6004 = vmul.f32 %v5988, 0.25
        %v6005 = vmul.f32 %v5989, 0.25
        %v6006 = vmul.f32 %v5990, 0.25
        %v6007 = vmul.f32 %v5991, 0.25
        %6008 = vxpose.xlu0.b32.start [1/16] %v5992, 128
        %6009 = vxpose.xlu0.b32.cont [2/16] %v5993, 128
        %6010 = vxpose.xlu0.b32.cont [3/16] %v5994, 128
        %6011 = vxpose.xlu0.b32.cont [4/16] %v5995, 128
        %6012 = vxpose.xlu0.b32.cont [5/16] %v5996, 128
        %6013 = vxpose.xlu0.b32.cont [6/16] %v5997, 128
        %6014 = vxpose.xlu0.b32.cont [7/16] %v5998, 128
        %6015 = vxpose.xlu0.b32.cont [8/16] %v5999, 128
        %6016 = vxpose.xlu0.b32.cont [9/16] %v6000, 128
        %6017 = vxpose.xlu0.b32.cont [10/16] %v6001, 128
        %6018 = vxpose.xlu0.b32.cont [11/16] %v6002, 128
        %6019 = vxpose.xlu0.b32.cont [12/16] %v6003, 128
        %6020 = vxpose.xlu0.b32.cont [13/16] %v6004, 128
        %6021 = vxpose.xlu0.b32.cont [14/16] %v6005, 128
        %6022 = vxpose.xlu0.b32.cont [15/16] %v6006, 128
        %6023 = vxpose.xlu0.b32.end [16/16] %v6007, 128
        %v6024 = vpop.trf.xlu0
        %v6025 = vpop.trf.xlu0
        %v6026 = vpop.trf.xlu0
        %v6027 = vpop.trf.xlu0
        %v6028 = vpop.trf.xlu0
        %v6029 = vpop.trf.xlu0
        %v6030 = vpop.trf.xlu0
        %v6031 = vpop.trf.xlu0
        %v6032 = vpop.trf.xlu0
        %v6033 = vpop.trf.xlu0
        %v6034 = vpop.trf.xlu0
        %v6035 = vpop.trf.xlu0
        %v6036 = vpop.trf.xlu0
        %v6037 = vpop.trf.xlu0
        %v6038 = vpop.trf.xlu0
        %v6039 = vpop.trf.xlu0
        %6040 = vst [vmem:[%s491] sm:$0xff] %v6024
        %6041 = vst [vmem:[%s491 + $0x8] sm:$0xff] %v6025
        %6042 = vst [vmem:[%s491 + $0x10] sm:$0xff] %v6026
        %6043 = vst [vmem:[%s491 + $0x18] sm:$0xff] %v6027
        %6044 = vst [vmem:[%s491 + $0x20] sm:$0xff] %v6028
        %6045 = vst [vmem:[%s491 + $0x28] sm:$0xff] %v6029
        %6046 = vst [vmem:[%s491 + $0x30] sm:$0xff] %v6030
        %6047 = vst [vmem:[%s491 + $0x38] sm:$0xff] %v6031
        %s6048 = sand.u32 %s115, 1
        %s6049 = scalar_lea.sflag [#allocation5], %s6048
        %s6050 = sand.u32 %s115, 1
        %s6051 = smul.addr %s6050, 64
        %s6052 = scalar_lea.vmem [#allocation4], %s6051
        // Predicated region
        $region78: #{tpu_custom_call.1} parent=72 // pred_check
          %p6053 = pneg %p125
        $region79: #{tpu_custom_call.1} parent=72 // pred_check_branch
          %6055 = sbr.rel (%p6053) target = $region81
        $region80: #{tpu_custom_call.1} parent=72 // pred_region
          %6057 = vsyncadd %s6049, 0
          %s6058 = smul.addr %s18, 8
          %s6059 = scalar_lea.hbm %s4, %s6058
          %s6060 = sshll.u32 %s6052, 4
          %s6061 = int_to_ptr.vmem [resolvable:$true] %s6060
          %s6062 = sshll.u32 %s6059, 4
          %s6063 = int_to_ptr.hbm [resolvable:$true] %s6062
          %6068 = dma.vmem_to_hbm [thread:$0]  %s6061, 1024, %s6063, %s6049, 128, 256, 8
        $region81: #{tpu_custom_call.1} parent=72 // pred_fallthru
          _
      $region73: #{tpu_custom_call.1} parent=5 // pred_fallthru
        _
      %p6069 = scmp.le.s32.totalorder 2, %s13
      // Predicated region
      $region82: #{tpu_custom_call.1} parent=5 // pred_check
        %p6070 = pneg %p6069
      $region83: #{tpu_custom_call.1} parent=5 // pred_check_branch
        %6072 = sbr.rel (%p6070) target = $region85
      $region84: #{tpu_custom_call.1} parent=5 // pred_region
        %s6073 = ssub.s32 %s13, 2
        // Predicated region
        $region86: #{tpu_custom_call.1} parent=84 // pred_check
          %p6074 = pneg %p131
        $region87: #{tpu_custom_call.1} parent=84 // pred_check_branch
          %6076 = sbr.rel (%p6074) target = $region89
        $region88: #{tpu_custom_call.1} parent=84 // pred_region
          %s6077 = sand.u32 %s116, 1
          %s6078 = scalar_lea.sflag [#allocation5], %s6077
          %s6079 = sand.u32 %s116, 1
          %s6080 = smul.addr %s6079, 64
          %s6081 = scalar_lea.vmem [#allocation4], %s6080
          %6083 = dma.done %s6078, 1024
        $region89: #{tpu_custom_call.1} parent=84 // pred_fallthru
          _
      $region85: #{tpu_custom_call.1} parent=5 // pred_fallthru
        _
    $region6: #{tpu_custom_call.1} parent=1 // loop_footer
      %s17 = sadd.s32 1, %s13
    $region7: #{tpu_custom_call.1} parent=1 // loop_footer_branch
      %12 = sbr.rel target = $region3
    $region8: #{tpu_custom_call.1} parent=1 // loop_exit
      _
    %6084 = vsyncpa [#allocation5], 1
    %s6085 = scalar_lea.sflag [#allocation5], 1
    %6086 = vsyncpa %s6085, 1

</llo_original>
